<compile_context>
chip_gen: v7x
topology: tpu7x:2x2x1
jax: 0.10.0
libtpu: 0.0.40
codegen_flags: <defaults>
</compile_context>

<pallas_src>
import functools

import jax
import jax.numpy as jnp
from jax import lax
from jax.experimental import pallas as pl
from jax.experimental.pallas import tpu as pltpu


def _round_up(x, m):
    return ((x + m - 1) // m) * m


def _phase_conv_kernel(band_ref, halo_ref, wp_ref, bias_ref, o_ref, xs_ref,
                       *, cin, cout, tile_ih, w, halo_rows):
    """One (batch, row-tile) step of fused 2x-nearest-upsample + 3x3 conv (pad=1).

    band_ref : (1, Cin, TILE_IH, W+2)     current row band of the zero-padded input
    halo_ref : (1, Cin, HALO, W+2)        first HALO rows of the next band (2 used)
    wp_ref   : (Cout*Cin*16,) f32 SMEM    phase weights, index [co, ci, dy, dx, a, b]
    bias_ref : (Cout,) f32 SMEM
    o_ref    : (1, Cout, 2*TILE_IH, 2*W)  output band
    xs_ref   : (Cin, TILE_IH+HALO, W+2)   f32 VMEM scratch (band + halo)
    """
    f32 = jnp.float32
    tile_oh = 2 * tile_ih
    w2 = 2 * w

    # Stage band + halo into one f32 scratch slab per input channel.
    xs_ref[:, :tile_ih, :] = band_ref[0].astype(f32)
    xs_ref[:, tile_ih:tile_ih + halo_rows, :] = halo_ref[0].astype(f32)

    # 0/1 interleave matrices, rebuilt each step from iota compares (cheap VPU).
    jr = lax.broadcasted_iota(jnp.int32, (w, w2), 0)
    qc = lax.broadcasted_iota(jnp.int32, (w, w2), 1)
    ci0 = (qc == 2 * jr).astype(f32)        # (W, 2W): out col 2j   <- col j
    ci1 = (qc == 2 * jr + 1).astype(f32)    # (W, 2W): out col 2j+1 <- col j
    pr = lax.broadcasted_iota(jnp.int32, (tile_oh, tile_ih), 0)
    ir = lax.broadcasted_iota(jnp.int32, (tile_oh, tile_ih), 1)
    ri0 = (pr == 2 * ir).astype(f32)        # (2T, T): out row 2i   <- row i
    ri1 = (pr == 2 * ir + 1).astype(f32)    # (2T, T): out row 2i+1 <- row i

    # Phase accumulators acc[dy][dx][co] of shape (TILE_IH, W), init with bias.
    acc = [[[jnp.full((tile_ih, w), bias_ref[co], f32) for co in range(cout)]
            for _ in range(2)] for _ in range(2)]

    for ci in range(cin):
        for r in range(3):
            dys = [d for d in (r - 1, r) if 0 <= d <= 1]
            for c in range(3):
                dxs = [d for d in (c - 1, c) if 0 <= d <= 1]
                # One live shifted tap; immediately folded into every
                # (phase, cout) accumulator that uses it.
                tap = xs_ref[ci, r:r + tile_ih, c:c + w]
                for dy in dys:
                    a = r - dy
                    for dx in dxs:
                        b = c - dx
                        for co in range(cout):
                            widx = ((((co * cin + ci) * 2 + dy) * 2 + dx) * 2
                                    + a) * 2 + b
                            acc[dy][dx][co] = (acc[dy][dx][co]
                                               + wp_ref[widx] * tap)

    # Interleave the four phase slabs into the NCHW output tile (idle MXU).
    for co in range(cout):
        top = (jnp.dot(acc[0][0][co], ci0, preferred_element_type=f32)
               + jnp.dot(acc[0][1][co], ci1, preferred_element_type=f32))
        bot = (jnp.dot(acc[1][0][co], ci0, preferred_element_type=f32)
               + jnp.dot(acc[1][1][co], ci1, preferred_element_type=f32))
        out = (jnp.dot(ri0, top, preferred_element_type=f32)
               + jnp.dot(ri1, bot, preferred_element_type=f32))
        o_ref[0, co] = out.astype(o_ref.dtype)


def _step_vmem_bytes(t, cin, cout, w, itemsize, halo_rows):
    wl = _round_up(w + 2, 128)
    w2l = _round_up(2 * w, 128)
    wcl = _round_up(w, 128)
    band = cin * t * wl * itemsize
    halo = cin * halo_rows * wl * itemsize
    outb = cout * 2 * t * w2l * itemsize
    scratch = cin * (t + halo_rows) * wl * 4
    accs = 4 * cout * t * wcl * 4
    consts = 2 * (w * w2l + 2 * t * _round_up(t, 128)) * 4
    # double-buffered pipelined blocks + resident scratch/accumulators/consts
    return 2 * (band + halo + outb) + scratch + accs + consts + (1 << 20)


def _vmem_capacity():
    try:
        return int(pltpu.get_tpu_info().vmem_capacity_bytes)
    except Exception:
        return 64 << 20          # conservative default (v7x per-core VMEM)


def _pick_tile_ih(h_pad, cin, cout, w, itemsize, halo_rows, vmem_cap):
    budget = min(vmem_cap // 4, 24 << 20)
    for cand in (256, 128, 64, 32, 16, 8):
        if cand % halo_rows or h_pad % cand:
            continue
        if _step_vmem_bytes(cand, cin, cout, w, itemsize, halo_rows) <= budget:
            return cand
    return halo_rows


def final_layer_forward(x, weight, bias, skip_input=None, *, tile_ih=None):
    """FinalLayer.forward: [concat] -> Upsample(x2 nearest) -> Conv2d(3x3, pad=1).

    x, skip_input: NCHW.  weight: OIHW (Cout, Cin, 3, 3).  bias: (Cout,).  NCHW out.
    """
    if skip_input is not None:
        x = jnp.concatenate([x, skip_input], axis=1)

    n, c, h, w = x.shape
    cout, cin, k_h, k_w = weight.shape
    assert (cin, k_h, k_w) == (c, 3, 3)

    itemsize = jnp.dtype(x.dtype).itemsize
    halo_rows = max(8, 32 // itemsize)       # sublane-packing friendly halo block
    h_pad = _round_up(h, halo_rows)
    vmem_cap = _vmem_capacity()
    if tile_ih is None:
        tile_ih = _pick_tile_ih(h_pad, c, cout, w, itemsize, halo_rows, vmem_cap)
    assert tile_ih % halo_rows == 0 and h_pad % tile_ih == 0
    n_tiles = h_pad // tile_ih

    # Zero padding: 1 row on top / 1 col each side provide the conv padding; the
    # bottom is padded so the last tile's halo block stays in bounds.
    total_rows = h_pad + halo_rows
    xp = jnp.pad(x, ((0, 0), (0, 0), (1, total_rows - h - 1), (1, 1)))

    # Phase weights: upsample(x2 nearest)+3x3 conv == four 2x2 convs on the
    # original resolution, one per output phase (dy, dx):
    #   WP[co, ci, dy, dx] = Rsel[dy] @ W[co, ci] @ Csel[dx].T  (2x2 each).
    sel = jnp.array([[[1., 0., 0.], [0., 1., 1.]],
                     [[1., 1., 0.], [0., 0., 1.]]], jnp.float32)   # [phase, tap, k]
    wp = jnp.einsum("yak,oikl,xbl->oiyxab", sel, weight.astype(jnp.float32), sel)
    wp_flat = wp.reshape(-1)                  # row-major [co, ci, dy, dx, a, b]
    b_flat = bias.reshape(-1).astype(jnp.float32)

    need = _step_vmem_bytes(tile_ih, c, cout, w, itemsize, halo_rows)
    vmem_limit = int(min(max(2 * need, 16 << 20), (vmem_cap * 3) // 4))

    kernel = functools.partial(_phase_conv_kernel, cin=c, cout=cout,
                               tile_ih=tile_ih, w=w, halo_rows=halo_rows)

    out = pl.pallas_call(
        kernel,
        out_shape=jax.ShapeDtypeStruct((n, cout, 2 * h_pad, 2 * w), x.dtype),
        grid=(n, n_tiles),
        in_specs=[
            pl.BlockSpec((1, c, tile_ih, w + 2), lambda b, t: (b, 0, t, 0)),
            pl.BlockSpec((1, c, halo_rows, w + 2),
                         lambda b, t: (b, 0, (t + 1) * (tile_ih // halo_rows), 0)),
            pl.BlockSpec(memory_space=pltpu.MemorySpace.SMEM),
            pl.BlockSpec(memory_space=pltpu.MemorySpace.SMEM),
        ],
        out_specs=pl.BlockSpec((1, cout, 2 * tile_ih, 2 * w),
                               lambda b, t: (b, 0, t, 0)),
        scratch_shapes=[pltpu.VMEM((c, tile_ih + halo_rows, w + 2), jnp.float32)],
        compiler_params=pltpu.CompilerParams(
            dimension_semantics=("parallel", "parallel"),
            vmem_limit_bytes=vmem_limit),
    )(xp, xp, wp_flat, b_flat)

    if h_pad != h:
        # TODO(synk): handle the ragged last row tile in-kernel (masked final
        # block) so this full-size output slice is not materialized in HBM.
        out = out[:, :, :2 * h, :]
    return out


def _reference_forward(x, weight, bias, skip_input=None):
    if skip_input is not None:
        x = jnp.concatenate([x, skip_input], axis=1)
    xf = x.astype(jnp.float32)
    x_up = jnp.repeat(jnp.repeat(xf, 2, axis=2), 2, axis=3)
    out = lax.conv_general_dilated(
        x_up, weight.astype(jnp.float32), window_strides=(1, 1),
        padding=((1, 1), (1, 1)),
        dimension_numbers=("NCHW", "OIHW", "NCHW"))
    return (out + bias.astype(jnp.float32)[None, :, None, None]).astype(x.dtype)


def _check(x, weight, bias, skip=None, tile_ih=None, atol=5e-4, rtol=5e-4):
    fwd = jax.jit(functools.partial(final_layer_forward, tile_ih=tile_ih))
    out = fwd(x, weight, bias, skip) if skip is not None else fwd(x, weight, bias)
    out = jax.block_until_ready(out)
    ref = _reference_forward(x, weight, bias, skip_input=skip)
    assert out.shape == ref.shape, (out.shape, ref.shape)
    o32 = out.astype(jnp.float32)
    r32 = ref.astype(jnp.float32)
    err = float(jnp.max(jnp.abs(o32 - r32)))
    assert jnp.allclose(o32, r32, atol=atol, rtol=rtol), err
    return out


if __name__ == "__main__":
    key = jax.random.PRNGKey(0)
    ks = jax.random.split(key, 8)

    # FinalLayer(in_size=4, out_size=3): x (2ch) concat skip (2ch) -> 4 channels.
    n, h, w = 2, 16, 16
    x = jax.random.normal(ks[0], (n, 2, h, w), jnp.float32)
    skip = jax.random.normal(ks[1], (n, 2, h, w), jnp.float32)
    weight = 0.1 * jax.random.normal(ks[2], (3, 4, 3, 3), jnp.float32)
    bias = 0.1 * jax.random.normal(ks[3], (3,), jnp.float32)
    out = _check(x, weight, bias, skip=skip)
    assert out.shape == (n, 3, 2 * h, 2 * w), out.shape

    # Non-multiple-of-8 height (padded/cropped path), no skip input.
    x2 = jax.random.normal(ks[4], (1, 3, 12, 20), jnp.float32)
    w2_ = 0.1 * jax.random.normal(ks[5], (2, 3, 3, 3), jnp.float32)
    b2_ = 0.1 * jax.random.normal(ks[6], (2,), jnp.float32)
    _check(x2, w2_, b2_)

    # Multi-row-tile path (forced small tile) exercising the halo across tiles.
    x3 = jax.random.normal(ks[7], (1, 2, 32, 16), jnp.float32)
    w3_ = 0.1 * jax.random.normal(ks[2], (3, 2, 3, 3), jnp.float32)
    b3_ = 0.1 * jax.random.normal(ks[3], (3,), jnp.float32)
    _check(x3, w3_, b3_, tile_ih=8)

    # bf16 activations: f32 accumulate in-kernel, bf16 store.
    xb = jax.random.normal(ks[0], (2, 4, 16, 16), jnp.bfloat16)
    _check(xb, weight, bias, atol=3e-2, rtol=3e-2)

    print("KERNEL_OK")
</pallas_src>

<mosaic_0001>
module attributes {stable_mosaic.version = 11 : i64} {
  func.func @_phase_conv_kernel(%arg0: i32, %arg1: i32, %arg2: memref<1x4x16x18xf32, #tpu.memory_space<vmem>>, %arg3: memref<1x4x8x18xf32, #tpu.memory_space<vmem>>, %arg4: memref<192xf32, #tpu.memory_space<smem>>, %arg5: memref<3xf32, #tpu.memory_space<smem>>, %arg6: memref<1x3x32x32xf32, #tpu.memory_space<vmem>>, %arg7: memref<4x24x18xf32, #tpu.memory_space<vmem>>) attributes {dimension_semantics = [#tpu.dimension_semantics<parallel>, #tpu.dimension_semantics<parallel>], iteration_bounds = array<i64: 2, 1>, scalar_prefetch = 0 : i64, scratch_operands = 1 : i64, tpu.core_type = #tpu.core_type<tc>, window_params = [{transform_indices = @transform_0, window_bounds = array<i64: 1, 4, 16, 18>}, {transform_indices = @transform_1, window_bounds = array<i64: 1, 4, 8, 18>}, {transform_indices = @transform_2, window_bounds = array<i64: 192>}, {transform_indices = @transform_3, window_bounds = array<i64: 3>}, {transform_indices = @transform_4, window_bounds = array<i64: 1, 3, 32, 32>}]} {
    %c0 = arith.constant 0 : index
    %c0_0 = arith.constant 0 : index
    %c0_1 = arith.constant 0 : index
    %c0_2 = arith.constant 0 : index
    %0 = vector.load %arg2[%c0, %c0_0, %c0_1, %c0_2] : memref<1x4x16x18xf32, #tpu.memory_space<vmem>>, vector<1x4x16x18xf32>
    %1 = vector.shape_cast %0 : vector<1x4x16x18xf32> to vector<4x16x18xf32>
    %c0_3 = arith.constant 0 : index
    %c0_4 = arith.constant 0 : index
    %c0_5 = arith.constant 0 : index
    %2 = vector.load %arg7[%c0_3, %c0_4, %c0_5] : memref<4x24x18xf32, #tpu.memory_space<vmem>>, vector<4x16x18xf32>
    tpu.vector_store %arg7[%c0_3, %c0_4, %c0_5], %1 {strides = array<i32>} : memref<4x24x18xf32, #tpu.memory_space<vmem>>, vector<4x16x18xf32>,
    %c0_6 = arith.constant 0 : index
    %c0_7 = arith.constant 0 : index
    %c0_8 = arith.constant 0 : index
    %c0_9 = arith.constant 0 : index
    %3 = vector.load %arg3[%c0_6, %c0_7, %c0_8, %c0_9] : memref<1x4x8x18xf32, #tpu.memory_space<vmem>>, vector<1x4x8x18xf32>
    %4 = vector.shape_cast %3 : vector<1x4x8x18xf32> to vector<4x8x18xf32>
    %c0_10 = arith.constant 0 : index
    %c16 = arith.constant 16 : index
    %c0_11 = arith.constant 0 : index
    %5 = vector.load %arg7[%c0_10, %c16, %c0_11] : memref<4x24x18xf32, #tpu.memory_space<vmem>>, vector<4x8x18xf32>
    tpu.vector_store %arg7[%c0_10, %c16, %c0_11], %4 {strides = array<i32>} : memref<4x24x18xf32, #tpu.memory_space<vmem>>, vector<4x8x18xf32>,
    %6 = tpu.iota {dimensions = array<i32: 0>} : vector<16x32xi32>
    %7 = tpu.iota {dimensions = array<i32: 1>} : vector<16x32xi32>
    %c2_i32 = arith.constant 2 : i32
    %8 = vector.broadcast %c2_i32 : i32 to vector<16x32xi32>
    %9 = arith.muli %8, %6 : vector<16x32xi32>
    %10 = arith.cmpi eq, %7, %9 : vector<16x32xi32>
    %11 = arith.extui %10 : vector<16x32xi1> to vector<16x32xi32>
    %12 = arith.sitofp %11 : vector<16x32xi32> to vector<16x32xf32>
    %c2_i32_12 = arith.constant 2 : i32
    %13 = vector.broadcast %c2_i32_12 : i32 to vector<16x32xi32>
    %14 = arith.muli %13, %6 : vector<16x32xi32>
    %c1_i32 = arith.constant 1 : i32
    %15 = vector.broadcast %c1_i32 : i32 to vector<16x32xi32>
    %16 = arith.addi %14, %15 : vector<16x32xi32>
    %17 = arith.cmpi eq, %7, %16 : vector<16x32xi32>
    %18 = arith.extui %17 : vector<16x32xi1> to vector<16x32xi32>
    %19 = arith.sitofp %18 : vector<16x32xi32> to vector<16x32xf32>
    %20 = tpu.iota {dimensions = array<i32: 0>} : vector<32x16xi32>
    %21 = tpu.iota {dimensions = array<i32: 1>} : vector<32x16xi32>
    %c2_i32_13 = arith.constant 2 : i32
    %22 = vector.broadcast %c2_i32_13 : i32 to vector<32x16xi32>
    %23 = arith.muli %22, %21 : vector<32x16xi32>
    %24 = arith.cmpi eq, %20, %23 : vector<32x16xi32>
    %25 = arith.extui %24 : vector<32x16xi1> to vector<32x16xi32>
    %26 = arith.sitofp %25 : vector<32x16xi32> to vector<32x16xf32>
    %c2_i32_14 = arith.constant 2 : i32
    %27 = vector.broadcast %c2_i32_14 : i32 to vector<32x16xi32>
    %28 = arith.muli %27, %21 : vector<32x16xi32>
    %c1_i32_15 = arith.constant 1 : i32
    %29 = vector.broadcast %c1_i32_15 : i32 to vector<32x16xi32>
    %30 = arith.addi %28, %29 : vector<32x16xi32>
    %31 = arith.cmpi eq, %20, %30 : vector<32x16xi32>
    %32 = arith.extui %31 : vector<32x16xi1> to vector<32x16xi32>
    %33 = arith.sitofp %32 : vector<32x16xi32> to vector<32x16xf32>
    %c0_16 = arith.constant 0 : index
    %34 = memref.load %arg5[%c0_16] : memref<3xf32, #tpu.memory_space<smem>>
    %35 = vector.broadcast %34 : f32 to vector<16x16xf32>
    %c1 = arith.constant 1 : index
    %36 = memref.load %arg5[%c1] : memref<3xf32, #tpu.memory_space<smem>>
    %37 = vector.broadcast %36 : f32 to vector<16x16xf32>
    %c2 = arith.constant 2 : index
    %38 = memref.load %arg5[%c2] : memref<3xf32, #tpu.memory_space<smem>>
    %39 = vector.broadcast %38 : f32 to vector<16x16xf32>
    %c0_17 = arith.constant 0 : index
    %40 = memref.load %arg5[%c0_17] : memref<3xf32, #tpu.memory_space<smem>>
    %41 = vector.broadcast %40 : f32 to vector<16x16xf32>
    %c1_18 = arith.constant 1 : index
    %42 = memref.load %arg5[%c1_18] : memref<3xf32, #tpu.memory_space<smem>>
    %43 = vector.broadcast %42 : f32 to vector<16x16xf32>
    %c2_19 = arith.constant 2 : index
    %44 = memref.load %arg5[%c2_19] : memref<3xf32, #tpu.memory_space<smem>>
    %45 = vector.broadcast %44 : f32 to vector<16x16xf32>
    %c0_20 = arith.constant 0 : index
    %46 = memref.load %arg5[%c0_20] : memref<3xf32, #tpu.memory_space<smem>>
    %47 = vector.broadcast %46 : f32 to vector<16x16xf32>
    %c1_21 = arith.constant 1 : index
    %48 = memref.load %arg5[%c1_21] : memref<3xf32, #tpu.memory_space<smem>>
    %49 = vector.broadcast %48 : f32 to vector<16x16xf32>
    %c2_22 = arith.constant 2 : index
    %50 = memref.load %arg5[%c2_22] : memref<3xf32, #tpu.memory_space<smem>>
    %51 = vector.broadcast %50 : f32 to vector<16x16xf32>
    %c0_23 = arith.constant 0 : index
    %52 = memref.load %arg5[%c0_23] : memref<3xf32, #tpu.memory_space<smem>>
    %53 = vector.broadcast %52 : f32 to vector<16x16xf32>
    %c1_24 = arith.constant 1 : index
    %54 = memref.load %arg5[%c1_24] : memref<3xf32, #tpu.memory_space<smem>>
    %55 = vector.broadcast %54 : f32 to vector<16x16xf32>
    %c2_25 = arith.constant 2 : index
    %56 = memref.load %arg5[%c2_25] : memref<3xf32, #tpu.memory_space<smem>>
    %57 = vector.broadcast %56 : f32 to vector<16x16xf32>
    %c0_26 = arith.constant 0 : index
    %c0_27 = arith.constant 0 : index
    %c0_28 = arith.constant 0 : index
    %58 = vector.load %arg7[%c0_26, %c0_27, %c0_28] : memref<4x24x18xf32, #tpu.memory_space<vmem>>, vector<1x16x16xf32>
    %59 = vector.shape_cast %58 : vector<1x16x16xf32> to vector<16x16xf32>
    %c0_29 = arith.constant 0 : index
    %60 = memref.load %arg4[%c0_29] : memref<192xf32, #tpu.memory_space<smem>>
    %61 = vector.broadcast %60 : f32 to vector<16x16xf32>
    %62 = arith.mulf %61, %59 : vector<16x16xf32>
    %63 = arith.addf %35, %62 : vector<16x16xf32>
    %c64 = arith.constant 64 : index
    %64 = memref.load %arg4[%c64] : memref<192xf32, #tpu.memory_space<smem>>
    %65 = vector.broadcast %64 : f32 to vector<16x16xf32>
    %66 = arith.mulf %65, %59 : vector<16x16xf32>
    %67 = arith.addf %37, %66 : vector<16x16xf32>
    %c128 = arith.constant 128 : index
    %68 = memref.load %arg4[%c128] : memref<192xf32, #tpu.memory_space<smem>>
    %69 = vector.broadcast %68 : f32 to vector<16x16xf32>
    %70 = arith.mulf %69, %59 : vector<16x16xf32>
    %71 = arith.addf %39, %70 : vector<16x16xf32>
    %c0_30 = arith.constant 0 : index
    %c0_31 = arith.constant 0 : index
    %c1_32 = arith.constant 1 : index
    %72 = vector.load %arg7[%c0_30, %c0_31, %c1_32] : memref<4x24x18xf32, #tpu.memory_space<vmem>>, vector<1x16x16xf32>
    %73 = vector.shape_cast %72 : vector<1x16x16xf32> to vector<16x16xf32>
    %c1_33 = arith.constant 1 : index
    %74 = memref.load %arg4[%c1_33] : memref<192xf32, #tpu.memory_space<smem>>
    %75 = vector.broadcast %74 : f32 to vector<16x16xf32>
    %76 = arith.mulf %75, %73 : vector<16x16xf32>
    %77 = arith.addf %63, %76 : vector<16x16xf32>
    %c65 = arith.constant 65 : index
    %78 = memref.load %arg4[%c65] : memref<192xf32, #tpu.memory_space<smem>>
    %79 = vector.broadcast %78 : f32 to vector<16x16xf32>
    %80 = arith.mulf %79, %73 : vector<16x16xf32>
    %81 = arith.addf %67, %80 : vector<16x16xf32>
    %c129 = arith.constant 129 : index
    %82 = memref.load %arg4[%c129] : memref<192xf32, #tpu.memory_space<smem>>
    %83 = vector.broadcast %82 : f32 to vector<16x16xf32>
    %84 = arith.mulf %83, %73 : vector<16x16xf32>
    %85 = arith.addf %71, %84 : vector<16x16xf32>
    %c4 = arith.constant 4 : index
    %86 = memref.load %arg4[%c4] : memref<192xf32, #tpu.memory_space<smem>>
    %87 = vector.broadcast %86 : f32 to vector<16x16xf32>
    %88 = arith.mulf %87, %73 : vector<16x16xf32>
    %89 = arith.addf %41, %88 : vector<16x16xf32>
    %c68 = arith.constant 68 : index
    %90 = memref.load %arg4[%c68] : memref<192xf32, #tpu.memory_space<smem>>
    %91 = vector.broadcast %90 : f32 to vector<16x16xf32>
    %92 = arith.mulf %91, %73 : vector<16x16xf32>
    %93 = arith.addf %43, %92 : vector<16x16xf32>
    %c132 = arith.constant 132 : index
    %94 = memref.load %arg4[%c132] : memref<192xf32, #tpu.memory_space<smem>>
    %95 = vector.broadcast %94 : f32 to vector<16x16xf32>
    %96 = arith.mulf %95, %73 : vector<16x16xf32>
    %97 = arith.addf %45, %96 : vector<16x16xf32>
    %c0_34 = arith.constant 0 : index
    %c0_35 = arith.constant 0 : index
    %c2_36 = arith.constant 2 : index
    %98 = vector.load %arg7[%c0_34, %c0_35, %c2_36] : memref<4x24x18xf32, #tpu.memory_space<vmem>>, vector<1x16x16xf32>
    %99 = vector.shape_cast %98 : vector<1x16x16xf32> to vector<16x16xf32>
    %c5 = arith.constant 5 : index
    %100 = memref.load %arg4[%c5] : memref<192xf32, #tpu.memory_space<smem>>
    %101 = vector.broadcast %100 : f32 to vector<16x16xf32>
    %102 = arith.mulf %101, %99 : vector<16x16xf32>
    %103 = arith.addf %89, %102 : vector<16x16xf32>
    %c69 = arith.constant 69 : index
    %104 = memref.load %arg4[%c69] : memref<192xf32, #tpu.memory_space<smem>>
    %105 = vector.broadcast %104 : f32 to vector<16x16xf32>
    %106 = arith.mulf %105, %99 : vector<16x16xf32>
    %107 = arith.addf %93, %106 : vector<16x16xf32>
    %c133 = arith.constant 133 : index
    %108 = memref.load %arg4[%c133] : memref<192xf32, #tpu.memory_space<smem>>
    %109 = vector.broadcast %108 : f32 to vector<16x16xf32>
    %110 = arith.mulf %109, %99 : vector<16x16xf32>
    %111 = arith.addf %97, %110 : vector<16x16xf32>
    %c0_37 = arith.constant 0 : index
    %c1_38 = arith.constant 1 : index
    %c0_39 = arith.constant 0 : index
    %112 = vector.load %arg7[%c0_37, %c1_38, %c0_39] : memref<4x24x18xf32, #tpu.memory_space<vmem>>, vector<1x16x16xf32>
    %113 = vector.shape_cast %112 : vector<1x16x16xf32> to vector<16x16xf32>
    %c2_40 = arith.constant 2 : index
    %114 = memref.load %arg4[%c2_40] : memref<192xf32, #tpu.memory_space<smem>>
    %115 = vector.broadcast %114 : f32 to vector<16x16xf32>
    %116 = arith.mulf %115, %113 : vector<16x16xf32>
    %117 = arith.addf %77, %116 : vector<16x16xf32>
    %c66 = arith.constant 66 : index
    %118 = memref.load %arg4[%c66] : memref<192xf32, #tpu.memory_space<smem>>
    %119 = vector.broadcast %118 : f32 to vector<16x16xf32>
    %120 = arith.mulf %119, %113 : vector<16x16xf32>
    %121 = arith.addf %81, %120 : vector<16x16xf32>
    %c130 = arith.constant 130 : index
    %122 = memref.load %arg4[%c130] : memref<192xf32, #tpu.memory_space<smem>>
    %123 = vector.broadcast %122 : f32 to vector<16x16xf32>
    %124 = arith.mulf %123, %113 : vector<16x16xf32>
    %125 = arith.addf %85, %124 : vector<16x16xf32>
    %c8 = arith.constant 8 : index
    %126 = memref.load %arg4[%c8] : memref<192xf32, #tpu.memory_space<smem>>
    %127 = vector.broadcast %126 : f32 to vector<16x16xf32>
    %128 = arith.mulf %127, %113 : vector<16x16xf32>
    %129 = arith.addf %47, %128 : vector<16x16xf32>
    %c72 = arith.constant 72 : index
    %130 = memref.load %arg4[%c72] : memref<192xf32, #tpu.memory_space<smem>>
    %131 = vector.broadcast %130 : f32 to vector<16x16xf32>
    %132 = arith.mulf %131, %113 : vector<16x16xf32>
    %133 = arith.addf %49, %132 : vector<16x16xf32>
    %c136 = arith.constant 136 : index
    %134 = memref.load %arg4[%c136] : memref<192xf32, #tpu.memory_space<smem>>
    %135 = vector.broadcast %134 : f32 to vector<16x16xf32>
    %136 = arith.mulf %135, %113 : vector<16x16xf32>
    %137 = arith.addf %51, %136 : vector<16x16xf32>
    %c0_41 = arith.constant 0 : index
    %c1_42 = arith.constant 1 : index
    %c1_43 = arith.constant 1 : index
    %138 = vector.load %arg7[%c0_41, %c1_42, %c1_43] : memref<4x24x18xf32, #tpu.memory_space<vmem>>, vector<1x16x16xf32>
    %139 = vector.shape_cast %138 : vector<1x16x16xf32> to vector<16x16xf32>
    %c3 = arith.constant 3 : index
    %140 = memref.load %arg4[%c3] : memref<192xf32, #tpu.memory_space<smem>>
    %141 = vector.broadcast %140 : f32 to vector<16x16xf32>
    %142 = arith.mulf %141, %139 : vector<16x16xf32>
    %143 = arith.addf %117, %142 : vector<16x16xf32>
    %c67 = arith.constant 67 : index
    %144 = memref.load %arg4[%c67] : memref<192xf32, #tpu.memory_space<smem>>
    %145 = vector.broadcast %144 : f32 to vector<16x16xf32>
    %146 = arith.mulf %145, %139 : vector<16x16xf32>
    %147 = arith.addf %121, %146 : vector<16x16xf32>
    %c131 = arith.constant 131 : index
    %148 = memref.load %arg4[%c131] : memref<192xf32, #tpu.memory_space<smem>>
    %149 = vector.broadcast %148 : f32 to vector<16x16xf32>
    %150 = arith.mulf %149, %139 : vector<16x16xf32>
    %151 = arith.addf %125, %150 : vector<16x16xf32>
    %c6 = arith.constant 6 : index
    %152 = memref.load %arg4[%c6] : memref<192xf32, #tpu.memory_space<smem>>
    %153 = vector.broadcast %152 : f32 to vector<16x16xf32>
    %154 = arith.mulf %153, %139 : vector<16x16xf32>
    %155 = arith.addf %103, %154 : vector<16x16xf32>
    %c70 = arith.constant 70 : index
    %156 = memref.load %arg4[%c70] : memref<192xf32, #tpu.memory_space<smem>>
    %157 = vector.broadcast %156 : f32 to vector<16x16xf32>
    %158 = arith.mulf %157, %139 : vector<16x16xf32>
    %159 = arith.addf %107, %158 : vector<16x16xf32>
    %c134 = arith.constant 134 : index
    %160 = memref.load %arg4[%c134] : memref<192xf32, #tpu.memory_space<smem>>
    %161 = vector.broadcast %160 : f32 to vector<16x16xf32>
    %162 = arith.mulf %161, %139 : vector<16x16xf32>
    %163 = arith.addf %111, %162 : vector<16x16xf32>
    %c9 = arith.constant 9 : index
    %164 = memref.load %arg4[%c9] : memref<192xf32, #tpu.memory_space<smem>>
    %165 = vector.broadcast %164 : f32 to vector<16x16xf32>
    %166 = arith.mulf %165, %139 : vector<16x16xf32>
    %167 = arith.addf %129, %166 : vector<16x16xf32>
    %c73 = arith.constant 73 : index
    %168 = memref.load %arg4[%c73] : memref<192xf32, #tpu.memory_space<smem>>
    %169 = vector.broadcast %168 : f32 to vector<16x16xf32>
    %170 = arith.mulf %169, %139 : vector<16x16xf32>
    %171 = arith.addf %133, %170 : vector<16x16xf32>
    %c137 = arith.constant 137 : index
    %172 = memref.load %arg4[%c137] : memref<192xf32, #tpu.memory_space<smem>>
    %173 = vector.broadcast %172 : f32 to vector<16x16xf32>
    %174 = arith.mulf %173, %139 : vector<16x16xf32>
    %175 = arith.addf %137, %174 : vector<16x16xf32>
    %c12 = arith.constant 12 : index
    %176 = memref.load %arg4[%c12] : memref<192xf32, #tpu.memory_space<smem>>
    %177 = vector.broadcast %176 : f32 to vector<16x16xf32>
    %178 = arith.mulf %177, %139 : vector<16x16xf32>
    %179 = arith.addf %53, %178 : vector<16x16xf32>
    %c76 = arith.constant 76 : index
    %180 = memref.load %arg4[%c76] : memref<192xf32, #tpu.memory_space<smem>>
    %181 = vector.broadcast %180 : f32 to vector<16x16xf32>
    %182 = arith.mulf %181, %139 : vector<16x16xf32>
    %183 = arith.addf %55, %182 : vector<16x16xf32>
    %c140 = arith.constant 140 : index
    %184 = memref.load %arg4[%c140] : memref<192xf32, #tpu.memory_space<smem>>
    %185 = vector.broadcast %184 : f32 to vector<16x16xf32>
    %186 = arith.mulf %185, %139 : vector<16x16xf32>
    %187 = arith.addf %57, %186 : vector<16x16xf32>
    %c0_44 = arith.constant 0 : index
    %c1_45 = arith.constant 1 : index
    %c2_46 = arith.constant 2 : index
    %188 = vector.load %arg7[%c0_44, %c1_45, %c2_46] : memref<4x24x18xf32, #tpu.memory_space<vmem>>, vector<1x16x16xf32>
    %189 = vector.shape_cast %188 : vector<1x16x16xf32> to vector<16x16xf32>
    %c7 = arith.constant 7 : index
    %190 = memref.load %arg4[%c7] : memref<192xf32, #tpu.memory_space<smem>>
    %191 = vector.broadcast %190 : f32 to vector<16x16xf32>
    %192 = arith.mulf %191, %189 : vector<16x16xf32>
    %193 = arith.addf %155, %192 : vector<16x16xf32>
    %c71 = arith.constant 71 : index
    %194 = memref.load %arg4[%c71] : memref<192xf32, #tpu.memory_space<smem>>
    %195 = vector.broadcast %194 : f32 to vector<16x16xf32>
    %196 = arith.mulf %195, %189 : vector<16x16xf32>
    %197 = arith.addf %159, %196 : vector<16x16xf32>
    %c135 = arith.constant 135 : index
    %198 = memref.load %arg4[%c135] : memref<192xf32, #tpu.memory_space<smem>>
    %199 = vector.broadcast %198 : f32 to vector<16x16xf32>
    %200 = arith.mulf %199, %189 : vector<16x16xf32>
    %201 = arith.addf %163, %200 : vector<16x16xf32>
    %c13 = arith.constant 13 : index
    %202 = memref.load %arg4[%c13] : memref<192xf32, #tpu.memory_space<smem>>
    %203 = vector.broadcast %202 : f32 to vector<16x16xf32>
    %204 = arith.mulf %203, %189 : vector<16x16xf32>
    %205 = arith.addf %179, %204 : vector<16x16xf32>
    %c77 = arith.constant 77 : index
    %206 = memref.load %arg4[%c77] : memref<192xf32, #tpu.memory_space<smem>>
    %207 = vector.broadcast %206 : f32 to vector<16x16xf32>
    %208 = arith.mulf %207, %189 : vector<16x16xf32>
    %209 = arith.addf %183, %208 : vector<16x16xf32>
    %c141 = arith.constant 141 : index
    %210 = memref.load %arg4[%c141] : memref<192xf32, #tpu.memory_space<smem>>
    %211 = vector.broadcast %210 : f32 to vector<16x16xf32>
    %212 = arith.mulf %211, %189 : vector<16x16xf32>
    %213 = arith.addf %187, %212 : vector<16x16xf32>
    %c0_47 = arith.constant 0 : index
    %c2_48 = arith.constant 2 : index
    %c0_49 = arith.constant 0 : index
    %214 = vector.load %arg7[%c0_47, %c2_48, %c0_49] : memref<4x24x18xf32, #tpu.memory_space<vmem>>, vector<1x16x16xf32>
    %215 = vector.shape_cast %214 : vector<1x16x16xf32> to vector<16x16xf32>
    %c10 = arith.constant 10 : index
    %216 = memref.load %arg4[%c10] : memref<192xf32, #tpu.memory_space<smem>>
    %217 = vector.broadcast %216 : f32 to vector<16x16xf32>
    %218 = arith.mulf %217, %215 : vector<16x16xf32>
    %219 = arith.addf %167, %218 : vector<16x16xf32>
    %c74 = arith.constant 74 : index
    %220 = memref.load %arg4[%c74] : memref<192xf32, #tpu.memory_space<smem>>
    %221 = vector.broadcast %220 : f32 to vector<16x16xf32>
    %222 = arith.mulf %221, %215 : vector<16x16xf32>
    %223 = arith.addf %171, %222 : vector<16x16xf32>
    %c138 = arith.constant 138 : index
    %224 = memref.load %arg4[%c138] : memref<192xf32, #tpu.memory_space<smem>>
    %225 = vector.broadcast %224 : f32 to vector<16x16xf32>
    %226 = arith.mulf %225, %215 : vector<16x16xf32>
    %227 = arith.addf %175, %226 : vector<16x16xf32>
    %c0_50 = arith.constant 0 : index
    %c2_51 = arith.constant 2 : index
    %c1_52 = arith.constant 1 : index
    %228 = vector.load %arg7[%c0_50, %c2_51, %c1_52] : memref<4x24x18xf32, #tpu.memory_space<vmem>>, vector<1x16x16xf32>
    %229 = vector.shape_cast %228 : vector<1x16x16xf32> to vector<16x16xf32>
    %c11 = arith.constant 11 : index
    %230 = memref.load %arg4[%c11] : memref<192xf32, #tpu.memory_space<smem>>
    %231 = vector.broadcast %230 : f32 to vector<16x16xf32>
    %232 = arith.mulf %231, %229 : vector<16x16xf32>
    %233 = arith.addf %219, %232 : vector<16x16xf32>
    %c75 = arith.constant 75 : index
    %234 = memref.load %arg4[%c75] : memref<192xf32, #tpu.memory_space<smem>>
    %235 = vector.broadcast %234 : f32 to vector<16x16xf32>
    %236 = arith.mulf %235, %229 : vector<16x16xf32>
    %237 = arith.addf %223, %236 : vector<16x16xf32>
    %c139 = arith.constant 139 : index
    %238 = memref.load %arg4[%c139] : memref<192xf32, #tpu.memory_space<smem>>
    %239 = vector.broadcast %238 : f32 to vector<16x16xf32>
    %240 = arith.mulf %239, %229 : vector<16x16xf32>
    %241 = arith.addf %227, %240 : vector<16x16xf32>
    %c14 = arith.constant 14 : index
    %242 = memref.load %arg4[%c14] : memref<192xf32, #tpu.memory_space<smem>>
    %243 = vector.broadcast %242 : f32 to vector<16x16xf32>
    %244 = arith.mulf %243, %229 : vector<16x16xf32>
    %245 = arith.addf %205, %244 : vector<16x16xf32>
    %c78 = arith.constant 78 : index
    %246 = memref.load %arg4[%c78] : memref<192xf32, #tpu.memory_space<smem>>
    %247 = vector.broadcast %246 : f32 to vector<16x16xf32>
    %248 = arith.mulf %247, %229 : vector<16x16xf32>
    %249 = arith.addf %209, %248 : vector<16x16xf32>
    %c142 = arith.constant 142 : index
    %250 = memref.load %arg4[%c142] : memref<192xf32, #tpu.memory_space<smem>>
    %251 = vector.broadcast %250 : f32 to vector<16x16xf32>
    %252 = arith.mulf %251, %229 : vector<16x16xf32>
    %253 = arith.addf %213, %252 : vector<16x16xf32>
    %c0_53 = arith.constant 0 : index
    %c2_54 = arith.constant 2 : index
    %c2_55 = arith.constant 2 : index
    %254 = vector.load %arg7[%c0_53, %c2_54, %c2_55] : memref<4x24x18xf32, #tpu.memory_space<vmem>>, vector<1x16x16xf32>
    %255 = vector.shape_cast %254 : vector<1x16x16xf32> to vector<16x16xf32>
    %c15 = arith.constant 15 : index
    %256 = memref.load %arg4[%c15] : memref<192xf32, #tpu.memory_space<smem>>
    %257 = vector.broadcast %256 : f32 to vector<16x16xf32>
    %258 = arith.mulf %257, %255 : vector<16x16xf32>
    %259 = arith.addf %245, %258 : vector<16x16xf32>
    %c79 = arith.constant 79 : index
    %260 = memref.load %arg4[%c79] : memref<192xf32, #tpu.memory_space<smem>>
    %261 = vector.broadcast %260 : f32 to vector<16x16xf32>
    %262 = arith.mulf %261, %255 : vector<16x16xf32>
    %263 = arith.addf %249, %262 : vector<16x16xf32>
    %c143 = arith.constant 143 : index
    %264 = memref.load %arg4[%c143] : memref<192xf32, #tpu.memory_space<smem>>
    %265 = vector.broadcast %264 : f32 to vector<16x16xf32>
    %266 = arith.mulf %265, %255 : vector<16x16xf32>
    %267 = arith.addf %253, %266 : vector<16x16xf32>
    %c1_56 = arith.constant 1 : index
    %c0_57 = arith.constant 0 : index
    %c0_58 = arith.constant 0 : index
    %268 = vector.load %arg7[%c1_56, %c0_57, %c0_58] : memref<4x24x18xf32, #tpu.memory_space<vmem>>, vector<1x16x16xf32>
    %269 = vector.shape_cast %268 : vector<1x16x16xf32> to vector<16x16xf32>
    %c16_59 = arith.constant 16 : index
    %270 = memref.load %arg4[%c16_59] : memref<192xf32, #tpu.memory_space<smem>>
    %271 = vector.broadcast %270 : f32 to vector<16x16xf32>
    %272 = arith.mulf %271, %269 : vector<16x16xf32>
    %273 = arith.addf %143, %272 : vector<16x16xf32>
    %c80 = arith.constant 80 : index
    %274 = memref.load %arg4[%c80] : memref<192xf32, #tpu.memory_space<smem>>
    %275 = vector.broadcast %274 : f32 to vector<16x16xf32>
    %276 = arith.mulf %275, %269 : vector<16x16xf32>
    %277 = arith.addf %147, %276 : vector<16x16xf32>
    %c144 = arith.constant 144 : index
    %278 = memref.load %arg4[%c144] : memref<192xf32, #tpu.memory_space<smem>>
    %279 = vector.broadcast %278 : f32 to vector<16x16xf32>
    %280 = arith.mulf %279, %269 : vector<16x16xf32>
    %281 = arith.addf %151, %280 : vector<16x16xf32>
    %c1_60 = arith.constant 1 : index
    %c0_61 = arith.constant 0 : index
    %c1_62 = arith.constant 1 : index
    %282 = vector.load %arg7[%c1_60, %c0_61, %c1_62] : memref<4x24x18xf32, #tpu.memory_space<vmem>>, vector<1x16x16xf32>
    %283 = vector.shape_cast %282 : vector<1x16x16xf32> to vector<16x16xf32>
    %c17 = arith.constant 17 : index
    %284 = memref.load %arg4[%c17] : memref<192xf32, #tpu.memory_space<smem>>
    %285 = vector.broadcast %284 : f32 to vector<16x16xf32>
    %286 = arith.mulf %285, %283 : vector<16x16xf32>
    %287 = arith.addf %273, %286 : vector<16x16xf32>
    %c81 = arith.constant 81 : index
    %288 = memref.load %arg4[%c81] : memref<192xf32, #tpu.memory_space<smem>>
    %289 = vector.broadcast %288 : f32 to vector<16x16xf32>
    %290 = arith.mulf %289, %283 : vector<16x16xf32>
    %291 = arith.addf %277, %290 : vector<16x16xf32>
    %c145 = arith.constant 145 : index
    %292 = memref.load %arg4[%c145] : memref<192xf32, #tpu.memory_space<smem>>
    %293 = vector.broadcast %292 : f32 to vector<16x16xf32>
    %294 = arith.mulf %293, %283 : vector<16x16xf32>
    %295 = arith.addf %281, %294 : vector<16x16xf32>
    %c20 = arith.constant 20 : index
    %296 = memref.load %arg4[%c20] : memref<192xf32, #tpu.memory_space<smem>>
    %297 = vector.broadcast %296 : f32 to vector<16x16xf32>
    %298 = arith.mulf %297, %283 : vector<16x16xf32>
    %299 = arith.addf %193, %298 : vector<16x16xf32>
    %c84 = arith.constant 84 : index
    %300 = memref.load %arg4[%c84] : memref<192xf32, #tpu.memory_space<smem>>
    %301 = vector.broadcast %300 : f32 to vector<16x16xf32>
    %302 = arith.mulf %301, %283 : vector<16x16xf32>
    %303 = arith.addf %197, %302 : vector<16x16xf32>
    %c148 = arith.constant 148 : index
    %304 = memref.load %arg4[%c148] : memref<192xf32, #tpu.memory_space<smem>>
    %305 = vector.broadcast %304 : f32 to vector<16x16xf32>
    %306 = arith.mulf %305, %283 : vector<16x16xf32>
    %307 = arith.addf %201, %306 : vector<16x16xf32>
    %c1_63 = arith.constant 1 : index
    %c0_64 = arith.constant 0 : index
    %c2_65 = arith.constant 2 : index
    %308 = vector.load %arg7[%c1_63, %c0_64, %c2_65] : memref<4x24x18xf32, #tpu.memory_space<vmem>>, vector<1x16x16xf32>
    %309 = vector.shape_cast %308 : vector<1x16x16xf32> to vector<16x16xf32>
    %c21 = arith.constant 21 : index
    %310 = memref.load %arg4[%c21] : memref<192xf32, #tpu.memory_space<smem>>
    %311 = vector.broadcast %310 : f32 to vector<16x16xf32>
    %312 = arith.mulf %311, %309 : vector<16x16xf32>
    %313 = arith.addf %299, %312 : vector<16x16xf32>
    %c85 = arith.constant 85 : index
    %314 = memref.load %arg4[%c85] : memref<192xf32, #tpu.memory_space<smem>>
    %315 = vector.broadcast %314 : f32 to vector<16x16xf32>
    %316 = arith.mulf %315, %309 : vector<16x16xf32>
    %317 = arith.addf %303, %316 : vector<16x16xf32>
    %c149 = arith.constant 149 : index
    %318 = memref.load %arg4[%c149] : memref<192xf32, #tpu.memory_space<smem>>
    %319 = vector.broadcast %318 : f32 to vector<16x16xf32>
    %320 = arith.mulf %319, %309 : vector<16x16xf32>
    %321 = arith.addf %307, %320 : vector<16x16xf32>
    %c1_66 = arith.constant 1 : index
    %c1_67 = arith.constant 1 : index
    %c0_68 = arith.constant 0 : index
    %322 = vector.load %arg7[%c1_66, %c1_67, %c0_68] : memref<4x24x18xf32, #tpu.memory_space<vmem>>, vector<1x16x16xf32>
    %323 = vector.shape_cast %322 : vector<1x16x16xf32> to vector<16x16xf32>
    %c18 = arith.constant 18 : index
    %324 = memref.load %arg4[%c18] : memref<192xf32, #tpu.memory_space<smem>>
    %325 = vector.broadcast %324 : f32 to vector<16x16xf32>
    %326 = arith.mulf %325, %323 : vector<16x16xf32>
    %327 = arith.addf %287, %326 : vector<16x16xf32>
    %c82 = arith.constant 82 : index
    %328 = memref.load %arg4[%c82] : memref<192xf32, #tpu.memory_space<smem>>
    %329 = vector.broadcast %328 : f32 to vector<16x16xf32>
    %330 = arith.mulf %329, %323 : vector<16x16xf32>
    %331 = arith.addf %291, %330 : vector<16x16xf32>
    %c146 = arith.constant 146 : index
    %332 = memref.load %arg4[%c146] : memref<192xf32, #tpu.memory_space<smem>>
    %333 = vector.broadcast %332 : f32 to vector<16x16xf32>
    %334 = arith.mulf %333, %323 : vector<16x16xf32>
    %335 = arith.addf %295, %334 : vector<16x16xf32>
    %c24 = arith.constant 24 : index
    %336 = memref.load %arg4[%c24] : memref<192xf32, #tpu.memory_space<smem>>
    %337 = vector.broadcast %336 : f32 to vector<16x16xf32>
    %338 = arith.mulf %337, %323 : vector<16x16xf32>
    %339 = arith.addf %233, %338 : vector<16x16xf32>
    %c88 = arith.constant 88 : index
    %340 = memref.load %arg4[%c88] : memref<192xf32, #tpu.memory_space<smem>>
    %341 = vector.broadcast %340 : f32 to vector<16x16xf32>
    %342 = arith.mulf %341, %323 : vector<16x16xf32>
    %343 = arith.addf %237, %342 : vector<16x16xf32>
    %c152 = arith.constant 152 : index
    %344 = memref.load %arg4[%c152] : memref<192xf32, #tpu.memory_space<smem>>
    %345 = vector.broadcast %344 : f32 to vector<16x16xf32>
    %346 = arith.mulf %345, %323 : vector<16x16xf32>
    %347 = arith.addf %241, %346 : vector<16x16xf32>
    %c1_69 = arith.constant 1 : index
    %c1_70 = arith.constant 1 : index
    %c1_71 = arith.constant 1 : index
    %348 = vector.load %arg7[%c1_69, %c1_70, %c1_71] : memref<4x24x18xf32, #tpu.memory_space<vmem>>, vector<1x16x16xf32>
    %349 = vector.shape_cast %348 : vector<1x16x16xf32> to vector<16x16xf32>
    %c19 = arith.constant 19 : index
    %350 = memref.load %arg4[%c19] : memref<192xf32, #tpu.memory_space<smem>>
    %351 = vector.broadcast %350 : f32 to vector<16x16xf32>
    %352 = arith.mulf %351, %349 : vector<16x16xf32>
    %353 = arith.addf %327, %352 : vector<16x16xf32>
    %c83 = arith.constant 83 : index
    %354 = memref.load %arg4[%c83] : memref<192xf32, #tpu.memory_space<smem>>
    %355 = vector.broadcast %354 : f32 to vector<16x16xf32>
    %356 = arith.mulf %355, %349 : vector<16x16xf32>
    %357 = arith.addf %331, %356 : vector<16x16xf32>
    %c147 = arith.constant 147 : index
    %358 = memref.load %arg4[%c147] : memref<192xf32, #tpu.memory_space<smem>>
    %359 = vector.broadcast %358 : f32 to vector<16x16xf32>
    %360 = arith.mulf %359, %349 : vector<16x16xf32>
    %361 = arith.addf %335, %360 : vector<16x16xf32>
    %c22 = arith.constant 22 : index
    %362 = memref.load %arg4[%c22] : memref<192xf32, #tpu.memory_space<smem>>
    %363 = vector.broadcast %362 : f32 to vector<16x16xf32>
    %364 = arith.mulf %363, %349 : vector<16x16xf32>
    %365 = arith.addf %313, %364 : vector<16x16xf32>
    %c86 = arith.constant 86 : index
    %366 = memref.load %arg4[%c86] : memref<192xf32, #tpu.memory_space<smem>>
    %367 = vector.broadcast %366 : f32 to vector<16x16xf32>
    %368 = arith.mulf %367, %349 : vector<16x16xf32>
    %369 = arith.addf %317, %368 : vector<16x16xf32>
    %c150 = arith.constant 150 : index
    %370 = memref.load %arg4[%c150] : memref<192xf32, #tpu.memory_space<smem>>
    %371 = vector.broadcast %370 : f32 to vector<16x16xf32>
    %372 = arith.mulf %371, %349 : vector<16x16xf32>
    %373 = arith.addf %321, %372 : vector<16x16xf32>
    %c25 = arith.constant 25 : index
    %374 = memref.load %arg4[%c25] : memref<192xf32, #tpu.memory_space<smem>>
    %375 = vector.broadcast %374 : f32 to vector<16x16xf32>
    %376 = arith.mulf %375, %349 : vector<16x16xf32>
    %377 = arith.addf %339, %376 : vector<16x16xf32>
    %c89 = arith.constant 89 : index
    %378 = memref.load %arg4[%c89] : memref<192xf32, #tpu.memory_space<smem>>
    %379 = vector.broadcast %378 : f32 to vector<16x16xf32>
    %380 = arith.mulf %379, %349 : vector<16x16xf32>
    %381 = arith.addf %343, %380 : vector<16x16xf32>
    %c153 = arith.constant 153 : index
    %382 = memref.load %arg4[%c153] : memref<192xf32, #tpu.memory_space<smem>>
    %383 = vector.broadcast %382 : f32 to vector<16x16xf32>
    %384 = arith.mulf %383, %349 : vector<16x16xf32>
    %385 = arith.addf %347, %384 : vector<16x16xf32>
    %c28 = arith.constant 28 : index
    %386 = memref.load %arg4[%c28] : memref<192xf32, #tpu.memory_space<smem>>
    %387 = vector.broadcast %386 : f32 to vector<16x16xf32>
    %388 = arith.mulf %387, %349 : vector<16x16xf32>
    %389 = arith.addf %259, %388 : vector<16x16xf32>
    %c92 = arith.constant 92 : index
    %390 = memref.load %arg4[%c92] : memref<192xf32, #tpu.memory_space<smem>>
    %391 = vector.broadcast %390 : f32 to vector<16x16xf32>
    %392 = arith.mulf %391, %349 : vector<16x16xf32>
    %393 = arith.addf %263, %392 : vector<16x16xf32>
    %c156 = arith.constant 156 : index
    %394 = memref.load %arg4[%c156] : memref<192xf32, #tpu.memory_space<smem>>
    %395 = vector.broadcast %394 : f32 to vector<16x16xf32>
    %396 = arith.mulf %395, %349 : vector<16x16xf32>
    %397 = arith.addf %267, %396 : vector<16x16xf32>
    %c1_72 = arith.constant 1 : index
    %c1_73 = arith.constant 1 : index
    %c2_74 = arith.constant 2 : index
    %398 = vector.load %arg7[%c1_72, %c1_73, %c2_74] : memref<4x24x18xf32, #tpu.memory_space<vmem>>, vector<1x16x16xf32>
    %399 = vector.shape_cast %398 : vector<1x16x16xf32> to vector<16x16xf32>
    %c23 = arith.constant 23 : index
    %400 = memref.load %arg4[%c23] : memref<192xf32, #tpu.memory_space<smem>>
    %401 = vector.broadcast %400 : f32 to vector<16x16xf32>
    %402 = arith.mulf %401, %399 : vector<16x16xf32>
    %403 = arith.addf %365, %402 : vector<16x16xf32>
    %c87 = arith.constant 87 : index
    %404 = memref.load %arg4[%c87] : memref<192xf32, #tpu.memory_space<smem>>
    %405 = vector.broadcast %404 : f32 to vector<16x16xf32>
    %406 = arith.mulf %405, %399 : vector<16x16xf32>
    %407 = arith.addf %369, %406 : vector<16x16xf32>
    %c151 = arith.constant 151 : index
    %408 = memref.load %arg4[%c151] : memref<192xf32, #tpu.memory_space<smem>>
    %409 = vector.broadcast %408 : f32 to vector<16x16xf32>
    %410 = arith.mulf %409, %399 : vector<16x16xf32>
    %411 = arith.addf %373, %410 : vector<16x16xf32>
    %c29 = arith.constant 29 : index
    %412 = memref.load %arg4[%c29] : memref<192xf32, #tpu.memory_space<smem>>
    %413 = vector.broadcast %412 : f32 to vector<16x16xf32>
    %414 = arith.mulf %413, %399 : vector<16x16xf32>
    %415 = arith.addf %389, %414 : vector<16x16xf32>
    %c93 = arith.constant 93 : index
    %416 = memref.load %arg4[%c93] : memref<192xf32, #tpu.memory_space<smem>>
    %417 = vector.broadcast %416 : f32 to vector<16x16xf32>
    %418 = arith.mulf %417, %399 : vector<16x16xf32>
    %419 = arith.addf %393, %418 : vector<16x16xf32>
    %c157 = arith.constant 157 : index
    %420 = memref.load %arg4[%c157] : memref<192xf32, #tpu.memory_space<smem>>
    %421 = vector.broadcast %420 : f32 to vector<16x16xf32>
    %422 = arith.mulf %421, %399 : vector<16x16xf32>
    %423 = arith.addf %397, %422 : vector<16x16xf32>
    %c1_75 = arith.constant 1 : index
    %c2_76 = arith.constant 2 : index
    %c0_77 = arith.constant 0 : index
    %424 = vector.load %arg7[%c1_75, %c2_76, %c0_77] : memref<4x24x18xf32, #tpu.memory_space<vmem>>, vector<1x16x16xf32>
    %425 = vector.shape_cast %424 : vector<1x16x16xf32> to vector<16x16xf32>
    %c26 = arith.constant 26 : index
    %426 = memref.load %arg4[%c26] : memref<192xf32, #tpu.memory_space<smem>>
    %427 = vector.broadcast %426 : f32 to vector<16x16xf32>
    %428 = arith.mulf %427, %425 : vector<16x16xf32>
    %429 = arith.addf %377, %428 : vector<16x16xf32>
    %c90 = arith.constant 90 : index
    %430 = memref.load %arg4[%c90] : memref<192xf32, #tpu.memory_space<smem>>
    %431 = vector.broadcast %430 : f32 to vector<16x16xf32>
    %432 = arith.mulf %431, %425 : vector<16x16xf32>
    %433 = arith.addf %381, %432 : vector<16x16xf32>
    %c154 = arith.constant 154 : index
    %434 = memref.load %arg4[%c154] : memref<192xf32, #tpu.memory_space<smem>>
    %435 = vector.broadcast %434 : f32 to vector<16x16xf32>
    %436 = arith.mulf %435, %425 : vector<16x16xf32>
    %437 = arith.addf %385, %436 : vector<16x16xf32>
    %c1_78 = arith.constant 1 : index
    %c2_79 = arith.constant 2 : index
    %c1_80 = arith.constant 1 : index
    %438 = vector.load %arg7[%c1_78, %c2_79, %c1_80] : memref<4x24x18xf32, #tpu.memory_space<vmem>>, vector<1x16x16xf32>
    %439 = vector.shape_cast %438 : vector<1x16x16xf32> to vector<16x16xf32>
    %c27 = arith.constant 27 : index
    %440 = memref.load %arg4[%c27] : memref<192xf32, #tpu.memory_space<smem>>
    %441 = vector.broadcast %440 : f32 to vector<16x16xf32>
    %442 = arith.mulf %441, %439 : vector<16x16xf32>
    %443 = arith.addf %429, %442 : vector<16x16xf32>
    %c91 = arith.constant 91 : index
    %444 = memref.load %arg4[%c91] : memref<192xf32, #tpu.memory_space<smem>>
    %445 = vector.broadcast %444 : f32 to vector<16x16xf32>
    %446 = arith.mulf %445, %439 : vector<16x16xf32>
    %447 = arith.addf %433, %446 : vector<16x16xf32>
    %c155 = arith.constant 155 : index
    %448 = memref.load %arg4[%c155] : memref<192xf32, #tpu.memory_space<smem>>
    %449 = vector.broadcast %448 : f32 to vector<16x16xf32>
    %450 = arith.mulf %449, %439 : vector<16x16xf32>
    %451 = arith.addf %437, %450 : vector<16x16xf32>
    %c30 = arith.constant 30 : index
    %452 = memref.load %arg4[%c30] : memref<192xf32, #tpu.memory_space<smem>>
    %453 = vector.broadcast %452 : f32 to vector<16x16xf32>
    %454 = arith.mulf %453, %439 : vector<16x16xf32>
    %455 = arith.addf %415, %454 : vector<16x16xf32>
    %c94 = arith.constant 94 : index
    %456 = memref.load %arg4[%c94] : memref<192xf32, #tpu.memory_space<smem>>
    %457 = vector.broadcast %456 : f32 to vector<16x16xf32>
    %458 = arith.mulf %457, %439 : vector<16x16xf32>
    %459 = arith.addf %419, %458 : vector<16x16xf32>
    %c158 = arith.constant 158 : index
    %460 = memref.load %arg4[%c158] : memref<192xf32, #tpu.memory_space<smem>>
    %461 = vector.broadcast %460 : f32 to vector<16x16xf32>
    %462 = arith.mulf %461, %439 : vector<16x16xf32>
    %463 = arith.addf %423, %462 : vector<16x16xf32>
    %c1_81 = arith.constant 1 : index
    %c2_82 = arith.constant 2 : index
    %c2_83 = arith.constant 2 : index
    %464 = vector.load %arg7[%c1_81, %c2_82, %c2_83] : memref<4x24x18xf32, #tpu.memory_space<vmem>>, vector<1x16x16xf32>
    %465 = vector.shape_cast %464 : vector<1x16x16xf32> to vector<16x16xf32>
    %c31 = arith.constant 31 : index
    %466 = memref.load %arg4[%c31] : memref<192xf32, #tpu.memory_space<smem>>
    %467 = vector.broadcast %466 : f32 to vector<16x16xf32>
    %468 = arith.mulf %467, %465 : vector<16x16xf32>
    %469 = arith.addf %455, %468 : vector<16x16xf32>
    %c95 = arith.constant 95 : index
    %470 = memref.load %arg4[%c95] : memref<192xf32, #tpu.memory_space<smem>>
    %471 = vector.broadcast %470 : f32 to vector<16x16xf32>
    %472 = arith.mulf %471, %465 : vector<16x16xf32>
    %473 = arith.addf %459, %472 : vector<16x16xf32>
    %c159 = arith.constant 159 : index
    %474 = memref.load %arg4[%c159] : memref<192xf32, #tpu.memory_space<smem>>
    %475 = vector.broadcast %474 : f32 to vector<16x16xf32>
    %476 = arith.mulf %475, %465 : vector<16x16xf32>
    %477 = arith.addf %463, %476 : vector<16x16xf32>
    %c2_84 = arith.constant 2 : index
    %c0_85 = arith.constant 0 : index
    %c0_86 = arith.constant 0 : index
    %478 = vector.load %arg7[%c2_84, %c0_85, %c0_86] : memref<4x24x18xf32, #tpu.memory_space<vmem>>, vector<1x16x16xf32>
    %479 = vector.shape_cast %478 : vector<1x16x16xf32> to vector<16x16xf32>
    %c32 = arith.constant 32 : index
    %480 = memref.load %arg4[%c32] : memref<192xf32, #tpu.memory_space<smem>>
    %481 = vector.broadcast %480 : f32 to vector<16x16xf32>
    %482 = arith.mulf %481, %479 : vector<16x16xf32>
    %483 = arith.addf %353, %482 : vector<16x16xf32>
    %c96 = arith.constant 96 : index
    %484 = memref.load %arg4[%c96] : memref<192xf32, #tpu.memory_space<smem>>
    %485 = vector.broadcast %484 : f32 to vector<16x16xf32>
    %486 = arith.mulf %485, %479 : vector<16x16xf32>
    %487 = arith.addf %357, %486 : vector<16x16xf32>
    %c160 = arith.constant 160 : index
    %488 = memref.load %arg4[%c160] : memref<192xf32, #tpu.memory_space<smem>>
    %489 = vector.broadcast %488 : f32 to vector<16x16xf32>
    %490 = arith.mulf %489, %479 : vector<16x16xf32>
    %491 = arith.addf %361, %490 : vector<16x16xf32>
    %c2_87 = arith.constant 2 : index
    %c0_88 = arith.constant 0 : index
    %c1_89 = arith.constant 1 : index
    %492 = vector.load %arg7[%c2_87, %c0_88, %c1_89] : memref<4x24x18xf32, #tpu.memory_space<vmem>>, vector<1x16x16xf32>
    %493 = vector.shape_cast %492 : vector<1x16x16xf32> to vector<16x16xf32>
    %c33 = arith.constant 33 : index
    %494 = memref.load %arg4[%c33] : memref<192xf32, #tpu.memory_space<smem>>
    %495 = vector.broadcast %494 : f32 to vector<16x16xf32>
    %496 = arith.mulf %495, %493 : vector<16x16xf32>
    %497 = arith.addf %483, %496 : vector<16x16xf32>
    %c97 = arith.constant 97 : index
    %498 = memref.load %arg4[%c97] : memref<192xf32, #tpu.memory_space<smem>>
    %499 = vector.broadcast %498 : f32 to vector<16x16xf32>
    %500 = arith.mulf %499, %493 : vector<16x16xf32>
    %501 = arith.addf %487, %500 : vector<16x16xf32>
    %c161 = arith.constant 161 : index
    %502 = memref.load %arg4[%c161] : memref<192xf32, #tpu.memory_space<smem>>
    %503 = vector.broadcast %502 : f32 to vector<16x16xf32>
    %504 = arith.mulf %503, %493 : vector<16x16xf32>
    %505 = arith.addf %491, %504 : vector<16x16xf32>
    %c36 = arith.constant 36 : index
    %506 = memref.load %arg4[%c36] : memref<192xf32, #tpu.memory_space<smem>>
    %507 = vector.broadcast %506 : f32 to vector<16x16xf32>
    %508 = arith.mulf %507, %493 : vector<16x16xf32>
    %509 = arith.addf %403, %508 : vector<16x16xf32>
    %c100 = arith.constant 100 : index
    %510 = memref.load %arg4[%c100] : memref<192xf32, #tpu.memory_space<smem>>
    %511 = vector.broadcast %510 : f32 to vector<16x16xf32>
    %512 = arith.mulf %511, %493 : vector<16x16xf32>
    %513 = arith.addf %407, %512 : vector<16x16xf32>
    %c164 = arith.constant 164 : index
    %514 = memref.load %arg4[%c164] : memref<192xf32, #tpu.memory_space<smem>>
    %515 = vector.broadcast %514 : f32 to vector<16x16xf32>
    %516 = arith.mulf %515, %493 : vector<16x16xf32>
    %517 = arith.addf %411, %516 : vector<16x16xf32>
    %c2_90 = arith.constant 2 : index
    %c0_91 = arith.constant 0 : index
    %c2_92 = arith.constant 2 : index
    %518 = vector.load %arg7[%c2_90, %c0_91, %c2_92] : memref<4x24x18xf32, #tpu.memory_space<vmem>>, vector<1x16x16xf32>
    %519 = vector.shape_cast %518 : vector<1x16x16xf32> to vector<16x16xf32>
    %c37 = arith.constant 37 : index
    %520 = memref.load %arg4[%c37] : memref<192xf32, #tpu.memory_space<smem>>
    %521 = vector.broadcast %520 : f32 to vector<16x16xf32>
    %522 = arith.mulf %521, %519 : vector<16x16xf32>
    %523 = arith.addf %509, %522 : vector<16x16xf32>
    %c101 = arith.constant 101 : index
    %524 = memref.load %arg4[%c101] : memref<192xf32, #tpu.memory_space<smem>>
    %525 = vector.broadcast %524 : f32 to vector<16x16xf32>
    %526 = arith.mulf %525, %519 : vector<16x16xf32>
    %527 = arith.addf %513, %526 : vector<16x16xf32>
    %c165 = arith.constant 165 : index
    %528 = memref.load %arg4[%c165] : memref<192xf32, #tpu.memory_space<smem>>
    %529 = vector.broadcast %528 : f32 to vector<16x16xf32>
    %530 = arith.mulf %529, %519 : vector<16x16xf32>
    %531 = arith.addf %517, %530 : vector<16x16xf32>
    %c2_93 = arith.constant 2 : index
    %c1_94 = arith.constant 1 : index
    %c0_95 = arith.constant 0 : index
    %532 = vector.load %arg7[%c2_93, %c1_94, %c0_95] : memref<4x24x18xf32, #tpu.memory_space<vmem>>, vector<1x16x16xf32>
    %533 = vector.shape_cast %532 : vector<1x16x16xf32> to vector<16x16xf32>
    %c34 = arith.constant 34 : index
    %534 = memref.load %arg4[%c34] : memref<192xf32, #tpu.memory_space<smem>>
    %535 = vector.broadcast %534 : f32 to vector<16x16xf32>
    %536 = arith.mulf %535, %533 : vector<16x16xf32>
    %537 = arith.addf %497, %536 : vector<16x16xf32>
    %c98 = arith.constant 98 : index
    %538 = memref.load %arg4[%c98] : memref<192xf32, #tpu.memory_space<smem>>
    %539 = vector.broadcast %538 : f32 to vector<16x16xf32>
    %540 = arith.mulf %539, %533 : vector<16x16xf32>
    %541 = arith.addf %501, %540 : vector<16x16xf32>
    %c162 = arith.constant 162 : index
    %542 = memref.load %arg4[%c162] : memref<192xf32, #tpu.memory_space<smem>>
    %543 = vector.broadcast %542 : f32 to vector<16x16xf32>
    %544 = arith.mulf %543, %533 : vector<16x16xf32>
    %545 = arith.addf %505, %544 : vector<16x16xf32>
    %c40 = arith.constant 40 : index
    %546 = memref.load %arg4[%c40] : memref<192xf32, #tpu.memory_space<smem>>
    %547 = vector.broadcast %546 : f32 to vector<16x16xf32>
    %548 = arith.mulf %547, %533 : vector<16x16xf32>
    %549 = arith.addf %443, %548 : vector<16x16xf32>
    %c104 = arith.constant 104 : index
    %550 = memref.load %arg4[%c104] : memref<192xf32, #tpu.memory_space<smem>>
    %551 = vector.broadcast %550 : f32 to vector<16x16xf32>
    %552 = arith.mulf %551, %533 : vector<16x16xf32>
    %553 = arith.addf %447, %552 : vector<16x16xf32>
    %c168 = arith.constant 168 : index
    %554 = memref.load %arg4[%c168] : memref<192xf32, #tpu.memory_space<smem>>
    %555 = vector.broadcast %554 : f32 to vector<16x16xf32>
    %556 = arith.mulf %555, %533 : vector<16x16xf32>
    %557 = arith.addf %451, %556 : vector<16x16xf32>
    %c2_96 = arith.constant 2 : index
    %c1_97 = arith.constant 1 : index
    %c1_98 = arith.constant 1 : index
    %558 = vector.load %arg7[%c2_96, %c1_97, %c1_98] : memref<4x24x18xf32, #tpu.memory_space<vmem>>, vector<1x16x16xf32>
    %559 = vector.shape_cast %558 : vector<1x16x16xf32> to vector<16x16xf32>
    %c35 = arith.constant 35 : index
    %560 = memref.load %arg4[%c35] : memref<192xf32, #tpu.memory_space<smem>>
    %561 = vector.broadcast %560 : f32 to vector<16x16xf32>
    %562 = arith.mulf %561, %559 : vector<16x16xf32>
    %563 = arith.addf %537, %562 : vector<16x16xf32>
    %c99 = arith.constant 99 : index
    %564 = memref.load %arg4[%c99] : memref<192xf32, #tpu.memory_space<smem>>
    %565 = vector.broadcast %564 : f32 to vector<16x16xf32>
    %566 = arith.mulf %565, %559 : vector<16x16xf32>
    %567 = arith.addf %541, %566 : vector<16x16xf32>
    %c163 = arith.constant 163 : index
    %568 = memref.load %arg4[%c163] : memref<192xf32, #tpu.memory_space<smem>>
    %569 = vector.broadcast %568 : f32 to vector<16x16xf32>
    %570 = arith.mulf %569, %559 : vector<16x16xf32>
    %571 = arith.addf %545, %570 : vector<16x16xf32>
    %c38 = arith.constant 38 : index
    %572 = memref.load %arg4[%c38] : memref<192xf32, #tpu.memory_space<smem>>
    %573 = vector.broadcast %572 : f32 to vector<16x16xf32>
    %574 = arith.mulf %573, %559 : vector<16x16xf32>
    %575 = arith.addf %523, %574 : vector<16x16xf32>
    %c102 = arith.constant 102 : index
    %576 = memref.load %arg4[%c102] : memref<192xf32, #tpu.memory_space<smem>>
    %577 = vector.broadcast %576 : f32 to vector<16x16xf32>
    %578 = arith.mulf %577, %559 : vector<16x16xf32>
    %579 = arith.addf %527, %578 : vector<16x16xf32>
    %c166 = arith.constant 166 : index
    %580 = memref.load %arg4[%c166] : memref<192xf32, #tpu.memory_space<smem>>
    %581 = vector.broadcast %580 : f32 to vector<16x16xf32>
    %582 = arith.mulf %581, %559 : vector<16x16xf32>
    %583 = arith.addf %531, %582 : vector<16x16xf32>
    %c41 = arith.constant 41 : index
    %584 = memref.load %arg4[%c41] : memref<192xf32, #tpu.memory_space<smem>>
    %585 = vector.broadcast %584 : f32 to vector<16x16xf32>
    %586 = arith.mulf %585, %559 : vector<16x16xf32>
    %587 = arith.addf %549, %586 : vector<16x16xf32>
    %c105 = arith.constant 105 : index
    %588 = memref.load %arg4[%c105] : memref<192xf32, #tpu.memory_space<smem>>
    %589 = vector.broadcast %588 : f32 to vector<16x16xf32>
    %590 = arith.mulf %589, %559 : vector<16x16xf32>
    %591 = arith.addf %553, %590 : vector<16x16xf32>
    %c169 = arith.constant 169 : index
    %592 = memref.load %arg4[%c169] : memref<192xf32, #tpu.memory_space<smem>>
    %593 = vector.broadcast %592 : f32 to vector<16x16xf32>
    %594 = arith.mulf %593, %559 : vector<16x16xf32>
    %595 = arith.addf %557, %594 : vector<16x16xf32>
    %c44 = arith.constant 44 : index
    %596 = memref.load %arg4[%c44] : memref<192xf32, #tpu.memory_space<smem>>
    %597 = vector.broadcast %596 : f32 to vector<16x16xf32>
    %598 = arith.mulf %597, %559 : vector<16x16xf32>
    %599 = arith.addf %469, %598 : vector<16x16xf32>
    %c108 = arith.constant 108 : index
    %600 = memref.load %arg4[%c108] : memref<192xf32, #tpu.memory_space<smem>>
    %601 = vector.broadcast %600 : f32 to vector<16x16xf32>
    %602 = arith.mulf %601, %559 : vector<16x16xf32>
    %603 = arith.addf %473, %602 : vector<16x16xf32>
    %c172 = arith.constant 172 : index
    %604 = memref.load %arg4[%c172] : memref<192xf32, #tpu.memory_space<smem>>
    %605 = vector.broadcast %604 : f32 to vector<16x16xf32>
    %606 = arith.mulf %605, %559 : vector<16x16xf32>
    %607 = arith.addf %477, %606 : vector<16x16xf32>
    %c2_99 = arith.constant 2 : index
    %c1_100 = arith.constant 1 : index
    %c2_101 = arith.constant 2 : index
    %608 = vector.load %arg7[%c2_99, %c1_100, %c2_101] : memref<4x24x18xf32, #tpu.memory_space<vmem>>, vector<1x16x16xf32>
    %609 = vector.shape_cast %608 : vector<1x16x16xf32> to vector<16x16xf32>
    %c39 = arith.constant 39 : index
    %610 = memref.load %arg4[%c39] : memref<192xf32, #tpu.memory_space<smem>>
    %611 = vector.broadcast %610 : f32 to vector<16x16xf32>
    %612 = arith.mulf %611, %609 : vector<16x16xf32>
    %613 = arith.addf %575, %612 : vector<16x16xf32>
    %c103 = arith.constant 103 : index
    %614 = memref.load %arg4[%c103] : memref<192xf32, #tpu.memory_space<smem>>
    %615 = vector.broadcast %614 : f32 to vector<16x16xf32>
    %616 = arith.mulf %615, %609 : vector<16x16xf32>
    %617 = arith.addf %579, %616 : vector<16x16xf32>
    %c167 = arith.constant 167 : index
    %618 = memref.load %arg4[%c167] : memref<192xf32, #tpu.memory_space<smem>>
    %619 = vector.broadcast %618 : f32 to vector<16x16xf32>
    %620 = arith.mulf %619, %609 : vector<16x16xf32>
    %621 = arith.addf %583, %620 : vector<16x16xf32>
    %c45 = arith.constant 45 : index
    %622 = memref.load %arg4[%c45] : memref<192xf32, #tpu.memory_space<smem>>
    %623 = vector.broadcast %622 : f32 to vector<16x16xf32>
    %624 = arith.mulf %623, %609 : vector<16x16xf32>
    %625 = arith.addf %599, %624 : vector<16x16xf32>
    %c109 = arith.constant 109 : index
    %626 = memref.load %arg4[%c109] : memref<192xf32, #tpu.memory_space<smem>>
    %627 = vector.broadcast %626 : f32 to vector<16x16xf32>
    %628 = arith.mulf %627, %609 : vector<16x16xf32>
    %629 = arith.addf %603, %628 : vector<16x16xf32>
    %c173 = arith.constant 173 : index
    %630 = memref.load %arg4[%c173] : memref<192xf32, #tpu.memory_space<smem>>
    %631 = vector.broadcast %630 : f32 to vector<16x16xf32>
    %632 = arith.mulf %631, %609 : vector<16x16xf32>
    %633 = arith.addf %607, %632 : vector<16x16xf32>
    %c2_102 = arith.constant 2 : index
    %c2_103 = arith.constant 2 : index
    %c0_104 = arith.constant 0 : index
    %634 = vector.load %arg7[%c2_102, %c2_103, %c0_104] : memref<4x24x18xf32, #tpu.memory_space<vmem>>, vector<1x16x16xf32>
    %635 = vector.shape_cast %634 : vector<1x16x16xf32> to vector<16x16xf32>
    %c42 = arith.constant 42 : index
    %636 = memref.load %arg4[%c42] : memref<192xf32, #tpu.memory_space<smem>>
    %637 = vector.broadcast %636 : f32 to vector<16x16xf32>
    %638 = arith.mulf %637, %635 : vector<16x16xf32>
    %639 = arith.addf %587, %638 : vector<16x16xf32>
    %c106 = arith.constant 106 : index
    %640 = memref.load %arg4[%c106] : memref<192xf32, #tpu.memory_space<smem>>
    %641 = vector.broadcast %640 : f32 to vector<16x16xf32>
    %642 = arith.mulf %641, %635 : vector<16x16xf32>
    %643 = arith.addf %591, %642 : vector<16x16xf32>
    %c170 = arith.constant 170 : index
    %644 = memref.load %arg4[%c170] : memref<192xf32, #tpu.memory_space<smem>>
    %645 = vector.broadcast %644 : f32 to vector<16x16xf32>
    %646 = arith.mulf %645, %635 : vector<16x16xf32>
    %647 = arith.addf %595, %646 : vector<16x16xf32>
    %c2_105 = arith.constant 2 : index
    %c2_106 = arith.constant 2 : index
    %c1_107 = arith.constant 1 : index
    %648 = vector.load %arg7[%c2_105, %c2_106, %c1_107] : memref<4x24x18xf32, #tpu.memory_space<vmem>>, vector<1x16x16xf32>
    %649 = vector.shape_cast %648 : vector<1x16x16xf32> to vector<16x16xf32>
    %c43 = arith.constant 43 : index
    %650 = memref.load %arg4[%c43] : memref<192xf32, #tpu.memory_space<smem>>
    %651 = vector.broadcast %650 : f32 to vector<16x16xf32>
    %652 = arith.mulf %651, %649 : vector<16x16xf32>
    %653 = arith.addf %639, %652 : vector<16x16xf32>
    %c107 = arith.constant 107 : index
    %654 = memref.load %arg4[%c107] : memref<192xf32, #tpu.memory_space<smem>>
    %655 = vector.broadcast %654 : f32 to vector<16x16xf32>
    %656 = arith.mulf %655, %649 : vector<16x16xf32>
    %657 = arith.addf %643, %656 : vector<16x16xf32>
    %c171 = arith.constant 171 : index
    %658 = memref.load %arg4[%c171] : memref<192xf32, #tpu.memory_space<smem>>
    %659 = vector.broadcast %658 : f32 to vector<16x16xf32>
    %660 = arith.mulf %659, %649 : vector<16x16xf32>
    %661 = arith.addf %647, %660 : vector<16x16xf32>
    %c46 = arith.constant 46 : index
    %662 = memref.load %arg4[%c46] : memref<192xf32, #tpu.memory_space<smem>>
    %663 = vector.broadcast %662 : f32 to vector<16x16xf32>
    %664 = arith.mulf %663, %649 : vector<16x16xf32>
    %665 = arith.addf %625, %664 : vector<16x16xf32>
    %c110 = arith.constant 110 : index
    %666 = memref.load %arg4[%c110] : memref<192xf32, #tpu.memory_space<smem>>
    %667 = vector.broadcast %666 : f32 to vector<16x16xf32>
    %668 = arith.mulf %667, %649 : vector<16x16xf32>
    %669 = arith.addf %629, %668 : vector<16x16xf32>
    %c174 = arith.constant 174 : index
    %670 = memref.load %arg4[%c174] : memref<192xf32, #tpu.memory_space<smem>>
    %671 = vector.broadcast %670 : f32 to vector<16x16xf32>
    %672 = arith.mulf %671, %649 : vector<16x16xf32>
    %673 = arith.addf %633, %672 : vector<16x16xf32>
    %c2_108 = arith.constant 2 : index
    %c2_109 = arith.constant 2 : index
    %c2_110 = arith.constant 2 : index
    %674 = vector.load %arg7[%c2_108, %c2_109, %c2_110] : memref<4x24x18xf32, #tpu.memory_space<vmem>>, vector<1x16x16xf32>
    %675 = vector.shape_cast %674 : vector<1x16x16xf32> to vector<16x16xf32>
    %c47 = arith.constant 47 : index
    %676 = memref.load %arg4[%c47] : memref<192xf32, #tpu.memory_space<smem>>
    %677 = vector.broadcast %676 : f32 to vector<16x16xf32>
    %678 = arith.mulf %677, %675 : vector<16x16xf32>
    %679 = arith.addf %665, %678 : vector<16x16xf32>
    %c111 = arith.constant 111 : index
    %680 = memref.load %arg4[%c111] : memref<192xf32, #tpu.memory_space<smem>>
    %681 = vector.broadcast %680 : f32 to vector<16x16xf32>
    %682 = arith.mulf %681, %675 : vector<16x16xf32>
    %683 = arith.addf %669, %682 : vector<16x16xf32>
    %c175 = arith.constant 175 : index
    %684 = memref.load %arg4[%c175] : memref<192xf32, #tpu.memory_space<smem>>
    %685 = vector.broadcast %684 : f32 to vector<16x16xf32>
    %686 = arith.mulf %685, %675 : vector<16x16xf32>
    %687 = arith.addf %673, %686 : vector<16x16xf32>
    %c3_111 = arith.constant 3 : index
    %c0_112 = arith.constant 0 : index
    %c0_113 = arith.constant 0 : index
    %688 = vector.load %arg7[%c3_111, %c0_112, %c0_113] : memref<4x24x18xf32, #tpu.memory_space<vmem>>, vector<1x16x16xf32>
    %689 = vector.shape_cast %688 : vector<1x16x16xf32> to vector<16x16xf32>
    %c48 = arith.constant 48 : index
    %690 = memref.load %arg4[%c48] : memref<192xf32, #tpu.memory_space<smem>>
    %691 = vector.broadcast %690 : f32 to vector<16x16xf32>
    %692 = arith.mulf %691, %689 : vector<16x16xf32>
    %693 = arith.addf %563, %692 : vector<16x16xf32>
    %c112 = arith.constant 112 : index
    %694 = memref.load %arg4[%c112] : memref<192xf32, #tpu.memory_space<smem>>
    %695 = vector.broadcast %694 : f32 to vector<16x16xf32>
    %696 = arith.mulf %695, %689 : vector<16x16xf32>
    %697 = arith.addf %567, %696 : vector<16x16xf32>
    %c176 = arith.constant 176 : index
    %698 = memref.load %arg4[%c176] : memref<192xf32, #tpu.memory_space<smem>>
    %699 = vector.broadcast %698 : f32 to vector<16x16xf32>
    %700 = arith.mulf %699, %689 : vector<16x16xf32>
    %701 = arith.addf %571, %700 : vector<16x16xf32>
    %c3_114 = arith.constant 3 : index
    %c0_115 = arith.constant 0 : index
    %c1_116 = arith.constant 1 : index
    %702 = vector.load %arg7[%c3_114, %c0_115, %c1_116] : memref<4x24x18xf32, #tpu.memory_space<vmem>>, vector<1x16x16xf32>
    %703 = vector.shape_cast %702 : vector<1x16x16xf32> to vector<16x16xf32>
    %c49 = arith.constant 49 : index
    %704 = memref.load %arg4[%c49] : memref<192xf32, #tpu.memory_space<smem>>
    %705 = vector.broadcast %704 : f32 to vector<16x16xf32>
    %706 = arith.mulf %705, %703 : vector<16x16xf32>
    %707 = arith.addf %693, %706 : vector<16x16xf32>
    %c113 = arith.constant 113 : index
    %708 = memref.load %arg4[%c113] : memref<192xf32, #tpu.memory_space<smem>>
    %709 = vector.broadcast %708 : f32 to vector<16x16xf32>
    %710 = arith.mulf %709, %703 : vector<16x16xf32>
    %711 = arith.addf %697, %710 : vector<16x16xf32>
    %c177 = arith.constant 177 : index
    %712 = memref.load %arg4[%c177] : memref<192xf32, #tpu.memory_space<smem>>
    %713 = vector.broadcast %712 : f32 to vector<16x16xf32>
    %714 = arith.mulf %713, %703 : vector<16x16xf32>
    %715 = arith.addf %701, %714 : vector<16x16xf32>
    %c52 = arith.constant 52 : index
    %716 = memref.load %arg4[%c52] : memref<192xf32, #tpu.memory_space<smem>>
    %717 = vector.broadcast %716 : f32 to vector<16x16xf32>
    %718 = arith.mulf %717, %703 : vector<16x16xf32>
    %719 = arith.addf %613, %718 : vector<16x16xf32>
    %c116 = arith.constant 116 : index
    %720 = memref.load %arg4[%c116] : memref<192xf32, #tpu.memory_space<smem>>
    %721 = vector.broadcast %720 : f32 to vector<16x16xf32>
    %722 = arith.mulf %721, %703 : vector<16x16xf32>
    %723 = arith.addf %617, %722 : vector<16x16xf32>
    %c180 = arith.constant 180 : index
    %724 = memref.load %arg4[%c180] : memref<192xf32, #tpu.memory_space<smem>>
    %725 = vector.broadcast %724 : f32 to vector<16x16xf32>
    %726 = arith.mulf %725, %703 : vector<16x16xf32>
    %727 = arith.addf %621, %726 : vector<16x16xf32>
    %c3_117 = arith.constant 3 : index
    %c0_118 = arith.constant 0 : index
    %c2_119 = arith.constant 2 : index
    %728 = vector.load %arg7[%c3_117, %c0_118, %c2_119] : memref<4x24x18xf32, #tpu.memory_space<vmem>>, vector<1x16x16xf32>
    %729 = vector.shape_cast %728 : vector<1x16x16xf32> to vector<16x16xf32>
    %c53 = arith.constant 53 : index
    %730 = memref.load %arg4[%c53] : memref<192xf32, #tpu.memory_space<smem>>
    %731 = vector.broadcast %730 : f32 to vector<16x16xf32>
    %732 = arith.mulf %731, %729 : vector<16x16xf32>
    %733 = arith.addf %719, %732 : vector<16x16xf32>
    %c117 = arith.constant 117 : index
    %734 = memref.load %arg4[%c117] : memref<192xf32, #tpu.memory_space<smem>>
    %735 = vector.broadcast %734 : f32 to vector<16x16xf32>
    %736 = arith.mulf %735, %729 : vector<16x16xf32>
    %737 = arith.addf %723, %736 : vector<16x16xf32>
    %c181 = arith.constant 181 : index
    %738 = memref.load %arg4[%c181] : memref<192xf32, #tpu.memory_space<smem>>
    %739 = vector.broadcast %738 : f32 to vector<16x16xf32>
    %740 = arith.mulf %739, %729 : vector<16x16xf32>
    %741 = arith.addf %727, %740 : vector<16x16xf32>
    %c3_120 = arith.constant 3 : index
    %c1_121 = arith.constant 1 : index
    %c0_122 = arith.constant 0 : index
    %742 = vector.load %arg7[%c3_120, %c1_121, %c0_122] : memref<4x24x18xf32, #tpu.memory_space<vmem>>, vector<1x16x16xf32>
    %743 = vector.shape_cast %742 : vector<1x16x16xf32> to vector<16x16xf32>
    %c50 = arith.constant 50 : index
    %744 = memref.load %arg4[%c50] : memref<192xf32, #tpu.memory_space<smem>>
    %745 = vector.broadcast %744 : f32 to vector<16x16xf32>
    %746 = arith.mulf %745, %743 : vector<16x16xf32>
    %747 = arith.addf %707, %746 : vector<16x16xf32>
    %c114 = arith.constant 114 : index
    %748 = memref.load %arg4[%c114] : memref<192xf32, #tpu.memory_space<smem>>
    %749 = vector.broadcast %748 : f32 to vector<16x16xf32>
    %750 = arith.mulf %749, %743 : vector<16x16xf32>
    %751 = arith.addf %711, %750 : vector<16x16xf32>
    %c178 = arith.constant 178 : index
    %752 = memref.load %arg4[%c178] : memref<192xf32, #tpu.memory_space<smem>>
    %753 = vector.broadcast %752 : f32 to vector<16x16xf32>
    %754 = arith.mulf %753, %743 : vector<16x16xf32>
    %755 = arith.addf %715, %754 : vector<16x16xf32>
    %c56 = arith.constant 56 : index
    %756 = memref.load %arg4[%c56] : memref<192xf32, #tpu.memory_space<smem>>
    %757 = vector.broadcast %756 : f32 to vector<16x16xf32>
    %758 = arith.mulf %757, %743 : vector<16x16xf32>
    %759 = arith.addf %653, %758 : vector<16x16xf32>
    %c120 = arith.constant 120 : index
    %760 = memref.load %arg4[%c120] : memref<192xf32, #tpu.memory_space<smem>>
    %761 = vector.broadcast %760 : f32 to vector<16x16xf32>
    %762 = arith.mulf %761, %743 : vector<16x16xf32>
    %763 = arith.addf %657, %762 : vector<16x16xf32>
    %c184 = arith.constant 184 : index
    %764 = memref.load %arg4[%c184] : memref<192xf32, #tpu.memory_space<smem>>
    %765 = vector.broadcast %764 : f32 to vector<16x16xf32>
    %766 = arith.mulf %765, %743 : vector<16x16xf32>
    %767 = arith.addf %661, %766 : vector<16x16xf32>
    %c3_123 = arith.constant 3 : index
    %c1_124 = arith.constant 1 : index
    %c1_125 = arith.constant 1 : index
    %768 = vector.load %arg7[%c3_123, %c1_124, %c1_125] : memref<4x24x18xf32, #tpu.memory_space<vmem>>, vector<1x16x16xf32>
    %769 = vector.shape_cast %768 : vector<1x16x16xf32> to vector<16x16xf32>
    %c51 = arith.constant 51 : index
    %770 = memref.load %arg4[%c51] : memref<192xf32, #tpu.memory_space<smem>>
    %771 = vector.broadcast %770 : f32 to vector<16x16xf32>
    %772 = arith.mulf %771, %769 : vector<16x16xf32>
    %773 = arith.addf %747, %772 : vector<16x16xf32>
    %c115 = arith.constant 115 : index
    %774 = memref.load %arg4[%c115] : memref<192xf32, #tpu.memory_space<smem>>
    %775 = vector.broadcast %774 : f32 to vector<16x16xf32>
    %776 = arith.mulf %775, %769 : vector<16x16xf32>
    %777 = arith.addf %751, %776 : vector<16x16xf32>
    %c179 = arith.constant 179 : index
    %778 = memref.load %arg4[%c179] : memref<192xf32, #tpu.memory_space<smem>>
    %779 = vector.broadcast %778 : f32 to vector<16x16xf32>
    %780 = arith.mulf %779, %769 : vector<16x16xf32>
    %781 = arith.addf %755, %780 : vector<16x16xf32>
    %c54 = arith.constant 54 : index
    %782 = memref.load %arg4[%c54] : memref<192xf32, #tpu.memory_space<smem>>
    %783 = vector.broadcast %782 : f32 to vector<16x16xf32>
    %784 = arith.mulf %783, %769 : vector<16x16xf32>
    %785 = arith.addf %733, %784 : vector<16x16xf32>
    %c118 = arith.constant 118 : index
    %786 = memref.load %arg4[%c118] : memref<192xf32, #tpu.memory_space<smem>>
    %787 = vector.broadcast %786 : f32 to vector<16x16xf32>
    %788 = arith.mulf %787, %769 : vector<16x16xf32>
    %789 = arith.addf %737, %788 : vector<16x16xf32>
    %c182 = arith.constant 182 : index
    %790 = memref.load %arg4[%c182] : memref<192xf32, #tpu.memory_space<smem>>
    %791 = vector.broadcast %790 : f32 to vector<16x16xf32>
    %792 = arith.mulf %791, %769 : vector<16x16xf32>
    %793 = arith.addf %741, %792 : vector<16x16xf32>
    %c57 = arith.constant 57 : index
    %794 = memref.load %arg4[%c57] : memref<192xf32, #tpu.memory_space<smem>>
    %795 = vector.broadcast %794 : f32 to vector<16x16xf32>
    %796 = arith.mulf %795, %769 : vector<16x16xf32>
    %797 = arith.addf %759, %796 : vector<16x16xf32>
    %c121 = arith.constant 121 : index
    %798 = memref.load %arg4[%c121] : memref<192xf32, #tpu.memory_space<smem>>
    %799 = vector.broadcast %798 : f32 to vector<16x16xf32>
    %800 = arith.mulf %799, %769 : vector<16x16xf32>
    %801 = arith.addf %763, %800 : vector<16x16xf32>
    %c185 = arith.constant 185 : index
    %802 = memref.load %arg4[%c185] : memref<192xf32, #tpu.memory_space<smem>>
    %803 = vector.broadcast %802 : f32 to vector<16x16xf32>
    %804 = arith.mulf %803, %769 : vector<16x16xf32>
    %805 = arith.addf %767, %804 : vector<16x16xf32>
    %c60 = arith.constant 60 : index
    %806 = memref.load %arg4[%c60] : memref<192xf32, #tpu.memory_space<smem>>
    %807 = vector.broadcast %806 : f32 to vector<16x16xf32>
    %808 = arith.mulf %807, %769 : vector<16x16xf32>
    %809 = arith.addf %679, %808 : vector<16x16xf32>
    %c124 = arith.constant 124 : index
    %810 = memref.load %arg4[%c124] : memref<192xf32, #tpu.memory_space<smem>>
    %811 = vector.broadcast %810 : f32 to vector<16x16xf32>
    %812 = arith.mulf %811, %769 : vector<16x16xf32>
    %813 = arith.addf %683, %812 : vector<16x16xf32>
    %c188 = arith.constant 188 : index
    %814 = memref.load %arg4[%c188] : memref<192xf32, #tpu.memory_space<smem>>
    %815 = vector.broadcast %814 : f32 to vector<16x16xf32>
    %816 = arith.mulf %815, %769 : vector<16x16xf32>
    %817 = arith.addf %687, %816 : vector<16x16xf32>
    %c3_126 = arith.constant 3 : index
    %c1_127 = arith.constant 1 : index
    %c2_128 = arith.constant 2 : index
    %818 = vector.load %arg7[%c3_126, %c1_127, %c2_128] : memref<4x24x18xf32, #tpu.memory_space<vmem>>, vector<1x16x16xf32>
    %819 = vector.shape_cast %818 : vector<1x16x16xf32> to vector<16x16xf32>
    %c55 = arith.constant 55 : index
    %820 = memref.load %arg4[%c55] : memref<192xf32, #tpu.memory_space<smem>>
    %821 = vector.broadcast %820 : f32 to vector<16x16xf32>
    %822 = arith.mulf %821, %819 : vector<16x16xf32>
    %823 = arith.addf %785, %822 : vector<16x16xf32>
    %c119 = arith.constant 119 : index
    %824 = memref.load %arg4[%c119] : memref<192xf32, #tpu.memory_space<smem>>
    %825 = vector.broadcast %824 : f32 to vector<16x16xf32>
    %826 = arith.mulf %825, %819 : vector<16x16xf32>
    %827 = arith.addf %789, %826 : vector<16x16xf32>
    %c183 = arith.constant 183 : index
    %828 = memref.load %arg4[%c183] : memref<192xf32, #tpu.memory_space<smem>>
    %829 = vector.broadcast %828 : f32 to vector<16x16xf32>
    %830 = arith.mulf %829, %819 : vector<16x16xf32>
    %831 = arith.addf %793, %830 : vector<16x16xf32>
    %c61 = arith.constant 61 : index
    %832 = memref.load %arg4[%c61] : memref<192xf32, #tpu.memory_space<smem>>
    %833 = vector.broadcast %832 : f32 to vector<16x16xf32>
    %834 = arith.mulf %833, %819 : vector<16x16xf32>
    %835 = arith.addf %809, %834 : vector<16x16xf32>
    %c125 = arith.constant 125 : index
    %836 = memref.load %arg4[%c125] : memref<192xf32, #tpu.memory_space<smem>>
    %837 = vector.broadcast %836 : f32 to vector<16x16xf32>
    %838 = arith.mulf %837, %819 : vector<16x16xf32>
    %839 = arith.addf %813, %838 : vector<16x16xf32>
    %c189 = arith.constant 189 : index
    %840 = memref.load %arg4[%c189] : memref<192xf32, #tpu.memory_space<smem>>
    %841 = vector.broadcast %840 : f32 to vector<16x16xf32>
    %842 = arith.mulf %841, %819 : vector<16x16xf32>
    %843 = arith.addf %817, %842 : vector<16x16xf32>
    %c3_129 = arith.constant 3 : index
    %c2_130 = arith.constant 2 : index
    %c0_131 = arith.constant 0 : index
    %844 = vector.load %arg7[%c3_129, %c2_130, %c0_131] : memref<4x24x18xf32, #tpu.memory_space<vmem>>, vector<1x16x16xf32>
    %845 = vector.shape_cast %844 : vector<1x16x16xf32> to vector<16x16xf32>
    %c58 = arith.constant 58 : index
    %846 = memref.load %arg4[%c58] : memref<192xf32, #tpu.memory_space<smem>>
    %847 = vector.broadcast %846 : f32 to vector<16x16xf32>
    %848 = arith.mulf %847, %845 : vector<16x16xf32>
    %849 = arith.addf %797, %848 : vector<16x16xf32>
    %c122 = arith.constant 122 : index
    %850 = memref.load %arg4[%c122] : memref<192xf32, #tpu.memory_space<smem>>
    %851 = vector.broadcast %850 : f32 to vector<16x16xf32>
    %852 = arith.mulf %851, %845 : vector<16x16xf32>
    %853 = arith.addf %801, %852 : vector<16x16xf32>
    %c186 = arith.constant 186 : index
    %854 = memref.load %arg4[%c186] : memref<192xf32, #tpu.memory_space<smem>>
    %855 = vector.broadcast %854 : f32 to vector<16x16xf32>
    %856 = arith.mulf %855, %845 : vector<16x16xf32>
    %857 = arith.addf %805, %856 : vector<16x16xf32>
    %c3_132 = arith.constant 3 : index
    %c2_133 = arith.constant 2 : index
    %c1_134 = arith.constant 1 : index
    %858 = vector.load %arg7[%c3_132, %c2_133, %c1_134] : memref<4x24x18xf32, #tpu.memory_space<vmem>>, vector<1x16x16xf32>
    %859 = vector.shape_cast %858 : vector<1x16x16xf32> to vector<16x16xf32>
    %c59 = arith.constant 59 : index
    %860 = memref.load %arg4[%c59] : memref<192xf32, #tpu.memory_space<smem>>
    %861 = vector.broadcast %860 : f32 to vector<16x16xf32>
    %862 = arith.mulf %861, %859 : vector<16x16xf32>
    %863 = arith.addf %849, %862 : vector<16x16xf32>
    %c123 = arith.constant 123 : index
    %864 = memref.load %arg4[%c123] : memref<192xf32, #tpu.memory_space<smem>>
    %865 = vector.broadcast %864 : f32 to vector<16x16xf32>
    %866 = arith.mulf %865, %859 : vector<16x16xf32>
    %867 = arith.addf %853, %866 : vector<16x16xf32>
    %c187 = arith.constant 187 : index
    %868 = memref.load %arg4[%c187] : memref<192xf32, #tpu.memory_space<smem>>
    %869 = vector.broadcast %868 : f32 to vector<16x16xf32>
    %870 = arith.mulf %869, %859 : vector<16x16xf32>
    %871 = arith.addf %857, %870 : vector<16x16xf32>
    %c62 = arith.constant 62 : index
    %872 = memref.load %arg4[%c62] : memref<192xf32, #tpu.memory_space<smem>>
    %873 = vector.broadcast %872 : f32 to vector<16x16xf32>
    %874 = arith.mulf %873, %859 : vector<16x16xf32>
    %875 = arith.addf %835, %874 : vector<16x16xf32>
    %c126 = arith.constant 126 : index
    %876 = memref.load %arg4[%c126] : memref<192xf32, #tpu.memory_space<smem>>
    %877 = vector.broadcast %876 : f32 to vector<16x16xf32>
    %878 = arith.mulf %877, %859 : vector<16x16xf32>
    %879 = arith.addf %839, %878 : vector<16x16xf32>
    %c190 = arith.constant 190 : index
    %880 = memref.load %arg4[%c190] : memref<192xf32, #tpu.memory_space<smem>>
    %881 = vector.broadcast %880 : f32 to vector<16x16xf32>
    %882 = arith.mulf %881, %859 : vector<16x16xf32>
    %883 = arith.addf %843, %882 : vector<16x16xf32>
    %c3_135 = arith.constant 3 : index
    %c2_136 = arith.constant 2 : index
    %c2_137 = arith.constant 2 : index
    %884 = vector.load %arg7[%c3_135, %c2_136, %c2_137] : memref<4x24x18xf32, #tpu.memory_space<vmem>>, vector<1x16x16xf32>
    %885 = vector.shape_cast %884 : vector<1x16x16xf32> to vector<16x16xf32>
    %c63 = arith.constant 63 : index
    %886 = memref.load %arg4[%c63] : memref<192xf32, #tpu.memory_space<smem>>
    %887 = vector.broadcast %886 : f32 to vector<16x16xf32>
    %888 = arith.mulf %887, %885 : vector<16x16xf32>
    %889 = arith.addf %875, %888 : vector<16x16xf32>
    %c127 = arith.constant 127 : index
    %890 = memref.load %arg4[%c127] : memref<192xf32, #tpu.memory_space<smem>>
    %891 = vector.broadcast %890 : f32 to vector<16x16xf32>
    %892 = arith.mulf %891, %885 : vector<16x16xf32>
    %893 = arith.addf %879, %892 : vector<16x16xf32>
    %c191 = arith.constant 191 : index
    %894 = memref.load %arg4[%c191] : memref<192xf32, #tpu.memory_space<smem>>
    %895 = vector.broadcast %894 : f32 to vector<16x16xf32>
    %896 = arith.mulf %895, %885 : vector<16x16xf32>
    %897 = arith.addf %883, %896 : vector<16x16xf32>
    %cst = arith.constant dense<0.000000e+00> : vector<16x32xf32>
    %898 = tpu.matmul %773, %12, %cst {dimension_numbers = #tpu.dot_dimension_numbers<[1], [0], [0], [1], [0, 0, 1, 1], [], []>} : vector<16x16xf32>, vector<16x32xf32>, vector<16x32xf32> -> vector<16x32xf32>
    %cst_138 = arith.constant dense<0.000000e+00> : vector<16x32xf32>
    %899 = tpu.matmul %823, %19, %cst_138 {dimension_numbers = #tpu.dot_dimension_numbers<[1], [0], [0], [1], [0, 0, 1, 1], [], []>} : vector<16x16xf32>, vector<16x32xf32>, vector<16x32xf32> -> vector<16x32xf32>
    %900 = arith.addf %898, %899 : vector<16x32xf32>
    %cst_139 = arith.constant dense<0.000000e+00> : vector<16x32xf32>
    %901 = tpu.matmul %863, %12, %cst_139 {dimension_numbers = #tpu.dot_dimension_numbers<[1], [0], [0], [1], [0, 0, 1, 1], [], []>} : vector<16x16xf32>, vector<16x32xf32>, vector<16x32xf32> -> vector<16x32xf32>
    %cst_140 = arith.constant dense<0.000000e+00> : vector<16x32xf32>
    %902 = tpu.matmul %889, %19, %cst_140 {dimension_numbers = #tpu.dot_dimension_numbers<[1], [0], [0], [1], [0, 0, 1, 1], [], []>} : vector<16x16xf32>, vector<16x32xf32>, vector<16x32xf32> -> vector<16x32xf32>
    %903 = arith.addf %901, %902 : vector<16x32xf32>
    %cst_141 = arith.constant dense<0.000000e+00> : vector<32x32xf32>
    %904 = tpu.matmul %26, %900, %cst_141 {dimension_numbers = #tpu.dot_dimension_numbers<[1], [0], [0], [1], [0, 0, 1, 1], [], []>} : vector<32x16xf32>, vector<16x32xf32>, vector<32x32xf32> -> vector<32x32xf32>
    %cst_142 = arith.constant dense<0.000000e+00> : vector<32x32xf32>
    %905 = tpu.matmul %33, %903, %cst_142 {dimension_numbers = #tpu.dot_dimension_numbers<[1], [0], [0], [1], [0, 0, 1, 1], [], []>} : vector<32x16xf32>, vector<16x32xf32>, vector<32x32xf32> -> vector<32x32xf32>
    %906 = arith.addf %904, %905 : vector<32x32xf32>
    %c0_143 = arith.constant 0 : index
    %c0_144 = arith.constant 0 : index
    %c0_145 = arith.constant 0 : index
    %c0_146 = arith.constant 0 : index
    %907 = vector.load %arg6[%c0_143, %c0_144, %c0_145, %c0_146] : memref<1x3x32x32xf32, #tpu.memory_space<vmem>>, vector<1x1x32x32xf32>
    %908 = vector.shape_cast %907 : vector<1x1x32x32xf32> to vector<32x32xf32>
    %909 = vector.shape_cast %906 : vector<32x32xf32> to vector<1x1x32x32xf32>
    tpu.vector_store %arg6[%c0_143, %c0_144, %c0_145, %c0_146], %909 {strides = array<i32>} : memref<1x3x32x32xf32, #tpu.memory_space<vmem>>, vector<1x1x32x32xf32>,
    %cst_147 = arith.constant dense<0.000000e+00> : vector<16x32xf32>
    %910 = tpu.matmul %777, %12, %cst_147 {dimension_numbers = #tpu.dot_dimension_numbers<[1], [0], [0], [1], [0, 0, 1, 1], [], []>} : vector<16x16xf32>, vector<16x32xf32>, vector<16x32xf32> -> vector<16x32xf32>
    %cst_148 = arith.constant dense<0.000000e+00> : vector<16x32xf32>
    %911 = tpu.matmul %827, %19, %cst_148 {dimension_numbers = #tpu.dot_dimension_numbers<[1], [0], [0], [1], [0, 0, 1, 1], [], []>} : vector<16x16xf32>, vector<16x32xf32>, vector<16x32xf32> -> vector<16x32xf32>
    %912 = arith.addf %910, %911 : vector<16x32xf32>
    %cst_149 = arith.constant dense<0.000000e+00> : vector<16x32xf32>
    %913 = tpu.matmul %867, %12, %cst_149 {dimension_numbers = #tpu.dot_dimension_numbers<[1], [0], [0], [1], [0, 0, 1, 1], [], []>} : vector<16x16xf32>, vector<16x32xf32>, vector<16x32xf32> -> vector<16x32xf32>
    %cst_150 = arith.constant dense<0.000000e+00> : vector<16x32xf32>
    %914 = tpu.matmul %893, %19, %cst_150 {dimension_numbers = #tpu.dot_dimension_numbers<[1], [0], [0], [1], [0, 0, 1, 1], [], []>} : vector<16x16xf32>, vector<16x32xf32>, vector<16x32xf32> -> vector<16x32xf32>
    %915 = arith.addf %913, %914 : vector<16x32xf32>
    %cst_151 = arith.constant dense<0.000000e+00> : vector<32x32xf32>
    %916 = tpu.matmul %26, %912, %cst_151 {dimension_numbers = #tpu.dot_dimension_numbers<[1], [0], [0], [1], [0, 0, 1, 1], [], []>} : vector<32x16xf32>, vector<16x32xf32>, vector<32x32xf32> -> vector<32x32xf32>
    %cst_152 = arith.constant dense<0.000000e+00> : vector<32x32xf32>
    %917 = tpu.matmul %33, %915, %cst_152 {dimension_numbers = #tpu.dot_dimension_numbers<[1], [0], [0], [1], [0, 0, 1, 1], [], []>} : vector<32x16xf32>, vector<16x32xf32>, vector<32x32xf32> -> vector<32x32xf32>
    %918 = arith.addf %916, %917 : vector<32x32xf32>
    %c0_153 = arith.constant 0 : index
    %c1_154 = arith.constant 1 : index
    %c0_155 = arith.constant 0 : index
    %c0_156 = arith.constant 0 : index
    %919 = vector.load %arg6[%c0_153, %c1_154, %c0_155, %c0_156] : memref<1x3x32x32xf32, #tpu.memory_space<vmem>>, vector<1x1x32x32xf32>
    %920 = vector.shape_cast %919 : vector<1x1x32x32xf32> to vector<32x32xf32>
    %921 = vector.shape_cast %918 : vector<32x32xf32> to vector<1x1x32x32xf32>
    tpu.vector_store %arg6[%c0_153, %c1_154, %c0_155, %c0_156], %921 {strides = array<i32>} : memref<1x3x32x32xf32, #tpu.memory_space<vmem>>, vector<1x1x32x32xf32>,
    %cst_157 = arith.constant dense<0.000000e+00> : vector<16x32xf32>
    %922 = tpu.matmul %781, %12, %cst_157 {dimension_numbers = #tpu.dot_dimension_numbers<[1], [0], [0], [1], [0, 0, 1, 1], [], []>} : vector<16x16xf32>, vector<16x32xf32>, vector<16x32xf32> -> vector<16x32xf32>
    %cst_158 = arith.constant dense<0.000000e+00> : vector<16x32xf32>
    %923 = tpu.matmul %831, %19, %cst_158 {dimension_numbers = #tpu.dot_dimension_numbers<[1], [0], [0], [1], [0, 0, 1, 1], [], []>} : vector<16x16xf32>, vector<16x32xf32>, vector<16x32xf32> -> vector<16x32xf32>
    %924 = arith.addf %922, %923 : vector<16x32xf32>
    %cst_159 = arith.constant dense<0.000000e+00> : vector<16x32xf32>
    %925 = tpu.matmul %871, %12, %cst_159 {dimension_numbers = #tpu.dot_dimension_numbers<[1], [0], [0], [1], [0, 0, 1, 1], [], []>} : vector<16x16xf32>, vector<16x32xf32>, vector<16x32xf32> -> vector<16x32xf32>
    %cst_160 = arith.constant dense<0.000000e+00> : vector<16x32xf32>
    %926 = tpu.matmul %897, %19, %cst_160 {dimension_numbers = #tpu.dot_dimension_numbers<[1], [0], [0], [1], [0, 0, 1, 1], [], []>} : vector<16x16xf32>, vector<16x32xf32>, vector<16x32xf32> -> vector<16x32xf32>
    %927 = arith.addf %925, %926 : vector<16x32xf32>
    %cst_161 = arith.constant dense<0.000000e+00> : vector<32x32xf32>
    %928 = tpu.matmul %26, %924, %cst_161 {dimension_numbers = #tpu.dot_dimension_numbers<[1], [0], [0], [1], [0, 0, 1, 1], [], []>} : vector<32x16xf32>, vector<16x32xf32>, vector<32x32xf32> -> vector<32x32xf32>
    %cst_162 = arith.constant dense<0.000000e+00> : vector<32x32xf32>
    %929 = tpu.matmul %33, %927, %cst_162 {dimension_numbers = #tpu.dot_dimension_numbers<[1], [0], [0], [1], [0, 0, 1, 1], [], []>} : vector<32x16xf32>, vector<16x32xf32>, vector<32x32xf32> -> vector<32x32xf32>
    %930 = arith.addf %928, %929 : vector<32x32xf32>
    %c0_163 = arith.constant 0 : index
    %c2_164 = arith.constant 2 : index
    %c0_165 = arith.constant 0 : index
    %c0_166 = arith.constant 0 : index
    %931 = vector.load %arg6[%c0_163, %c2_164, %c0_165, %c0_166] : memref<1x3x32x32xf32, #tpu.memory_space<vmem>>, vector<1x1x32x32xf32>
    %932 = vector.shape_cast %931 : vector<1x1x32x32xf32> to vector<32x32xf32>
    %933 = vector.shape_cast %930 : vector<32x32xf32> to vector<1x1x32x32xf32>
    tpu.vector_store %arg6[%c0_163, %c2_164, %c0_165, %c0_166], %933 {strides = array<i32>} : memref<1x3x32x32xf32, #tpu.memory_space<vmem>>, vector<1x1x32x32xf32>,
    return
  }
  func.func @transform_0(%arg0: i32, %arg1: i32) -> (i32, i32, i32, i32) {
    %c0_i32 = arith.constant 0 : i32
    %c0_i32_0 = arith.constant 0 : i32
    %c0_i32_1 = arith.constant 0 : i32
    return %arg0, %c0_i32, %arg1, %c0_i32_0 : i32, i32, i32, i32
  }
  func.func @transform_1(%arg0: i32, %arg1: i32) -> (i32, i32, i32, i32) {
    %c1_i32 = arith.constant 1 : i32
    %0 = arith.addi %arg1, %c1_i32 : i32
    %c2_i32 = arith.constant 2 : i32
    %1 = arith.muli %0, %c2_i32 : i32
    %c0_i32 = arith.constant 0 : i32
    %c0_i32_0 = arith.constant 0 : i32
    %c0_i32_1 = arith.constant 0 : i32
    return %arg0, %c0_i32, %1, %c0_i32_0 : i32, i32, i32, i32
  }
  func.func @transform_2(%arg0: i32, %arg1: i32) -> i32 {
    %c0_i32 = arith.constant 0 : i32
    %c0_i32_0 = arith.constant 0 : i32
    return %c0_i32 : i32
  }
  func.func @transform_3(%arg0: i32, %arg1: i32) -> i32 {
    %c0_i32 = arith.constant 0 : i32
    %c0_i32_0 = arith.constant 0 : i32
    return %c0_i32 : i32
  }
  func.func @transform_4(%arg0: i32, %arg1: i32) -> (i32, i32, i32, i32) {
    %c0_i32 = arith.constant 0 : i32
    %c0_i32_0 = arith.constant 0 : i32
    %c0_i32_1 = arith.constant 0 : i32
    return %arg0, %c0_i32, %arg1, %c0_i32_0 : i32, i32, i32, i32
  }
}

</mosaic_0001>

<llo_original>
// kernel: final_layer_forward.1
$region0: #{final_layer_forward.1}
  #allocation0 [shape = 'u32[]', space=smem, size = 0x4, offset = 0x4, fixed_abs, tag = 'smem constant byte address 0x4 - core index']
  #allocation1 [shape = 'u32[144,128]{1,0:T(1,128)}', space=vmem, size = 0x12000, scoped, tag = 'internal scratch']
  #allocation2 [shape = 'f32[4,24,18]{2,1,0:T(8,128)}', space=vmem, size = 0xc000, scoped, tag = 'scratch operand']
  %s0 = inlined_call_operand.vmem [shape: f32[2,4,24,18], index: 0, kind: input, shape index: {}, may-alias: {0,1}]
  %s1 = inlined_call_operand.vmem [shape: f32[2,4,24,18], index: 1, kind: input, shape index: {}, may-alias: {0,1}]
  %s2 = inlined_call_operand.vmem [shape: f32[192], index: 2, kind: input, shape index: {}]
  %s3 = inlined_call_operand.vmem [shape: f32[3], index: 3, kind: input, shape index: {}]
  %s4 = inlined_call_operand.hbm [shape: f32[2,3,32,32], index: 4, kind: output, shape index: {}]
  %s5 = sld [smem:[#allocation0]]
  $region147: #{final_layer_forward.1} parent=0
    _
  %s7 = ssub.s32 1, %s5
  %s8 = scalar_select 0, %s7, %s5
  $region1: #{final_layer_forward.1} parent=0
    #allocation3 [shape = 'u8[65536]{0}', space=vmem, size = 0x10000, scoped, tag = 'input window, operand 0']
    #allocation4 [shape = 'u8[32768]{0}', space=vmem, size = 0x8000, scoped, tag = 'input window, operand 1']
    #allocation5 [shape = 'u8[1024]{0}', space=smem, size = 0x400, scoped, tag = 'input window, operand 2, single buffered']
    #allocation6 [shape = 's32[2]{0}', space=sflag, size = 0x8, scoped, tag = 'scoped memory for final_layer_forward.1']
    #allocation7 [shape = 's32[2]{0}', space=sflag, size = 0x8, scoped, tag = 'scoped memory for final_layer_forward.1']
    #allocation8 [shape = 'u8[512]{0}', space=smem, size = 0x200, scoped, tag = 'input window, operand 3, single buffered']
    #allocation9 [shape = 's32[1]{0}', space=sflag, size = 0x4, scoped, tag = 'scoped memory for final_layer_forward.1']
    #allocation10 [shape = 'u8[98304]{0}', space=vmem, size = 0x18000, scoped, tag = 'output window, operand 0']
    %9 = vsyncpa [#allocation7], 0
    %10 = vsyncpa [#allocation9], 0
    %11 = vsyncpa [#allocation6], 0
    %s12 = scalar_lea.sflag [#allocation6], 1
    %13 = vsyncpa %s12, 0
    loop: start=0, step=1, limit=4
    $region2: #{final_layer_forward.1} parent=1 // loop_pre_header
      _
    $region3: #{final_layer_forward.1} parent=1 // loop_header
      %s15 = sphi 0, %s19
      %p16 = scmp.ge.s32.totalorder %s15, 4
      %s22 = sphi 0, %s34
      %s23 = sphi 0, %s30
      %s24 = sphi 0, %s22
      %s25 = sphi 0, %s23
      %s26 = sphi 0, %s24
      %s27 = sphi 0, %s25
      %s39 = sphi 0, %s41
      %s42 = sphi 0, %s39
      %s43 = sphi 0, %s42
      %s59 = sphi 0, %s43
      %s71 = sphi 0, %s73
      %s74 = sphi 0, %s71
      %s75 = sphi 0, %s74
      %s91 = sphi 0, %s75
      %s95 = sphi 0, %s95
      %s97 = sphi 0, %s95
      %s98 = sphi 0, %s97
      %s112 = sphi 0, %s98
      %s116 = sphi 0, %s116
      %s118 = sphi 0, %s116
      %s119 = sphi 0, %s118
      %s133 = sphi 0, %s119
      %s141 = sphi 0, %s143
      %s144 = sphi 0, %s141
      %s145 = sphi 0, %s144
      %s161 = sphi 0, %s145
    $region4: #{final_layer_forward.1} parent=1 // loop_header_branch
      %18 = sbr.rel (%p16) target = $region8
    $region5: #{final_layer_forward.1} parent=1 // loop_body
      %s20 = ssub.s32 %s15, 1
      %s21 = ssub.s32 %s15, 2
      %s28 = sadd.s32 1, %s23
      %p29 = scmp.ge.s32.totalorder %s28, 1
      %s30 = scalar_select %p29, 0, %s28
      %s31 = sadd.s32 1, %s22
      %s32 = scalar_select %p29, %s31, %s22
      %p33 = scmp.ge.s32.totalorder %s32, 2
      %s34 = scalar_select %p33, 0, %s32
      %s35 = ssub.s32 %s22, %s34
      %s36 = ssub.s32 %s23, %s30
      %s37 = sor.u32 %s35, %s36
      %p38 = scmp.eq.s32.totalorder %s37, 0
      %s40 = sadd.s32 %s39, 1
      %s41 = scalar_select %p38, %s39, %s40
      %p44 = pneg %p38
      %p45 = scmp.eq.s32.totalorder %s15, 1
      %p46 = por %p44, %p45
      %p47 = scmp.ne.s32.totalorder %s39, %s42
      %p48 = scmp.eq.s32.totalorder %s15, 0
      %p49 = por %p47, %p48
      %p50 = scmp.ne.s32.totalorder %s39, %s42
      %p51 = scmp.eq.s32.totalorder %s20, 1
      %p52 = por %p50, %p51
      %p53 = scmp.ne.s32.totalorder %s42, %s43
      %p54 = scmp.eq.s32.totalorder %s20, 0
      %p55 = por %p53, %p54
      %p56 = scmp.ne.s32.totalorder %s42, %s43
      %p57 = scmp.eq.s32.totalorder %s21, 1
      %p58 = por %p56, %p57
      %p60 = scmp.ne.s32.totalorder %s43, %s59
      %p61 = scmp.eq.s32.totalorder %s21, 0
      %p62 = por %p60, %p61
      %s63 = sadd.s32 %s23, 1
      %s64 = smul.u32 %s63, 2
      %s65 = sadd.s32 %s30, 1
      %s66 = smul.u32 %s65, 2
      %s67 = ssub.s32 %s22, %s34
      %s68 = ssub.s32 %s64, %s66
      %s69 = sor.u32 %s67, %s68
      %p70 = scmp.eq.s32.totalorder %s69, 0
      %s72 = sadd.s32 %s71, 1
      %s73 = scalar_select %p70, %s71, %s72
      %p76 = pneg %p70
      %p77 = scmp.eq.s32.totalorder %s15, 1
      %p78 = por %p76, %p77
      %p79 = scmp.ne.s32.totalorder %s71, %s74
      %p80 = scmp.eq.s32.totalorder %s15, 0
      %p81 = por %p79, %p80
      %p82 = scmp.ne.s32.totalorder %s71, %s74
      %p83 = scmp.eq.s32.totalorder %s20, 1
      %p84 = por %p82, %p83
      %p85 = scmp.ne.s32.totalorder %s74, %s75
      %p86 = scmp.eq.s32.totalorder %s20, 0
      %p87 = por %p85, %p86
      %p88 = scmp.ne.s32.totalorder %s74, %s75
      %p89 = scmp.eq.s32.totalorder %s21, 1
      %p90 = por %p88, %p89
      %p92 = scmp.ne.s32.totalorder %s75, %s91
      %p93 = scmp.eq.s32.totalorder %s21, 0
      %p94 = por %p92, %p93
      %s96 = sadd.s32 %s95, 1
      %p99 = scmp.eq.s32.totalorder %s15, 1
      %p100 = scmp.ne.s32.totalorder %s95, %s97
      %p101 = scmp.eq.s32.totalorder %s15, 0
      %p102 = por %p100, %p101
      %p103 = scmp.ne.s32.totalorder %s95, %s97
      %p104 = scmp.eq.s32.totalorder %s20, 1
      %p105 = por %p103, %p104
      %p106 = scmp.ne.s32.totalorder %s97, %s98
      %p107 = scmp.eq.s32.totalorder %s20, 0
      %p108 = por %p106, %p107
      %p109 = scmp.ne.s32.totalorder %s97, %s98
      %p110 = scmp.eq.s32.totalorder %s21, 1
      %p111 = por %p109, %p110
      %p113 = scmp.ne.s32.totalorder %s98, %s112
      %p114 = scmp.eq.s32.totalorder %s21, 0
      %p115 = por %p113, %p114
      %s117 = sadd.s32 %s116, 1
      %p120 = scmp.eq.s32.totalorder %s15, 1
      %p121 = scmp.ne.s32.totalorder %s116, %s118
      %p122 = scmp.eq.s32.totalorder %s15, 0
      %p123 = por %p121, %p122
      %p124 = scmp.ne.s32.totalorder %s116, %s118
      %p125 = scmp.eq.s32.totalorder %s20, 1
      %p126 = por %p124, %p125
      %p127 = scmp.ne.s32.totalorder %s118, %s119
      %p128 = scmp.eq.s32.totalorder %s20, 0
      %p129 = por %p127, %p128
      %p130 = scmp.ne.s32.totalorder %s118, %s119
      %p131 = scmp.eq.s32.totalorder %s21, 1
      %p132 = por %p130, %p131
      %p134 = scmp.ne.s32.totalorder %s119, %s133
      %p135 = scmp.eq.s32.totalorder %s21, 0
      %p136 = por %p134, %p135
      %s137 = ssub.s32 %s22, %s34
      %s138 = ssub.s32 %s23, %s30
      %s139 = sor.u32 %s137, %s138
      %p140 = scmp.eq.s32.totalorder %s139, 0
      %s142 = sadd.s32 %s141, 1
      %s143 = scalar_select %p140, %s141, %s142
      %p146 = pneg %p140
      %p147 = scmp.eq.s32.totalorder %s15, 1
      %p148 = por %p146, %p147
      %p149 = scmp.ne.s32.totalorder %s141, %s144
      %p150 = scmp.eq.s32.totalorder %s15, 0
      %p151 = por %p149, %p150
      %p152 = scmp.ne.s32.totalorder %s141, %s144
      %p153 = scmp.eq.s32.totalorder %s20, 1
      %p154 = por %p152, %p153
      %p155 = scmp.ne.s32.totalorder %s144, %s145
      %p156 = scmp.eq.s32.totalorder %s20, 0
      %p157 = por %p155, %p156
      %p158 = scmp.ne.s32.totalorder %s144, %s145
      %p159 = scmp.eq.s32.totalorder %s21, 1
      %p160 = por %p158, %p159
      %p162 = scmp.ne.s32.totalorder %s145, %s161
      %p163 = scmp.eq.s32.totalorder %s21, 0
      %p164 = por %p162, %p163
      %p165 = scmp.le.s32.totalorder 1, %s15
      %p166 = scmp.lt.s32.totalorder %s15, 3
      %p167 = pnand %p165, %p166
      %p168 = pneg %p167
      // Predicated region
      $region9: #{final_layer_forward.1} parent=5 // pred_check
        _
      $region10: #{final_layer_forward.1} parent=5 // pred_check_branch
        %170 = sbr.rel (%p167) target = $region12
      $region11: #{final_layer_forward.1} parent=5 // pred_region
        %s171 = ssub.s32 %s15, 1
        // Predicated region
        $region13: #{final_layer_forward.1} parent=11 // pred_check
          %p172 = pneg %p108
        $region14: #{final_layer_forward.1} parent=11 // pred_check_branch
          %174 = sbr.rel (%p172) target = $region16
        $region15: #{final_layer_forward.1} parent=11 // pred_region
          %s176 = ssub.s32 32, 32
          %177 = vsyncadd [#allocation7], %s176
          %s179 = sshll.u32 %s2, 4
          %s180 = int_to_ptr.vmem [resolvable:$true] %s179
          %182 = dma.vmem_to_smem %s180, 32, [#allocation5], [#allocation7]
        $region16: #{final_layer_forward.1} parent=11 // pred_fallthru
          _
        // Predicated region
        $region17: #{final_layer_forward.1} parent=11 // pred_check
          %p183 = pneg %p129
        $region18: #{final_layer_forward.1} parent=11 // pred_check_branch
          %185 = sbr.rel (%p183) target = $region20
        $region19: #{final_layer_forward.1} parent=11 // pred_region
          %s187 = ssub.s32 16, 16
          %188 = vsyncadd [#allocation9], %s187
          %s190 = sshll.u32 %s3, 4
          %s191 = int_to_ptr.vmem [resolvable:$true] %s190
          %193 = dma.vmem_to_smem %s191, 16, [#allocation8], [#allocation9]
        $region20: #{final_layer_forward.1} parent=11 // pred_fallthru
          _
      $region12: #{final_layer_forward.1} parent=5 // pred_fallthru
        _
      %p194 = scmp.lt.s32.totalorder %s15, 2
      // Predicated region
      $region21: #{final_layer_forward.1} parent=5 // pred_check
        %p195 = pneg %p194
      $region22: #{final_layer_forward.1} parent=5 // pred_check_branch
        %197 = sbr.rel (%p195) target = $region24
      $region23: #{final_layer_forward.1} parent=5 // pred_region
        // Predicated region
        $region25: #{final_layer_forward.1} parent=23 // pred_check
          %p198 = pneg %p49
        $region26: #{final_layer_forward.1} parent=23 // pred_check_branch
          %200 = sbr.rel (%p198) target = $region28
        $region27: #{final_layer_forward.1} parent=23 // pred_region
          %s201 = sand.u32 %s39, 1
          %s202 = sand.u32 %s39, 1
          %s203 = smul.addr %s202, 64
          %s204 = scalar_lea.vmem [#allocation3], %s203
          %s205 = smul.u32 2, %s23
          %s206 = ssub.s32 3, %s205
          %p207 = scmp.lt.s32.totalorder %s206, 2
          %s208 = scalar_select %p207, %s206, 2
          %s209 = smul.u32 512, %s208
          %p210 = scmp.ne.s32.totalorder 0, %s209
          %s211 = smul.addr %s22, 12
          %s212 = sadd.s32 %s205, %s211
          %s213 = smul.addr %s212, 8
          %s214 = scalar_lea.vmem %s0, %s213
          // Predicated region
          $region29: #{final_layer_forward.1} parent=27 // pred_check
            %p215 = pneg %p210
          $region30: #{final_layer_forward.1} parent=27 // pred_check_branch
            %217 = sbr.rel (%p215) target = $region32
          $region31: #{final_layer_forward.1} parent=27 // pred_region
            // Predicated region
            $region33: #{final_layer_forward.1} parent=31 // pred_check
              _
            $region34: #{final_layer_forward.1} parent=31 // pred_check_branch
              %219 = sbr.rel (0) target = $region36
            $region35: #{final_layer_forward.1} parent=31 // pred_region
              // Predicated region
              $region55: #{final_layer_forward.1} parent=35 // pred_check
                _
              $region56: #{final_layer_forward.1} parent=35 // pred_check_branch
                %288 = sbr.rel (0) target = $region58
              $region57: #{final_layer_forward.1} parent=35 // pred_region
                %s289 = sshrl.u32 %s208, 1
                // While loop
                $region59: #{final_layer_forward.1} parent=57 // loop_pre_header
                  _
                $region60: #{final_layer_forward.1} parent=57 // loop_header
                  %s291 = sphi 0, %s293
                  %p292 = scmp.ge.s32.totalorder %s291, %s289
                  %s296 = sphi 0, %s317
                  %s297 = sphi %s214, %s320
                  %s298 = sphi %s204, %s321
                $region61: #{final_layer_forward.1} parent=57 // loop_header_branch
                  %295 = sbr.rel (%p292) target = $region65
                $region62: #{final_layer_forward.1} parent=57 // loop_body
                  %v299 = vld [vmem:[%s297] sm:$0xff]
                  %300 = vst [vmem:[%s298] sm:$0xff] %v299
                  %v301 = vld [vmem:[%s297 + $0x8] sm:$0xff]
                  %302 = vst [vmem:[%s298 + $0x8] sm:$0xff] %v301
                  %v303 = vld [vmem:[%s297 + $0x18] sm:$0xff]
                  %304 = vst [vmem:[%s298 + $0x10] sm:$0xff] %v303
                  %v305 = vld [vmem:[%s297 + $0x20] sm:$0xff]
                  %306 = vst [vmem:[%s298 + $0x18] sm:$0xff] %v305
                  %v307 = vld [vmem:[%s297 + $0x30] sm:$0xff]
                  %308 = vst [vmem:[%s298 + $0x20] sm:$0xff] %v307
                  %v309 = vld [vmem:[%s297 + $0x38] sm:$0xff]
                  %310 = vst [vmem:[%s298 + $0x28] sm:$0xff] %v309
                  %v311 = vld [vmem:[%s297 + $0x48] sm:$0xff]
                  %312 = vst [vmem:[%s298 + $0x30] sm:$0xff] %v311
                  %v313 = vld [vmem:[%s297 + $0x50] sm:$0xff]
                  %314 = vst [vmem:[%s298 + $0x38] sm:$0xff] %v313
                  %s315 = sadd.s32 1, %s296
                  %p316 = scmp.ge.s32.totalorder %s315, %s289
                  %s317 = scalar_select %p316, 0, %s315
                  %s318 = smul.u32 %s317, 16
                  %s319 = smul.u32 %s317, 16
                  %s320 = scalar_lea.vmem %s214, %s318
                  %s321 = scalar_lea.vmem %s204, %s319 [#allocation3]
                $region63: #{final_layer_forward.1} parent=57 // loop_footer
                  %s293 = sadd.s32 %s291, 1
                $region64: #{final_layer_forward.1} parent=57 // loop_footer_branch
                  %290 = sbr.rel target = $region60
                $region65: #{final_layer_forward.1} parent=57 // loop_exit
                  _
                %s322 = sshrl.u32 %s208, 1
                %s323 = sand.u32 %s208, 1
                %s324 = smul.u32 %s322, 2
                %s325 = smul.u32 8, %s324
                %s326 = scalar_lea.vmem %s214, %s325
                %s327 = smul.u32 8, %s324
                %s328 = scalar_lea.vmem %s204, %s327 [#allocation3]
                // While loop
                $region66: #{final_layer_forward.1} parent=57 // loop_pre_header
                  _
                $region67: #{final_layer_forward.1} parent=57 // loop_header
                  %s330 = sphi 0, %s332
                  %p331 = scmp.ge.s32.totalorder %s330, %s323
                  %s335 = sphi 0, %s348
                  %s336 = sphi %s326, %s351
                  %s337 = sphi %s328, %s352
                $region68: #{final_layer_forward.1} parent=57 // loop_header_branch
                  %334 = sbr.rel (%p331) target = $region72
                $region69: #{final_layer_forward.1} parent=57 // loop_body
                  %v338 = vld [vmem:[%s336] sm:$0xff]
                  %339 = vst [vmem:[%s337] sm:$0xff] %v338
                  %v340 = vld [vmem:[%s336 + $0x18] sm:$0xff]
                  %341 = vst [vmem:[%s337 + $0x10] sm:$0xff] %v340
                  %v342 = vld [vmem:[%s336 + $0x30] sm:$0xff]
                  %343 = vst [vmem:[%s337 + $0x20] sm:$0xff] %v342
                  %v344 = vld [vmem:[%s336 + $0x48] sm:$0xff]
                  %345 = vst [vmem:[%s337 + $0x30] sm:$0xff] %v344
                  %s346 = sadd.s32 1, %s335
                  %p347 = scmp.ge.s32.totalorder %s346, %s323
                  %s348 = scalar_select %p347, 0, %s346
                  %s349 = smul.u32 %s348, 8
                  %s350 = smul.u32 %s348, 8
                  %s351 = scalar_lea.vmem %s326, %s349
                  %s352 = scalar_lea.vmem %s328, %s350 [#allocation3]
                $region70: #{final_layer_forward.1} parent=57 // loop_footer
                  %s332 = sadd.s32 %s330, 1
                $region71: #{final_layer_forward.1} parent=57 // loop_footer_branch
                  %329 = sbr.rel target = $region67
                $region72: #{final_layer_forward.1} parent=57 // loop_exit
                  _
              $region58: #{final_layer_forward.1} parent=35 // pred_fallthru
                _
              // Predicated region
              $region73: #{final_layer_forward.1} parent=35 // pred_check
                _
              $region74: #{final_layer_forward.1} parent=35 // pred_check_branch
                %354 = sbr.rel target = $region76
              $region75: #{final_layer_forward.1} parent=35 // pred_region
                _
              $region76: #{final_layer_forward.1} parent=35 // pred_fallthru
                _
            $region36: #{final_layer_forward.1} parent=31 // pred_fallthru
              _
            // Predicated region
            $region37: #{final_layer_forward.1} parent=31 // pred_check
              _
            $region38: #{final_layer_forward.1} parent=31 // pred_check_branch
              %221 = sbr.rel target = $region40
            $region39: #{final_layer_forward.1} parent=31 // pred_region
              %s223 = sshrl.u32 %s208, 1
              // While loop
              $region41: #{final_layer_forward.1} parent=39 // loop_pre_header
                _
              $region42: #{final_layer_forward.1} parent=39 // loop_header
                %s225 = sphi 0, %s227
                %p226 = scmp.ge.s32.totalorder %s225, %s223
                %s230 = sphi 0, %s251
                %s231 = sphi %s214, %s254
                %s232 = sphi %s204, %s255
              $region43: #{final_layer_forward.1} parent=39 // loop_header_branch
                %229 = sbr.rel (%p226) target = $region47
              $region44: #{final_layer_forward.1} parent=39 // loop_body
                %v233 = vld [vmem:[%s231] sm:$0xff]
                %234 = vst [vmem:[%s232] sm:$0xff] %v233
                %v235 = vld [vmem:[%s231 + $0x8] sm:$0xff]
                %236 = vst [vmem:[%s232 + $0x8] sm:$0xff] %v235
                %v237 = vld [vmem:[%s231 + $0x18] sm:$0xff]
                %238 = vst [vmem:[%s232 + $0x10] sm:$0xff] %v237
                %v239 = vld [vmem:[%s231 + $0x20] sm:$0xff]
                %240 = vst [vmem:[%s232 + $0x18] sm:$0xff] %v239
                %v241 = vld [vmem:[%s231 + $0x30] sm:$0xff]
                %242 = vst [vmem:[%s232 + $0x20] sm:$0xff] %v241
                %v243 = vld [vmem:[%s231 + $0x38] sm:$0xff]
                %244 = vst [vmem:[%s232 + $0x28] sm:$0xff] %v243
                %v245 = vld [vmem:[%s231 + $0x48] sm:$0xff]
                %246 = vst [vmem:[%s232 + $0x30] sm:$0xff] %v245
                %v247 = vld [vmem:[%s231 + $0x50] sm:$0xff]
                %248 = vst [vmem:[%s232 + $0x38] sm:$0xff] %v247
                %s249 = sadd.s32 1, %s230
                %p250 = scmp.ge.s32.totalorder %s249, %s223
                %s251 = scalar_select %p250, 0, %s249
                %s252 = smul.u32 %s251, 16
                %s253 = smul.u32 %s251, 16
                %s254 = scalar_lea.vmem %s214, %s252
                %s255 = scalar_lea.vmem %s204, %s253 [#allocation3]
              $region45: #{final_layer_forward.1} parent=39 // loop_footer
                %s227 = sadd.s32 %s225, 1
              $region46: #{final_layer_forward.1} parent=39 // loop_footer_branch
                %224 = sbr.rel target = $region42
              $region47: #{final_layer_forward.1} parent=39 // loop_exit
                _
              %s256 = sshrl.u32 %s208, 1
              %s257 = sand.u32 %s208, 1
              %s258 = smul.u32 %s256, 2
              %s259 = smul.u32 8, %s258
              %s260 = scalar_lea.vmem %s214, %s259
              %s261 = smul.u32 8, %s258
              %s262 = scalar_lea.vmem %s204, %s261 [#allocation3]
              // While loop
              $region48: #{final_layer_forward.1} parent=39 // loop_pre_header
                _
              $region49: #{final_layer_forward.1} parent=39 // loop_header
                %s264 = sphi 0, %s266
                %p265 = scmp.ge.s32.totalorder %s264, %s257
                %s269 = sphi 0, %s282
                %s270 = sphi %s260, %s285
                %s271 = sphi %s262, %s286
              $region50: #{final_layer_forward.1} parent=39 // loop_header_branch
                %268 = sbr.rel (%p265) target = $region54
              $region51: #{final_layer_forward.1} parent=39 // loop_body
                %v272 = vld [vmem:[%s270] sm:$0xff]
                %273 = vst [vmem:[%s271] sm:$0xff] %v272
                %v274 = vld [vmem:[%s270 + $0x18] sm:$0xff]
                %275 = vst [vmem:[%s271 + $0x10] sm:$0xff] %v274
                %v276 = vld [vmem:[%s270 + $0x30] sm:$0xff]
                %277 = vst [vmem:[%s271 + $0x20] sm:$0xff] %v276
                %v278 = vld [vmem:[%s270 + $0x48] sm:$0xff]
                %279 = vst [vmem:[%s271 + $0x30] sm:$0xff] %v278
                %s280 = sadd.s32 1, %s269
                %p281 = scmp.ge.s32.totalorder %s280, %s257
                %s282 = scalar_select %p281, 0, %s280
                %s283 = smul.u32 %s282, 8
                %s284 = smul.u32 %s282, 8
                %s285 = scalar_lea.vmem %s260, %s283
                %s286 = scalar_lea.vmem %s262, %s284 [#allocation3]
              $region52: #{final_layer_forward.1} parent=39 // loop_footer
                %s266 = sadd.s32 %s264, 1
              $region53: #{final_layer_forward.1} parent=39 // loop_footer_branch
                %263 = sbr.rel target = $region49
              $region54: #{final_layer_forward.1} parent=39 // loop_exit
                _
            $region40: #{final_layer_forward.1} parent=31 // pred_fallthru
              _
          $region32: #{final_layer_forward.1} parent=27 // pred_fallthru
            _
          %355 = vnop
        $region28: #{final_layer_forward.1} parent=23 // pred_fallthru
          _
        // Predicated region
        $region77: #{final_layer_forward.1} parent=23 // pred_check
          %p356 = pneg %p81
        $region78: #{final_layer_forward.1} parent=23 // pred_check_branch
          %358 = sbr.rel (%p356) target = $region80
        $region79: #{final_layer_forward.1} parent=23 // pred_region
          %s359 = sand.u32 %s71, 1
          %s360 = sand.u32 %s71, 1
          %s361 = smul.addr %s360, 32
          %s362 = scalar_lea.vmem [#allocation4], %s361
          %s363 = sadd.s32 %s23, 1
          %s364 = smul.u32 %s363, 2
          %s365 = smul.addr %s22, 12
          %s366 = sadd.s32 %s364, %s365
          %s367 = smul.addr %s366, 8
          %s368 = scalar_lea.vmem %s1, %s367
          // Predicated region
          $region81: #{final_layer_forward.1} parent=79 // pred_check
            _
          $region82: #{final_layer_forward.1} parent=79 // pred_check_branch
            %370 = sbr.rel (0) target = $region84
          $region83: #{final_layer_forward.1} parent=79 // pred_region
            // Predicated region
            $region85: #{final_layer_forward.1} parent=83 // pred_check
              _
            $region86: #{final_layer_forward.1} parent=83 // pred_check_branch
              %372 = sbr.rel (0) target = $region88
            $region87: #{final_layer_forward.1} parent=83 // pred_region
              // Predicated region
              $region100: #{final_layer_forward.1} parent=87 // pred_check
                _
              $region101: #{final_layer_forward.1} parent=87 // pred_check_branch
                %393 = sbr.rel (0) target = $region103
              $region102: #{final_layer_forward.1} parent=87 // pred_region
                loop: start=0, step=1, limit=1
                $region104: #{final_layer_forward.1} parent=102 // loop_pre_header
                  _
                $region105: #{final_layer_forward.1} parent=102 // loop_header
                  %s395 = sphi 0, %s399
                  %p396 = scmp.ge.s32.totalorder %s395, 1
                  %s400 = sphi %s368, %s368
                  %s401 = sphi %s362, %s362
                $region106: #{final_layer_forward.1} parent=102 // loop_header_branch
                  %398 = sbr.rel (%p396) target = $region110
                $region107: #{final_layer_forward.1} parent=102 // loop_body
                  %v402 = vld [vmem:[%s400] sm:$0xff]
                  %403 = vst [vmem:[%s401] sm:$0xff] %v402
                  %v404 = vld [vmem:[%s400 + $0x18] sm:$0xff]
                  %405 = vst [vmem:[%s401 + $0x8] sm:$0xff] %v404
                  %v406 = vld [vmem:[%s400 + $0x30] sm:$0xff]
                  %407 = vst [vmem:[%s401 + $0x10] sm:$0xff] %v406
                  %v408 = vld [vmem:[%s400 + $0x48] sm:$0xff]
                  %409 = vst [vmem:[%s401 + $0x18] sm:$0xff] %v408
                $region108: #{final_layer_forward.1} parent=102 // loop_footer
                  %s399 = sadd.s32 1, %s395
                $region109: #{final_layer_forward.1} parent=102 // loop_footer_branch
                  %394 = sbr.rel target = $region105
                $region110: #{final_layer_forward.1} parent=102 // loop_exit
                  _
              $region103: #{final_layer_forward.1} parent=87 // pred_fallthru
                _
              // Predicated region
              $region111: #{final_layer_forward.1} parent=87 // pred_check
                _
              $region112: #{final_layer_forward.1} parent=87 // pred_check_branch
                %411 = sbr.rel target = $region114
              $region113: #{final_layer_forward.1} parent=87 // pred_region
                _
              $region114: #{final_layer_forward.1} parent=87 // pred_fallthru
                _
            $region88: #{final_layer_forward.1} parent=83 // pred_fallthru
              _
            // Predicated region
            $region89: #{final_layer_forward.1} parent=83 // pred_check
              _
            $region90: #{final_layer_forward.1} parent=83 // pred_check_branch
              %374 = sbr.rel target = $region92
            $region91: #{final_layer_forward.1} parent=83 // pred_region
              loop: start=0, step=1, limit=1
              $region93: #{final_layer_forward.1} parent=91 // loop_pre_header
                _
              $region94: #{final_layer_forward.1} parent=91 // loop_header
                %s377 = sphi 0, %s381
                %p378 = scmp.ge.s32.totalorder %s377, 1
                %s382 = sphi %s368, %s368
                %s383 = sphi %s362, %s362
              $region95: #{final_layer_forward.1} parent=91 // loop_header_branch
                %380 = sbr.rel (%p378) target = $region99
              $region96: #{final_layer_forward.1} parent=91 // loop_body
                %v384 = vld [vmem:[%s382] sm:$0xff]
                %385 = vst [vmem:[%s383] sm:$0xff] %v384
                %v386 = vld [vmem:[%s382 + $0x18] sm:$0xff]
                %387 = vst [vmem:[%s383 + $0x8] sm:$0xff] %v386
                %v388 = vld [vmem:[%s382 + $0x30] sm:$0xff]
                %389 = vst [vmem:[%s383 + $0x10] sm:$0xff] %v388
                %v390 = vld [vmem:[%s382 + $0x48] sm:$0xff]
                %391 = vst [vmem:[%s383 + $0x18] sm:$0xff] %v390
              $region97: #{final_layer_forward.1} parent=91 // loop_footer
                %s381 = sadd.s32 1, %s377
              $region98: #{final_layer_forward.1} parent=91 // loop_footer_branch
                %376 = sbr.rel target = $region94
              $region99: #{final_layer_forward.1} parent=91 // loop_exit
                _
            $region92: #{final_layer_forward.1} parent=83 // pred_fallthru
              _
          $region84: #{final_layer_forward.1} parent=79 // pred_fallthru
            _
          %412 = vnop
        $region80: #{final_layer_forward.1} parent=23 // pred_fallthru
          _
      $region24: #{final_layer_forward.1} parent=5 // pred_fallthru
        _
      %p413 = scmp.le.s32.totalorder 1, %s15
      %p414 = scmp.lt.s32.totalorder %s15, 3
      %p415 = pnand %p413, %p414
      %p416 = pneg %p415
      // Predicated region
      $region115: #{final_layer_forward.1} parent=5 // pred_check
        _
      $region116: #{final_layer_forward.1} parent=5 // pred_check_branch
        %418 = sbr.rel (%p415) target = $region118
      $region117: #{final_layer_forward.1} parent=5 // pred_region
        %s419 = ssub.s32 %s15, 1
        %s420 = sand.u32 %s42, 1
        %s421 = sand.u32 %s42, 1
        %s422 = smul.addr %s421, 64
        %s423 = scalar_lea.vmem [#allocation3], %s422
        // Predicated region
        $region119: #{final_layer_forward.1} parent=117 // pred_check
          %p424 = pneg %p55
        $region120: #{final_layer_forward.1} parent=117 // pred_check_branch
          %426 = sbr.rel (%p424) target = $region122
        $region121: #{final_layer_forward.1} parent=117 // pred_region
          _
        $region122: #{final_layer_forward.1} parent=117 // pred_fallthru
          _
        %s427 = sand.u32 %s74, 1
        %s428 = sand.u32 %s74, 1
        %s429 = smul.addr %s428, 32
        %s430 = scalar_lea.vmem [#allocation4], %s429
        // Predicated region
        $region123: #{final_layer_forward.1} parent=117 // pred_check
          %p431 = pneg %p87
        $region124: #{final_layer_forward.1} parent=117 // pred_check_branch
          %433 = sbr.rel (%p431) target = $region126
        $region125: #{final_layer_forward.1} parent=117 // pred_region
          _
        $region126: #{final_layer_forward.1} parent=117 // pred_fallthru
          _
        // Predicated region
        $region127: #{final_layer_forward.1} parent=117 // pred_check
          %p434 = pneg %p108
        $region128: #{final_layer_forward.1} parent=117 // pred_check_branch
          %436 = sbr.rel (%p434) target = $region130
        $region129: #{final_layer_forward.1} parent=117 // pred_region
          %437 = dma.done [#allocation7], 32
        $region130: #{final_layer_forward.1} parent=117 // pred_fallthru
          _
        // Predicated region
        $region131: #{final_layer_forward.1} parent=117 // pred_check
          %p438 = pneg %p129
        $region132: #{final_layer_forward.1} parent=117 // pred_check_branch
          %440 = sbr.rel (%p438) target = $region134
        $region133: #{final_layer_forward.1} parent=117 // pred_region
          %441 = dma.done [#allocation9], 16
        $region134: #{final_layer_forward.1} parent=117 // pred_fallthru
          _
        %442 = sfence
        %s443 = sand.u32 %s42, 1
        %s444 = sand.u32 %s42, 1
        %s445 = smul.addr %s444, 64
        %s446 = scalar_lea.vmem [#allocation3], %s445
        %p447 = pneg %p55
        %p448 = pneg %p52
        %s449 = sand.u32 %s74, 1
        %s450 = sand.u32 %s74, 1
        %s451 = smul.addr %s450, 32
        %s452 = scalar_lea.vmem [#allocation4], %s451
        %p453 = pneg %p87
        %p454 = pneg %p84
        %p455 = pneg %p108
        %p456 = pneg %p105
        %p457 = pneg %p129
        %p458 = pneg %p126
        %p459 = pneg %p157
        %p460 = pneg %p154
        %s461 = sand.u32 %s144, 1
        %s462 = scalar_lea.sflag [#allocation6], %s461
        %s463 = sand.u32 %s144, 1
        %s464 = smul.addr %s463, 96
        %s465 = scalar_lea.vmem [#allocation10], %s464
        %s466 = smul.u32 2, %s25
        %s467 = ssub.s32 3, %s466
        %p468 = scmp.lt.s32.totalorder %s467, 2
        %s469 = scalar_select %p468, %s467, 2
        %s470 = smul.u32 512, %s469
        %s471 = sadd.s32 %s25, 1
        %s472 = smul.u32 %s471, 2
        %s473 = smul.u32 4, %s25
        %v474 = vld [vmem:[%s423] sm:$0xff]
        %v475 = vld [vmem:[%s423 + $0x8] sm:$0xff]
        %v476 = vld [vmem:[%s423 + $0x10] sm:$0xff]
        %v477 = vld [vmem:[%s423 + $0x18] sm:$0xff]
        %v478 = vld [vmem:[%s423 + $0x20] sm:$0xff]
        %v479 = vld [vmem:[%s423 + $0x28] sm:$0xff]
        %v480 = vld [vmem:[%s423 + $0x30] sm:$0xff]
        %v481 = vld [vmem:[%s423 + $0x38] sm:$0xff]
        %vm482 = vcmask 146432
        %483 = vst.msk [vmem:[#allocation2] sm:$0xff] %vm482, %v474
        %484 = vst.msk [vmem:[#allocation2 + $0x8] sm:$0xff] %vm482, %v475
        %485 = vst.msk [vmem:[#allocation2 + $0x18] sm:$0xff] %vm482, %v476
        %486 = vst.msk [vmem:[#allocation2 + $0x20] sm:$0xff] %vm482, %v477
        %487 = vst.msk [vmem:[#allocation2 + $0x30] sm:$0xff] %vm482, %v478
        %488 = vst.msk [vmem:[#allocation2 + $0x38] sm:$0xff] %vm482, %v479
        %489 = vst.msk [vmem:[#allocation2 + $0x48] sm:$0xff] %vm482, %v480
        %490 = vst.msk [vmem:[#allocation2 + $0x50] sm:$0xff] %vm482, %v481
        %v491 = vld [vmem:[%s430] sm:$0xff]
        %v492 = vld [vmem:[%s430 + $0x8] sm:$0xff]
        %v493 = vld [vmem:[%s430 + $0x10] sm:$0xff]
        %v494 = vld [vmem:[%s430 + $0x18] sm:$0xff]
        %495 = vst.msk [vmem:[#allocation2 + $0x10] sm:$0xff] %vm482, %v491
        %496 = vst.msk [vmem:[#allocation2 + $0x28] sm:$0xff] %vm482, %v492
        %497 = vst.msk [vmem:[#allocation2 + $0x40] sm:$0xff] %vm482, %v493
        %498 = vst.msk [vmem:[#allocation2 + $0x58] sm:$0xff] %vm482, %v494
        %v499 = vlaneseq
        %v500 = vshrl.u32 %v499, 7
        %v501 = vadd.s32 %v500, 8
        %v502 = vlaneseq
        %v503 = vand.u32 %v502, 127
        %v504 = vmul.u32 %v500, 2
        %v505 = vmul.u32 %v501, 2
        %vm506 = vcmp.eq.s32.totalorder %v503, %v504
        %vm507 = vcmp.eq.s32.totalorder %v503, %v505
        %v508 = vsel %vm506, 1, 0
        %v509 = vsel %vm507, 1, 0
        %v510 = vcvt.s32.f32 %v508
        %v511 = vcvt.s32.f32 %v509
        %v512 = vadd.s32 %v504, 1
        %v513 = vadd.s32 %v505, 1
        %vm514 = vcmp.eq.s32.totalorder %v503, %v512
        %vm515 = vcmp.eq.s32.totalorder %v503, %v513
        %v516 = vsel %vm514, 1, 0
        %v517 = vsel %vm515, 1, 0
        %v518 = vcvt.s32.f32 %v516
        %v519 = vcvt.s32.f32 %v517
        %v520 = vadd.s32 %v500, 16
        %v521 = vadd.s32 %v500, 24
        %v522 = vmul.u32 %v503, 2
        %vm523 = vcmp.eq.s32.totalorder %v500, %v522
        %vm524 = vcmp.eq.s32.totalorder %v501, %v522
        %vm525 = vcmp.eq.s32.totalorder %v520, %v522
        %vm526 = vcmp.eq.s32.totalorder %v521, %v522
        %v527 = vsel %vm523, 1, 0
        %v528 = vsel %vm524, 1, 0
        %v529 = vsel %vm525, 1, 0
        %v530 = vsel %vm526, 1, 0
        %v531 = vcvt.s32.f32 %v527
        %v532 = vcvt.s32.f32 %v528
        %v533 = vcvt.s32.f32 %v529
        %v534 = vcvt.s32.f32 %v530
        %v535 = vadd.s32 %v522, 1
        %vm536 = vcmp.eq.s32.totalorder %v500, %v535
        %vm537 = vcmp.eq.s32.totalorder %v501, %v535
        %vm538 = vcmp.eq.s32.totalorder %v520, %v535
        %vm539 = vcmp.eq.s32.totalorder %v521, %v535
        %v540 = vsel %vm536, 1, 0
        %v541 = vsel %vm537, 1, 0
        %v542 = vsel %vm538, 1, 0
        %v543 = vsel %vm539, 1, 0
        %v544 = vcvt.s32.f32 %v540
        %v545 = vcvt.s32.f32 %v541
        %v546 = vcvt.s32.f32 %v542
        %v547 = vcvt.s32.f32 %v543
        %s548 = sld [smem:[#allocation8]]
        %v549 = vstv %s548
        %s550 = sld [smem:[#allocation8 + $0x1]]
        %v551 = vstv %s550
        %s552 = sld [smem:[#allocation8 + $0x2]]
        %v553 = vstv %s552
        %v554 = vld [vmem:[#allocation2] sm:$0xff]
        %v555 = vld [vmem:[#allocation2 + $0x8] sm:$0xff]
        %s556 = sld [smem:[#allocation5]]
        %v557 = vstv %s556
        %v558 = vmul.f32 %v557, %v554
        %v559 = vmul.f32 %v557, %v555
        %v560 = vadd.f32 %v549, %v558
        %v561 = vadd.f32 %v549, %v559
        %s562 = sld [smem:[#allocation5 + $0x40]]
        %v563 = vstv %s562
        %v564 = vmul.f32 %v563, %v554
        %v565 = vmul.f32 %v563, %v555
        %v566 = vadd.f32 %v551, %v564
        %v567 = vadd.f32 %v551, %v565
        %s568 = sld [smem:[#allocation5 + $0x80]]
        %v569 = vstv %s568
        %v570 = vmul.f32 %v569, %v554
        %v571 = vmul.f32 %v569, %v555
        %v572 = vadd.f32 %v553, %v570
        %v573 = vadd.f32 %v553, %v571
        %s574 = sld [smem:[#allocation5 + $0x1]]
        %v575 = vstv %s574
        %v576 = vmul.f32 %v575, %v554
        %v577 = vmul.f32 %v575, %v555
        %580 = vrot.lane.b32.xlu0 %v576, 127
        %v581 = vpop.permute.xlu0 %580
        %582 = vrot.lane.b32.xlu0 %v577, 127
        %v583 = vpop.permute.xlu0 %582
        %v586 = vadd.f32 %v560, %v581
        %v587 = vadd.f32 %v561, %v583
        %s588 = sld [smem:[#allocation5 + $0x41]]
        %v589 = vstv %s588
        %v590 = vmul.f32 %v589, %v554
        %v591 = vmul.f32 %v589, %v555
        %594 = vrot.lane.b32.xlu0 %v590, 127
        %v595 = vpop.permute.xlu0 %594
        %596 = vrot.lane.b32.xlu0 %v591, 127
        %v597 = vpop.permute.xlu0 %596
        %v600 = vadd.f32 %v566, %v595
        %v601 = vadd.f32 %v567, %v597
        %s602 = sld [smem:[#allocation5 + $0x81]]
        %v603 = vstv %s602
        %v604 = vmul.f32 %v603, %v554
        %v605 = vmul.f32 %v603, %v555
        %608 = vrot.lane.b32.xlu0 %v604, 127
        %v609 = vpop.permute.xlu0 %608
        %610 = vrot.lane.b32.xlu0 %v605, 127
        %v611 = vpop.permute.xlu0 %610
        %v614 = vadd.f32 %v572, %v609
        %v615 = vadd.f32 %v573, %v611
        %s616 = sld [smem:[#allocation5 + $0x4]]
        %v617 = vstv %s616
        %v618 = vmul.f32 %v617, %v554
        %v619 = vmul.f32 %v617, %v555
        %v620 = vadd.f32 %v549, %v618
        %v621 = vadd.f32 %v549, %v619
        %s622 = sld [smem:[#allocation5 + $0x44]]
        %v623 = vstv %s622
        %v624 = vmul.f32 %v623, %v554
        %v625 = vmul.f32 %v623, %v555
        %v626 = vadd.f32 %v551, %v624
        %v627 = vadd.f32 %v551, %v625
        %s628 = sld [smem:[#allocation5 + $0x84]]
        %v629 = vstv %s628
        %v630 = vmul.f32 %v629, %v554
        %v631 = vmul.f32 %v629, %v555
        %v632 = vadd.f32 %v553, %v630
        %v633 = vadd.f32 %v553, %v631
        %s634 = sld [smem:[#allocation5 + $0x5]]
        %v635 = vstv %s634
        %v636 = vmul.f32 %v635, %v554
        %v637 = vmul.f32 %v635, %v555
        %640 = vrot.lane.b32.xlu0 %v636, 127
        %v641 = vpop.permute.xlu0 %640
        %642 = vrot.lane.b32.xlu0 %v637, 127
        %v643 = vpop.permute.xlu0 %642
        %v646 = vadd.f32 %v620, %v641
        %v647 = vadd.f32 %v621, %v643
        %s648 = sld [smem:[#allocation5 + $0x45]]
        %v649 = vstv %s648
        %v650 = vmul.f32 %v649, %v554
        %v651 = vmul.f32 %v649, %v555
        %654 = vrot.lane.b32.xlu0 %v650, 127
        %v655 = vpop.permute.xlu0 %654
        %656 = vrot.lane.b32.xlu0 %v651, 127
        %v657 = vpop.permute.xlu0 %656
        %v660 = vadd.f32 %v626, %v655
        %v661 = vadd.f32 %v627, %v657
        %s662 = sld [smem:[#allocation5 + $0x85]]
        %v663 = vstv %s662
        %v664 = vmul.f32 %v663, %v554
        %v665 = vmul.f32 %v663, %v555
        %668 = vrot.lane.b32.xlu0 %v664, 127
        %v669 = vpop.permute.xlu0 %668
        %670 = vrot.lane.b32.xlu0 %v665, 127
        %v671 = vpop.permute.xlu0 %670
        %v674 = vadd.f32 %v632, %v669
        %v675 = vadd.f32 %v633, %v671
        %v676 = vld [vmem:[#allocation2 + $0x1] sm:$0xff]
        %v677 = vld [vmem:[#allocation2 + $0x9] sm:$0xff]
        %s678 = sld [smem:[#allocation5 + $0x2]]
        %v679 = vstv %s678
        %v680 = vmul.f32 %v679, %v676
        %v681 = vmul.f32 %v679, %v677
        %v682 = vadd.f32 %v586, %v680
        %v683 = vadd.f32 %v587, %v681
        %s684 = sld [smem:[#allocation5 + $0x42]]
        %v685 = vstv %s684
        %v686 = vmul.f32 %v685, %v676
        %v687 = vmul.f32 %v685, %v677
        %v688 = vadd.f32 %v600, %v686
        %v689 = vadd.f32 %v601, %v687
        %s690 = sld [smem:[#allocation5 + $0x82]]
        %v691 = vstv %s690
        %v692 = vmul.f32 %v691, %v676
        %v693 = vmul.f32 %v691, %v677
        %v694 = vadd.f32 %v614, %v692
        %v695 = vadd.f32 %v615, %v693
        %s696 = sld [smem:[#allocation5 + $0x8]]
        %v697 = vstv %s696
        %v698 = vmul.f32 %v697, %v676
        %v699 = vmul.f32 %v697, %v677
        %v700 = vadd.f32 %v549, %v698
        %v701 = vadd.f32 %v549, %v699
        %s702 = sld [smem:[#allocation5 + $0x48]]
        %v703 = vstv %s702
        %v704 = vmul.f32 %v703, %v676
        %v705 = vmul.f32 %v703, %v677
        %v706 = vadd.f32 %v551, %v704
        %v707 = vadd.f32 %v551, %v705
        %s708 = sld [smem:[#allocation5 + $0x88]]
        %v709 = vstv %s708
        %v710 = vmul.f32 %v709, %v676
        %v711 = vmul.f32 %v709, %v677
        %v712 = vadd.f32 %v553, %v710
        %v713 = vadd.f32 %v553, %v711
        %s714 = sld [smem:[#allocation5 + $0x3]]
        %v715 = vstv %s714
        %v716 = vmul.f32 %v715, %v676
        %v717 = vmul.f32 %v715, %v677
        %720 = vrot.lane.b32.xlu0 %v716, 127
        %v721 = vpop.permute.xlu0 %720
        %722 = vrot.lane.b32.xlu0 %v717, 127
        %v723 = vpop.permute.xlu0 %722
        %v726 = vadd.f32 %v682, %v721
        %v727 = vadd.f32 %v683, %v723
        %s728 = sld [smem:[#allocation5 + $0x43]]
        %v729 = vstv %s728
        %v730 = vmul.f32 %v729, %v676
        %v731 = vmul.f32 %v729, %v677
        %734 = vrot.lane.b32.xlu0 %v730, 127
        %v735 = vpop.permute.xlu0 %734
        %736 = vrot.lane.b32.xlu0 %v731, 127
        %v737 = vpop.permute.xlu0 %736
        %v740 = vadd.f32 %v688, %v735
        %v741 = vadd.f32 %v689, %v737
        %s742 = sld [smem:[#allocation5 + $0x83]]
        %v743 = vstv %s742
        %v744 = vmul.f32 %v743, %v676
        %v745 = vmul.f32 %v743, %v677
        %748 = vrot.lane.b32.xlu0 %v744, 127
        %v749 = vpop.permute.xlu0 %748
        %750 = vrot.lane.b32.xlu0 %v745, 127
        %v751 = vpop.permute.xlu0 %750
        %v754 = vadd.f32 %v694, %v749
        %v755 = vadd.f32 %v695, %v751
        %s756 = sld [smem:[#allocation5 + $0x6]]
        %v757 = vstv %s756
        %v758 = vmul.f32 %v757, %v676
        %v759 = vmul.f32 %v757, %v677
        %v760 = vadd.f32 %v646, %v758
        %v761 = vadd.f32 %v647, %v759
        %s762 = sld [smem:[#allocation5 + $0x46]]
        %v763 = vstv %s762
        %v764 = vmul.f32 %v763, %v676
        %v765 = vmul.f32 %v763, %v677
        %v766 = vadd.f32 %v660, %v764
        %v767 = vadd.f32 %v661, %v765
        %s768 = sld [smem:[#allocation5 + $0x86]]
        %v769 = vstv %s768
        %v770 = vmul.f32 %v769, %v676
        %v771 = vmul.f32 %v769, %v677
        %v772 = vadd.f32 %v674, %v770
        %v773 = vadd.f32 %v675, %v771
        %s774 = sld [smem:[#allocation5 + $0x9]]
        %v775 = vstv %s774
        %v776 = vmul.f32 %v775, %v676
        %v777 = vmul.f32 %v775, %v677
        %780 = vrot.lane.b32.xlu0 %v776, 127
        %v781 = vpop.permute.xlu0 %780
        %782 = vrot.lane.b32.xlu0 %v777, 127
        %v783 = vpop.permute.xlu0 %782
        %v786 = vadd.f32 %v700, %v781
        %v787 = vadd.f32 %v701, %v783
        %s788 = sld [smem:[#allocation5 + $0x49]]
        %v789 = vstv %s788
        %v790 = vmul.f32 %v789, %v676
        %v791 = vmul.f32 %v789, %v677
        %794 = vrot.lane.b32.xlu0 %v790, 127
        %v795 = vpop.permute.xlu0 %794
        %796 = vrot.lane.b32.xlu0 %v791, 127
        %v797 = vpop.permute.xlu0 %796
        %v800 = vadd.f32 %v706, %v795
        %v801 = vadd.f32 %v707, %v797
        %s802 = sld [smem:[#allocation5 + $0x89]]
        %v803 = vstv %s802
        %v804 = vmul.f32 %v803, %v676
        %v805 = vmul.f32 %v803, %v677
        %808 = vrot.lane.b32.xlu0 %v804, 127
        %v809 = vpop.permute.xlu0 %808
        %810 = vrot.lane.b32.xlu0 %v805, 127
        %v811 = vpop.permute.xlu0 %810
        %v814 = vadd.f32 %v712, %v809
        %v815 = vadd.f32 %v713, %v811
        %s816 = sld [smem:[#allocation5 + $0xc]]
        %v817 = vstv %s816
        %v818 = vmul.f32 %v817, %v676
        %v819 = vmul.f32 %v817, %v677
        %v820 = vadd.f32 %v549, %v818
        %v821 = vadd.f32 %v549, %v819
        %s822 = sld [smem:[#allocation5 + $0x4c]]
        %v823 = vstv %s822
        %v824 = vmul.f32 %v823, %v676
        %v825 = vmul.f32 %v823, %v677
        %v826 = vadd.f32 %v551, %v824
        %v827 = vadd.f32 %v551, %v825
        %s828 = sld [smem:[#allocation5 + $0x8c]]
        %v829 = vstv %s828
        %v830 = vmul.f32 %v829, %v676
        %v831 = vmul.f32 %v829, %v677
        %v832 = vadd.f32 %v553, %v830
        %v833 = vadd.f32 %v553, %v831
        %s834 = sld [smem:[#allocation5 + $0x7]]
        %v835 = vstv %s834
        %v836 = vmul.f32 %v835, %v676
        %v837 = vmul.f32 %v835, %v677
        %840 = vrot.lane.b32.xlu0 %v836, 127
        %v841 = vpop.permute.xlu0 %840
        %842 = vrot.lane.b32.xlu0 %v837, 127
        %v843 = vpop.permute.xlu0 %842
        %v846 = vadd.f32 %v760, %v841
        %v847 = vadd.f32 %v761, %v843
        %s848 = sld [smem:[#allocation5 + $0x47]]
        %v849 = vstv %s848
        %v850 = vmul.f32 %v849, %v676
        %v851 = vmul.f32 %v849, %v677
        %854 = vrot.lane.b32.xlu0 %v850, 127
        %v855 = vpop.permute.xlu0 %854
        %856 = vrot.lane.b32.xlu0 %v851, 127
        %v857 = vpop.permute.xlu0 %856
        %v860 = vadd.f32 %v766, %v855
        %v861 = vadd.f32 %v767, %v857
        %s862 = sld [smem:[#allocation5 + $0x87]]
        %v863 = vstv %s862
        %v864 = vmul.f32 %v863, %v676
        %v865 = vmul.f32 %v863, %v677
        %868 = vrot.lane.b32.xlu0 %v864, 127
        %v869 = vpop.permute.xlu0 %868
        %870 = vrot.lane.b32.xlu0 %v865, 127
        %v871 = vpop.permute.xlu0 %870
        %v874 = vadd.f32 %v772, %v869
        %v875 = vadd.f32 %v773, %v871
        %s876 = sld [smem:[#allocation5 + $0xd]]
        %v877 = vstv %s876
        %v878 = vmul.f32 %v877, %v676
        %v879 = vmul.f32 %v877, %v677
        %882 = vrot.lane.b32.xlu0 %v878, 127
        %v883 = vpop.permute.xlu0 %882
        %884 = vrot.lane.b32.xlu0 %v879, 127
        %v885 = vpop.permute.xlu0 %884
        %v888 = vadd.f32 %v820, %v883
        %v889 = vadd.f32 %v821, %v885
        %s890 = sld [smem:[#allocation5 + $0x4d]]
        %v891 = vstv %s890
        %v892 = vmul.f32 %v891, %v676
        %v893 = vmul.f32 %v891, %v677
        %896 = vrot.lane.b32.xlu0 %v892, 127
        %v897 = vpop.permute.xlu0 %896
        %898 = vrot.lane.b32.xlu0 %v893, 127
        %v899 = vpop.permute.xlu0 %898
        %v902 = vadd.f32 %v826, %v897
        %v903 = vadd.f32 %v827, %v899
        %s904 = sld [smem:[#allocation5 + $0x8d]]
        %v905 = vstv %s904
        %v906 = vmul.f32 %v905, %v676
        %v907 = vmul.f32 %v905, %v677
        %910 = vrot.lane.b32.xlu0 %v906, 127
        %v911 = vpop.permute.xlu0 %910
        %912 = vrot.lane.b32.xlu0 %v907, 127
        %v913 = vpop.permute.xlu0 %912
        %v916 = vadd.f32 %v832, %v911
        %v917 = vadd.f32 %v833, %v913
        %v918 = vld [vmem:[#allocation2 + $0x2] sm:$0xff]
        %v919 = vld [vmem:[#allocation2 + $0xa] sm:$0xff]
        %s920 = sld [smem:[#allocation5 + $0xa]]
        %v921 = vstv %s920
        %v922 = vmul.f32 %v921, %v918
        %v923 = vmul.f32 %v921, %v919
        %v924 = vadd.f32 %v786, %v922
        %v925 = vadd.f32 %v787, %v923
        %s926 = sld [smem:[#allocation5 + $0x4a]]
        %v927 = vstv %s926
        %v928 = vmul.f32 %v927, %v918
        %v929 = vmul.f32 %v927, %v919
        %v930 = vadd.f32 %v800, %v928
        %v931 = vadd.f32 %v801, %v929
        %s932 = sld [smem:[#allocation5 + $0x8a]]
        %v933 = vstv %s932
        %v934 = vmul.f32 %v933, %v918
        %v935 = vmul.f32 %v933, %v919
        %v936 = vadd.f32 %v814, %v934
        %v937 = vadd.f32 %v815, %v935
        %s938 = sld [smem:[#allocation5 + $0xb]]
        %v939 = vstv %s938
        %v940 = vmul.f32 %v939, %v918
        %v941 = vmul.f32 %v939, %v919
        %944 = vrot.lane.b32.xlu0 %v940, 127
        %v945 = vpop.permute.xlu0 %944
        %946 = vrot.lane.b32.xlu0 %v941, 127
        %v947 = vpop.permute.xlu0 %946
        %v950 = vadd.f32 %v924, %v945
        %v951 = vadd.f32 %v925, %v947
        %s952 = sld [smem:[#allocation5 + $0x4b]]
        %v953 = vstv %s952
        %v954 = vmul.f32 %v953, %v918
        %v955 = vmul.f32 %v953, %v919
        %958 = vrot.lane.b32.xlu0 %v954, 127
        %v959 = vpop.permute.xlu0 %958
        %960 = vrot.lane.b32.xlu0 %v955, 127
        %v961 = vpop.permute.xlu0 %960
        %v964 = vadd.f32 %v930, %v959
        %v965 = vadd.f32 %v931, %v961
        %s966 = sld [smem:[#allocation5 + $0x8b]]
        %v967 = vstv %s966
        %v968 = vmul.f32 %v967, %v918
        %v969 = vmul.f32 %v967, %v919
        %972 = vrot.lane.b32.xlu0 %v968, 127
        %v973 = vpop.permute.xlu0 %972
        %974 = vrot.lane.b32.xlu0 %v969, 127
        %v975 = vpop.permute.xlu0 %974
        %v978 = vadd.f32 %v936, %v973
        %v979 = vadd.f32 %v937, %v975
        %s980 = sld [smem:[#allocation5 + $0xe]]
        %v981 = vstv %s980
        %v982 = vmul.f32 %v981, %v918
        %v983 = vmul.f32 %v981, %v919
        %v984 = vadd.f32 %v888, %v982
        %v985 = vadd.f32 %v889, %v983
        %s986 = sld [smem:[#allocation5 + $0x4e]]
        %v987 = vstv %s986
        %v988 = vmul.f32 %v987, %v918
        %v989 = vmul.f32 %v987, %v919
        %v990 = vadd.f32 %v902, %v988
        %v991 = vadd.f32 %v903, %v989
        %s992 = sld [smem:[#allocation5 + $0x8e]]
        %v993 = vstv %s992
        %v994 = vmul.f32 %v993, %v918
        %v995 = vmul.f32 %v993, %v919
        %v996 = vadd.f32 %v916, %v994
        %v997 = vadd.f32 %v917, %v995
        %s998 = sld [smem:[#allocation5 + $0xf]]
        %v999 = vstv %s998
        %v1000 = vmul.f32 %v999, %v918
        %v1001 = vmul.f32 %v999, %v919
        %1004 = vrot.lane.b32.xlu0 %v1000, 127
        %v1005 = vpop.permute.xlu0 %1004
        %1006 = vrot.lane.b32.xlu0 %v1001, 127
        %v1007 = vpop.permute.xlu0 %1006
        %v1010 = vadd.f32 %v984, %v1005
        %v1011 = vadd.f32 %v985, %v1007
        %s1012 = sld [smem:[#allocation5 + $0x4f]]
        %v1013 = vstv %s1012
        %v1014 = vmul.f32 %v1013, %v918
        %v1015 = vmul.f32 %v1013, %v919
        %1018 = vrot.lane.b32.xlu0 %v1014, 127
        %v1019 = vpop.permute.xlu0 %1018
        %1020 = vrot.lane.b32.xlu0 %v1015, 127
        %v1021 = vpop.permute.xlu0 %1020
        %v1024 = vadd.f32 %v990, %v1019
        %v1025 = vadd.f32 %v991, %v1021
        %s1026 = sld [smem:[#allocation5 + $0x8f]]
        %v1027 = vstv %s1026
        %v1028 = vmul.f32 %v1027, %v918
        %v1029 = vmul.f32 %v1027, %v919
        %1032 = vrot.lane.b32.xlu0 %v1028, 127
        %v1033 = vpop.permute.xlu0 %1032
        %1034 = vrot.lane.b32.xlu0 %v1029, 127
        %v1035 = vpop.permute.xlu0 %1034
        %v1038 = vadd.f32 %v996, %v1033
        %v1039 = vadd.f32 %v997, %v1035
        %s1040 = scalar_lea.vmem [#allocation2], 24
        %v1041 = vld [vmem:[%s1040] sm:$0xff]
        %v1042 = vld [vmem:[%s1040 + $0x8] sm:$0xff]
        %s1043 = sld [smem:[#allocation5 + $0x10]]
        %v1044 = vstv %s1043
        %v1045 = vmul.f32 %v1044, %v1041
        %v1046 = vmul.f32 %v1044, %v1042
        %v1047 = vadd.f32 %v726, %v1045
        %v1048 = vadd.f32 %v727, %v1046
        %s1049 = sld [smem:[#allocation5 + $0x50]]
        %v1050 = vstv %s1049
        %v1051 = vmul.f32 %v1050, %v1041
        %v1052 = vmul.f32 %v1050, %v1042
        %v1053 = vadd.f32 %v740, %v1051
        %v1054 = vadd.f32 %v741, %v1052
        %s1055 = sld [smem:[#allocation5 + $0x90]]
        %v1056 = vstv %s1055
        %v1057 = vmul.f32 %v1056, %v1041
        %v1058 = vmul.f32 %v1056, %v1042
        %v1059 = vadd.f32 %v754, %v1057
        %v1060 = vadd.f32 %v755, %v1058
        %s1061 = sld [smem:[#allocation5 + $0x11]]
        %v1062 = vstv %s1061
        %v1063 = vmul.f32 %v1062, %v1041
        %v1064 = vmul.f32 %v1062, %v1042
        %1067 = vrot.lane.b32.xlu0 %v1063, 127
        %v1068 = vpop.permute.xlu0 %1067
        %1069 = vrot.lane.b32.xlu0 %v1064, 127
        %v1070 = vpop.permute.xlu0 %1069
        %v1073 = vadd.f32 %v1047, %v1068
        %v1074 = vadd.f32 %v1048, %v1070
        %s1075 = sld [smem:[#allocation5 + $0x51]]
        %v1076 = vstv %s1075
        %v1077 = vmul.f32 %v1076, %v1041
        %v1078 = vmul.f32 %v1076, %v1042
        %1081 = vrot.lane.b32.xlu0 %v1077, 127
        %v1082 = vpop.permute.xlu0 %1081
        %1083 = vrot.lane.b32.xlu0 %v1078, 127
        %v1084 = vpop.permute.xlu0 %1083
        %v1087 = vadd.f32 %v1053, %v1082
        %v1088 = vadd.f32 %v1054, %v1084
        %s1089 = sld [smem:[#allocation5 + $0x91]]
        %v1090 = vstv %s1089
        %v1091 = vmul.f32 %v1090, %v1041
        %v1092 = vmul.f32 %v1090, %v1042
        %1095 = vrot.lane.b32.xlu0 %v1091, 127
        %v1096 = vpop.permute.xlu0 %1095
        %1097 = vrot.lane.b32.xlu0 %v1092, 127
        %v1098 = vpop.permute.xlu0 %1097
        %v1101 = vadd.f32 %v1059, %v1096
        %v1102 = vadd.f32 %v1060, %v1098
        %s1103 = sld [smem:[#allocation5 + $0x14]]
        %v1104 = vstv %s1103
        %v1105 = vmul.f32 %v1104, %v1041
        %v1106 = vmul.f32 %v1104, %v1042
        %v1107 = vadd.f32 %v846, %v1105
        %v1108 = vadd.f32 %v847, %v1106
        %s1109 = sld [smem:[#allocation5 + $0x54]]
        %v1110 = vstv %s1109
        %v1111 = vmul.f32 %v1110, %v1041
        %v1112 = vmul.f32 %v1110, %v1042
        %v1113 = vadd.f32 %v860, %v1111
        %v1114 = vadd.f32 %v861, %v1112
        %s1115 = sld [smem:[#allocation5 + $0x94]]
        %v1116 = vstv %s1115
        %v1117 = vmul.f32 %v1116, %v1041
        %v1118 = vmul.f32 %v1116, %v1042
        %v1119 = vadd.f32 %v874, %v1117
        %v1120 = vadd.f32 %v875, %v1118
        %s1121 = sld [smem:[#allocation5 + $0x15]]
        %v1122 = vstv %s1121
        %v1123 = vmul.f32 %v1122, %v1041
        %v1124 = vmul.f32 %v1122, %v1042
        %1127 = vrot.lane.b32.xlu0 %v1123, 127
        %v1128 = vpop.permute.xlu0 %1127
        %1129 = vrot.lane.b32.xlu0 %v1124, 127
        %v1130 = vpop.permute.xlu0 %1129
        %v1133 = vadd.f32 %v1107, %v1128
        %v1134 = vadd.f32 %v1108, %v1130
        %s1135 = sld [smem:[#allocation5 + $0x55]]
        %v1136 = vstv %s1135
        %v1137 = vmul.f32 %v1136, %v1041
        %v1138 = vmul.f32 %v1136, %v1042
        %1141 = vrot.lane.b32.xlu0 %v1137, 127
        %v1142 = vpop.permute.xlu0 %1141
        %1143 = vrot.lane.b32.xlu0 %v1138, 127
        %v1144 = vpop.permute.xlu0 %1143
        %v1147 = vadd.f32 %v1113, %v1142
        %v1148 = vadd.f32 %v1114, %v1144
        %s1149 = sld [smem:[#allocation5 + $0x95]]
        %v1150 = vstv %s1149
        %v1151 = vmul.f32 %v1150, %v1041
        %v1152 = vmul.f32 %v1150, %v1042
        %1155 = vrot.lane.b32.xlu0 %v1151, 127
        %v1156 = vpop.permute.xlu0 %1155
        %1157 = vrot.lane.b32.xlu0 %v1152, 127
        %v1158 = vpop.permute.xlu0 %1157
        %v1161 = vadd.f32 %v1119, %v1156
        %v1162 = vadd.f32 %v1120, %v1158
        %v1163 = vld [vmem:[%s1040 + $0x1] sm:$0xff]
        %v1164 = vld [vmem:[%s1040 + $0x9] sm:$0xff]
        %s1165 = sld [smem:[#allocation5 + $0x12]]
        %v1166 = vstv %s1165
        %v1167 = vmul.f32 %v1166, %v1163
        %v1168 = vmul.f32 %v1166, %v1164
        %v1169 = vadd.f32 %v1073, %v1167
        %v1170 = vadd.f32 %v1074, %v1168
        %s1171 = sld [smem:[#allocation5 + $0x52]]
        %v1172 = vstv %s1171
        %v1173 = vmul.f32 %v1172, %v1163
        %v1174 = vmul.f32 %v1172, %v1164
        %v1175 = vadd.f32 %v1087, %v1173
        %v1176 = vadd.f32 %v1088, %v1174
        %s1177 = sld [smem:[#allocation5 + $0x92]]
        %v1178 = vstv %s1177
        %v1179 = vmul.f32 %v1178, %v1163
        %v1180 = vmul.f32 %v1178, %v1164
        %v1181 = vadd.f32 %v1101, %v1179
        %v1182 = vadd.f32 %v1102, %v1180
        %s1183 = sld [smem:[#allocation5 + $0x18]]
        %v1184 = vstv %s1183
        %v1185 = vmul.f32 %v1184, %v1163
        %v1186 = vmul.f32 %v1184, %v1164
        %v1187 = vadd.f32 %v950, %v1185
        %v1188 = vadd.f32 %v951, %v1186
        %s1189 = sld [smem:[#allocation5 + $0x58]]
        %v1190 = vstv %s1189
        %v1191 = vmul.f32 %v1190, %v1163
        %v1192 = vmul.f32 %v1190, %v1164
        %v1193 = vadd.f32 %v964, %v1191
        %v1194 = vadd.f32 %v965, %v1192
        %s1195 = sld [smem:[#allocation5 + $0x98]]
        %v1196 = vstv %s1195
        %v1197 = vmul.f32 %v1196, %v1163
        %v1198 = vmul.f32 %v1196, %v1164
        %v1199 = vadd.f32 %v978, %v1197
        %v1200 = vadd.f32 %v979, %v1198
        %s1201 = sld [smem:[#allocation5 + $0x13]]
        %v1202 = vstv %s1201
        %v1203 = vmul.f32 %v1202, %v1163
        %v1204 = vmul.f32 %v1202, %v1164
        %1207 = vrot.lane.b32.xlu0 %v1203, 127
        %v1208 = vpop.permute.xlu0 %1207
        %1209 = vrot.lane.b32.xlu0 %v1204, 127
        %v1210 = vpop.permute.xlu0 %1209
        %v1213 = vadd.f32 %v1169, %v1208
        %v1214 = vadd.f32 %v1170, %v1210
        %s1215 = sld [smem:[#allocation5 + $0x53]]
        %v1216 = vstv %s1215
        %v1217 = vmul.f32 %v1216, %v1163
        %v1218 = vmul.f32 %v1216, %v1164
        %1221 = vrot.lane.b32.xlu0 %v1217, 127
        %v1222 = vpop.permute.xlu0 %1221
        %1223 = vrot.lane.b32.xlu0 %v1218, 127
        %v1224 = vpop.permute.xlu0 %1223
        %v1227 = vadd.f32 %v1175, %v1222
        %v1228 = vadd.f32 %v1176, %v1224
        %s1229 = sld [smem:[#allocation5 + $0x93]]
        %v1230 = vstv %s1229
        %v1231 = vmul.f32 %v1230, %v1163
        %v1232 = vmul.f32 %v1230, %v1164
        %1235 = vrot.lane.b32.xlu0 %v1231, 127
        %v1236 = vpop.permute.xlu0 %1235
        %1237 = vrot.lane.b32.xlu0 %v1232, 127
        %v1238 = vpop.permute.xlu0 %1237
        %v1241 = vadd.f32 %v1181, %v1236
        %v1242 = vadd.f32 %v1182, %v1238
        %s1243 = sld [smem:[#allocation5 + $0x16]]
        %v1244 = vstv %s1243
        %v1245 = vmul.f32 %v1244, %v1163
        %v1246 = vmul.f32 %v1244, %v1164
        %v1247 = vadd.f32 %v1133, %v1245
        %v1248 = vadd.f32 %v1134, %v1246
        %s1249 = sld [smem:[#allocation5 + $0x56]]
        %v1250 = vstv %s1249
        %v1251 = vmul.f32 %v1250, %v1163
        %v1252 = vmul.f32 %v1250, %v1164
        %v1253 = vadd.f32 %v1147, %v1251
        %v1254 = vadd.f32 %v1148, %v1252
        %s1255 = sld [smem:[#allocation5 + $0x96]]
        %v1256 = vstv %s1255
        %v1257 = vmul.f32 %v1256, %v1163
        %v1258 = vmul.f32 %v1256, %v1164
        %v1259 = vadd.f32 %v1161, %v1257
        %v1260 = vadd.f32 %v1162, %v1258
        %s1261 = sld [smem:[#allocation5 + $0x19]]
        %v1262 = vstv %s1261
        %v1263 = vmul.f32 %v1262, %v1163
        %v1264 = vmul.f32 %v1262, %v1164
        %1267 = vrot.lane.b32.xlu0 %v1263, 127
        %v1268 = vpop.permute.xlu0 %1267
        %1269 = vrot.lane.b32.xlu0 %v1264, 127
        %v1270 = vpop.permute.xlu0 %1269
        %v1273 = vadd.f32 %v1187, %v1268
        %v1274 = vadd.f32 %v1188, %v1270
        %s1275 = sld [smem:[#allocation5 + $0x59]]
        %v1276 = vstv %s1275
        %v1277 = vmul.f32 %v1276, %v1163
        %v1278 = vmul.f32 %v1276, %v1164
        %1281 = vrot.lane.b32.xlu0 %v1277, 127
        %v1282 = vpop.permute.xlu0 %1281
        %1283 = vrot.lane.b32.xlu0 %v1278, 127
        %v1284 = vpop.permute.xlu0 %1283
        %v1287 = vadd.f32 %v1193, %v1282
        %v1288 = vadd.f32 %v1194, %v1284
        %s1289 = sld [smem:[#allocation5 + $0x99]]
        %v1290 = vstv %s1289
        %v1291 = vmul.f32 %v1290, %v1163
        %v1292 = vmul.f32 %v1290, %v1164
        %1295 = vrot.lane.b32.xlu0 %v1291, 127
        %v1296 = vpop.permute.xlu0 %1295
        %1297 = vrot.lane.b32.xlu0 %v1292, 127
        %v1298 = vpop.permute.xlu0 %1297
        %v1301 = vadd.f32 %v1199, %v1296
        %v1302 = vadd.f32 %v1200, %v1298
        %s1303 = sld [smem:[#allocation5 + $0x1c]]
        %v1304 = vstv %s1303
        %v1305 = vmul.f32 %v1304, %v1163
        %v1306 = vmul.f32 %v1304, %v1164
        %v1307 = vadd.f32 %v1010, %v1305
        %v1308 = vadd.f32 %v1011, %v1306
        %s1309 = sld [smem:[#allocation5 + $0x5c]]
        %v1310 = vstv %s1309
        %v1311 = vmul.f32 %v1310, %v1163
        %v1312 = vmul.f32 %v1310, %v1164
        %v1313 = vadd.f32 %v1024, %v1311
        %v1314 = vadd.f32 %v1025, %v1312
        %s1315 = sld [smem:[#allocation5 + $0x9c]]
        %v1316 = vstv %s1315
        %v1317 = vmul.f32 %v1316, %v1163
        %v1318 = vmul.f32 %v1316, %v1164
        %v1319 = vadd.f32 %v1038, %v1317
        %v1320 = vadd.f32 %v1039, %v1318
        %s1321 = sld [smem:[#allocation5 + $0x17]]
        %v1322 = vstv %s1321
        %v1323 = vmul.f32 %v1322, %v1163
        %v1324 = vmul.f32 %v1322, %v1164
        %1327 = vrot.lane.b32.xlu0 %v1323, 127
        %v1328 = vpop.permute.xlu0 %1327
        %1329 = vrot.lane.b32.xlu0 %v1324, 127
        %v1330 = vpop.permute.xlu0 %1329
        %v1333 = vadd.f32 %v1247, %v1328
        %v1334 = vadd.f32 %v1248, %v1330
        %s1335 = sld [smem:[#allocation5 + $0x57]]
        %v1336 = vstv %s1335
        %v1337 = vmul.f32 %v1336, %v1163
        %v1338 = vmul.f32 %v1336, %v1164
        %1341 = vrot.lane.b32.xlu0 %v1337, 127
        %v1342 = vpop.permute.xlu0 %1341
        %1343 = vrot.lane.b32.xlu0 %v1338, 127
        %v1344 = vpop.permute.xlu0 %1343
        %v1347 = vadd.f32 %v1253, %v1342
        %v1348 = vadd.f32 %v1254, %v1344
        %s1349 = sld [smem:[#allocation5 + $0x97]]
        %v1350 = vstv %s1349
        %v1351 = vmul.f32 %v1350, %v1163
        %v1352 = vmul.f32 %v1350, %v1164
        %1355 = vrot.lane.b32.xlu0 %v1351, 127
        %v1356 = vpop.permute.xlu0 %1355
        %1357 = vrot.lane.b32.xlu0 %v1352, 127
        %v1358 = vpop.permute.xlu0 %1357
        %v1361 = vadd.f32 %v1259, %v1356
        %v1362 = vadd.f32 %v1260, %v1358
        %s1363 = sld [smem:[#allocation5 + $0x1d]]
        %v1364 = vstv %s1363
        %v1365 = vmul.f32 %v1364, %v1163
        %v1366 = vmul.f32 %v1364, %v1164
        %1369 = vrot.lane.b32.xlu0 %v1365, 127
        %v1370 = vpop.permute.xlu0 %1369
        %1371 = vrot.lane.b32.xlu0 %v1366, 127
        %v1372 = vpop.permute.xlu0 %1371
        %v1375 = vadd.f32 %v1307, %v1370
        %v1376 = vadd.f32 %v1308, %v1372
        %s1377 = sld [smem:[#allocation5 + $0x5d]]
        %v1378 = vstv %s1377
        %v1379 = vmul.f32 %v1378, %v1163
        %v1380 = vmul.f32 %v1378, %v1164
        %1383 = vrot.lane.b32.xlu0 %v1379, 127
        %v1384 = vpop.permute.xlu0 %1383
        %1385 = vrot.lane.b32.xlu0 %v1380, 127
        %v1386 = vpop.permute.xlu0 %1385
        %v1389 = vadd.f32 %v1313, %v1384
        %v1390 = vadd.f32 %v1314, %v1386
        %s1391 = sld [smem:[#allocation5 + $0x9d]]
        %v1392 = vstv %s1391
        %v1393 = vmul.f32 %v1392, %v1163
        %v1394 = vmul.f32 %v1392, %v1164
        %1397 = vrot.lane.b32.xlu0 %v1393, 127
        %v1398 = vpop.permute.xlu0 %1397
        %1399 = vrot.lane.b32.xlu0 %v1394, 127
        %v1400 = vpop.permute.xlu0 %1399
        %v1403 = vadd.f32 %v1319, %v1398
        %v1404 = vadd.f32 %v1320, %v1400
        %v1405 = vld [vmem:[%s1040 + $0x2] sm:$0xff]
        %v1406 = vld [vmem:[%s1040 + $0xa] sm:$0xff]
        %s1407 = sld [smem:[#allocation5 + $0x1a]]
        %v1408 = vstv %s1407
        %v1409 = vmul.f32 %v1408, %v1405
        %v1410 = vmul.f32 %v1408, %v1406
        %v1411 = vadd.f32 %v1273, %v1409
        %v1412 = vadd.f32 %v1274, %v1410
        %s1413 = sld [smem:[#allocation5 + $0x5a]]
        %v1414 = vstv %s1413
        %v1415 = vmul.f32 %v1414, %v1405
        %v1416 = vmul.f32 %v1414, %v1406
        %v1417 = vadd.f32 %v1287, %v1415
        %v1418 = vadd.f32 %v1288, %v1416
        %s1419 = sld [smem:[#allocation5 + $0x9a]]
        %v1420 = vstv %s1419
        %v1421 = vmul.f32 %v1420, %v1405
        %v1422 = vmul.f32 %v1420, %v1406
        %v1423 = vadd.f32 %v1301, %v1421
        %v1424 = vadd.f32 %v1302, %v1422
        %s1425 = sld [smem:[#allocation5 + $0x1b]]
        %v1426 = vstv %s1425
        %v1427 = vmul.f32 %v1426, %v1405
        %v1428 = vmul.f32 %v1426, %v1406
        %1431 = vrot.lane.b32.xlu0 %v1427, 127
        %v1432 = vpop.permute.xlu0 %1431
        %1433 = vrot.lane.b32.xlu0 %v1428, 127
        %v1434 = vpop.permute.xlu0 %1433
        %v1437 = vadd.f32 %v1411, %v1432
        %v1438 = vadd.f32 %v1412, %v1434
        %s1439 = sld [smem:[#allocation5 + $0x5b]]
        %v1440 = vstv %s1439
        %v1441 = vmul.f32 %v1440, %v1405
        %v1442 = vmul.f32 %v1440, %v1406
        %1445 = vrot.lane.b32.xlu0 %v1441, 127
        %v1446 = vpop.permute.xlu0 %1445
        %1447 = vrot.lane.b32.xlu0 %v1442, 127
        %v1448 = vpop.permute.xlu0 %1447
        %v1451 = vadd.f32 %v1417, %v1446
        %v1452 = vadd.f32 %v1418, %v1448
        %s1453 = sld [smem:[#allocation5 + $0x9b]]
        %v1454 = vstv %s1453
        %v1455 = vmul.f32 %v1454, %v1405
        %v1456 = vmul.f32 %v1454, %v1406
        %1459 = vrot.lane.b32.xlu0 %v1455, 127
        %v1460 = vpop.permute.xlu0 %1459
        %1461 = vrot.lane.b32.xlu0 %v1456, 127
        %v1462 = vpop.permute.xlu0 %1461
        %v1465 = vadd.f32 %v1423, %v1460
        %v1466 = vadd.f32 %v1424, %v1462
        %s1467 = sld [smem:[#allocation5 + $0x1e]]
        %v1468 = vstv %s1467
        %v1469 = vmul.f32 %v1468, %v1405
        %v1470 = vmul.f32 %v1468, %v1406
        %v1471 = vadd.f32 %v1375, %v1469
        %v1472 = vadd.f32 %v1376, %v1470
        %s1473 = sld [smem:[#allocation5 + $0x5e]]
        %v1474 = vstv %s1473
        %v1475 = vmul.f32 %v1474, %v1405
        %v1476 = vmul.f32 %v1474, %v1406
        %v1477 = vadd.f32 %v1389, %v1475
        %v1478 = vadd.f32 %v1390, %v1476
        %s1479 = sld [smem:[#allocation5 + $0x9e]]
        %v1480 = vstv %s1479
        %v1481 = vmul.f32 %v1480, %v1405
        %v1482 = vmul.f32 %v1480, %v1406
        %v1483 = vadd.f32 %v1403, %v1481
        %v1484 = vadd.f32 %v1404, %v1482
        %s1485 = sld [smem:[#allocation5 + $0x1f]]
        %v1486 = vstv %s1485
        %v1487 = vmul.f32 %v1486, %v1405
        %v1488 = vmul.f32 %v1486, %v1406
        %1491 = vrot.lane.b32.xlu0 %v1487, 127
        %v1492 = vpop.permute.xlu0 %1491
        %1493 = vrot.lane.b32.xlu0 %v1488, 127
        %v1494 = vpop.permute.xlu0 %1493
        %v1497 = vadd.f32 %v1471, %v1492
        %v1498 = vadd.f32 %v1472, %v1494
        %s1499 = sld [smem:[#allocation5 + $0x5f]]
        %v1500 = vstv %s1499
        %v1501 = vmul.f32 %v1500, %v1405
        %v1502 = vmul.f32 %v1500, %v1406
        %1505 = vrot.lane.b32.xlu0 %v1501, 127
        %v1506 = vpop.permute.xlu0 %1505
        %1507 = vrot.lane.b32.xlu0 %v1502, 127
        %v1508 = vpop.permute.xlu0 %1507
        %v1511 = vadd.f32 %v1477, %v1506
        %v1512 = vadd.f32 %v1478, %v1508
        %s1513 = sld [smem:[#allocation5 + $0x9f]]
        %v1514 = vstv %s1513
        %v1515 = vmul.f32 %v1514, %v1405
        %v1516 = vmul.f32 %v1514, %v1406
        %1519 = vrot.lane.b32.xlu0 %v1515, 127
        %v1520 = vpop.permute.xlu0 %1519
        %1521 = vrot.lane.b32.xlu0 %v1516, 127
        %v1522 = vpop.permute.xlu0 %1521
        %v1525 = vadd.f32 %v1483, %v1520
        %v1526 = vadd.f32 %v1484, %v1522
        %s1527 = scalar_lea.vmem [#allocation2], 48
        %v1528 = vld [vmem:[%s1527] sm:$0xff]
        %v1529 = vld [vmem:[%s1527 + $0x8] sm:$0xff]
        %s1530 = sld [smem:[#allocation5 + $0x20]]
        %v1531 = vstv %s1530
        %v1532 = vmul.f32 %v1531, %v1528
        %v1533 = vmul.f32 %v1531, %v1529
        %v1534 = vadd.f32 %v1213, %v1532
        %v1535 = vadd.f32 %v1214, %v1533
        %s1536 = sld [smem:[#allocation5 + $0x60]]
        %v1537 = vstv %s1536
        %v1538 = vmul.f32 %v1537, %v1528
        %v1539 = vmul.f32 %v1537, %v1529
        %v1540 = vadd.f32 %v1227, %v1538
        %v1541 = vadd.f32 %v1228, %v1539
        %s1542 = sld [smem:[#allocation5 + $0xa0]]
        %v1543 = vstv %s1542
        %v1544 = vmul.f32 %v1543, %v1528
        %v1545 = vmul.f32 %v1543, %v1529
        %v1546 = vadd.f32 %v1241, %v1544
        %v1547 = vadd.f32 %v1242, %v1545
        %s1548 = sld [smem:[#allocation5 + $0x21]]
        %v1549 = vstv %s1548
        %v1550 = vmul.f32 %v1549, %v1528
        %v1551 = vmul.f32 %v1549, %v1529
        %1554 = vrot.lane.b32.xlu0 %v1550, 127
        %v1555 = vpop.permute.xlu0 %1554
        %1556 = vrot.lane.b32.xlu0 %v1551, 127
        %v1557 = vpop.permute.xlu0 %1556
        %v1560 = vadd.f32 %v1534, %v1555
        %v1561 = vadd.f32 %v1535, %v1557
        %s1562 = sld [smem:[#allocation5 + $0x61]]
        %v1563 = vstv %s1562
        %v1564 = vmul.f32 %v1563, %v1528
        %v1565 = vmul.f32 %v1563, %v1529
        %1568 = vrot.lane.b32.xlu0 %v1564, 127
        %v1569 = vpop.permute.xlu0 %1568
        %1570 = vrot.lane.b32.xlu0 %v1565, 127
        %v1571 = vpop.permute.xlu0 %1570
        %v1574 = vadd.f32 %v1540, %v1569
        %v1575 = vadd.f32 %v1541, %v1571
        %s1576 = sld [smem:[#allocation5 + $0xa1]]
        %v1577 = vstv %s1576
        %v1578 = vmul.f32 %v1577, %v1528
        %v1579 = vmul.f32 %v1577, %v1529
        %1582 = vrot.lane.b32.xlu0 %v1578, 127
        %v1583 = vpop.permute.xlu0 %1582
        %1584 = vrot.lane.b32.xlu0 %v1579, 127
        %v1585 = vpop.permute.xlu0 %1584
        %v1588 = vadd.f32 %v1546, %v1583
        %v1589 = vadd.f32 %v1547, %v1585
        %s1590 = sld [smem:[#allocation5 + $0x24]]
        %v1591 = vstv %s1590
        %v1592 = vmul.f32 %v1591, %v1528
        %v1593 = vmul.f32 %v1591, %v1529
        %v1594 = vadd.f32 %v1333, %v1592
        %v1595 = vadd.f32 %v1334, %v1593
        %s1596 = sld [smem:[#allocation5 + $0x64]]
        %v1597 = vstv %s1596
        %v1598 = vmul.f32 %v1597, %v1528
        %v1599 = vmul.f32 %v1597, %v1529
        %v1600 = vadd.f32 %v1347, %v1598
        %v1601 = vadd.f32 %v1348, %v1599
        %s1602 = sld [smem:[#allocation5 + $0xa4]]
        %v1603 = vstv %s1602
        %v1604 = vmul.f32 %v1603, %v1528
        %v1605 = vmul.f32 %v1603, %v1529
        %v1606 = vadd.f32 %v1361, %v1604
        %v1607 = vadd.f32 %v1362, %v1605
        %s1608 = sld [smem:[#allocation5 + $0x25]]
        %v1609 = vstv %s1608
        %v1610 = vmul.f32 %v1609, %v1528
        %v1611 = vmul.f32 %v1609, %v1529
        %1614 = vrot.lane.b32.xlu0 %v1610, 127
        %v1615 = vpop.permute.xlu0 %1614
        %1616 = vrot.lane.b32.xlu0 %v1611, 127
        %v1617 = vpop.permute.xlu0 %1616
        %v1620 = vadd.f32 %v1594, %v1615
        %v1621 = vadd.f32 %v1595, %v1617
        %s1622 = sld [smem:[#allocation5 + $0x65]]
        %v1623 = vstv %s1622
        %v1624 = vmul.f32 %v1623, %v1528
        %v1625 = vmul.f32 %v1623, %v1529
        %1628 = vrot.lane.b32.xlu0 %v1624, 127
        %v1629 = vpop.permute.xlu0 %1628
        %1630 = vrot.lane.b32.xlu0 %v1625, 127
        %v1631 = vpop.permute.xlu0 %1630
        %v1634 = vadd.f32 %v1600, %v1629
        %v1635 = vadd.f32 %v1601, %v1631
        %s1636 = sld [smem:[#allocation5 + $0xa5]]
        %v1637 = vstv %s1636
        %v1638 = vmul.f32 %v1637, %v1528
        %v1639 = vmul.f32 %v1637, %v1529
        %1642 = vrot.lane.b32.xlu0 %v1638, 127
        %v1643 = vpop.permute.xlu0 %1642
        %1644 = vrot.lane.b32.xlu0 %v1639, 127
        %v1645 = vpop.permute.xlu0 %1644
        %v1648 = vadd.f32 %v1606, %v1643
        %v1649 = vadd.f32 %v1607, %v1645
        %v1650 = vld [vmem:[%s1527 + $0x1] sm:$0xff]
        %v1651 = vld [vmem:[%s1527 + $0x9] sm:$0xff]
        %s1652 = sld [smem:[#allocation5 + $0x22]]
        %v1653 = vstv %s1652
        %v1654 = vmul.f32 %v1653, %v1650
        %v1655 = vmul.f32 %v1653, %v1651
        %v1656 = vadd.f32 %v1560, %v1654
        %v1657 = vadd.f32 %v1561, %v1655
        %s1658 = sld [smem:[#allocation5 + $0x62]]
        %v1659 = vstv %s1658
        %v1660 = vmul.f32 %v1659, %v1650
        %v1661 = vmul.f32 %v1659, %v1651
        %v1662 = vadd.f32 %v1574, %v1660
        %v1663 = vadd.f32 %v1575, %v1661
        %s1664 = sld [smem:[#allocation5 + $0xa2]]
        %v1665 = vstv %s1664
        %v1666 = vmul.f32 %v1665, %v1650
        %v1667 = vmul.f32 %v1665, %v1651
        %v1668 = vadd.f32 %v1588, %v1666
        %v1669 = vadd.f32 %v1589, %v1667
        %s1670 = sld [smem:[#allocation5 + $0x28]]
        %v1671 = vstv %s1670
        %v1672 = vmul.f32 %v1671, %v1650
        %v1673 = vmul.f32 %v1671, %v1651
        %v1674 = vadd.f32 %v1437, %v1672
        %v1675 = vadd.f32 %v1438, %v1673
        %s1676 = sld [smem:[#allocation5 + $0x68]]
        %v1677 = vstv %s1676
        %v1678 = vmul.f32 %v1677, %v1650
        %v1679 = vmul.f32 %v1677, %v1651
        %v1680 = vadd.f32 %v1451, %v1678
        %v1681 = vadd.f32 %v1452, %v1679
        %s1682 = sld [smem:[#allocation5 + $0xa8]]
        %v1683 = vstv %s1682
        %v1684 = vmul.f32 %v1683, %v1650
        %v1685 = vmul.f32 %v1683, %v1651
        %v1686 = vadd.f32 %v1465, %v1684
        %v1687 = vadd.f32 %v1466, %v1685
        %s1688 = sld [smem:[#allocation5 + $0x23]]
        %v1689 = vstv %s1688
        %v1690 = vmul.f32 %v1689, %v1650
        %v1691 = vmul.f32 %v1689, %v1651
        %1694 = vrot.lane.b32.xlu0 %v1690, 127
        %v1695 = vpop.permute.xlu0 %1694
        %1696 = vrot.lane.b32.xlu0 %v1691, 127
        %v1697 = vpop.permute.xlu0 %1696
        %v1700 = vadd.f32 %v1656, %v1695
        %v1701 = vadd.f32 %v1657, %v1697
        %s1702 = sld [smem:[#allocation5 + $0x63]]
        %v1703 = vstv %s1702
        %v1704 = vmul.f32 %v1703, %v1650
        %v1705 = vmul.f32 %v1703, %v1651
        %1708 = vrot.lane.b32.xlu0 %v1704, 127
        %v1709 = vpop.permute.xlu0 %1708
        %1710 = vrot.lane.b32.xlu0 %v1705, 127
        %v1711 = vpop.permute.xlu0 %1710
        %v1714 = vadd.f32 %v1662, %v1709
        %v1715 = vadd.f32 %v1663, %v1711
        %s1716 = sld [smem:[#allocation5 + $0xa3]]
        %v1717 = vstv %s1716
        %v1718 = vmul.f32 %v1717, %v1650
        %v1719 = vmul.f32 %v1717, %v1651
        %1722 = vrot.lane.b32.xlu0 %v1718, 127
        %v1723 = vpop.permute.xlu0 %1722
        %1724 = vrot.lane.b32.xlu0 %v1719, 127
        %v1725 = vpop.permute.xlu0 %1724
        %v1728 = vadd.f32 %v1668, %v1723
        %v1729 = vadd.f32 %v1669, %v1725
        %s1730 = sld [smem:[#allocation5 + $0x26]]
        %v1731 = vstv %s1730
        %v1732 = vmul.f32 %v1731, %v1650
        %v1733 = vmul.f32 %v1731, %v1651
        %v1734 = vadd.f32 %v1620, %v1732
        %v1735 = vadd.f32 %v1621, %v1733
        %s1736 = sld [smem:[#allocation5 + $0x66]]
        %v1737 = vstv %s1736
        %v1738 = vmul.f32 %v1737, %v1650
        %v1739 = vmul.f32 %v1737, %v1651
        %v1740 = vadd.f32 %v1634, %v1738
        %v1741 = vadd.f32 %v1635, %v1739
        %s1742 = sld [smem:[#allocation5 + $0xa6]]
        %v1743 = vstv %s1742
        %v1744 = vmul.f32 %v1743, %v1650
        %v1745 = vmul.f32 %v1743, %v1651
        %v1746 = vadd.f32 %v1648, %v1744
        %v1747 = vadd.f32 %v1649, %v1745
        %s1748 = sld [smem:[#allocation5 + $0x29]]
        %v1749 = vstv %s1748
        %v1750 = vmul.f32 %v1749, %v1650
        %v1751 = vmul.f32 %v1749, %v1651
        %1754 = vrot.lane.b32.xlu0 %v1750, 127
        %v1755 = vpop.permute.xlu0 %1754
        %1756 = vrot.lane.b32.xlu0 %v1751, 127
        %v1757 = vpop.permute.xlu0 %1756
        %v1760 = vadd.f32 %v1674, %v1755
        %v1761 = vadd.f32 %v1675, %v1757
        %s1762 = sld [smem:[#allocation5 + $0x69]]
        %v1763 = vstv %s1762
        %v1764 = vmul.f32 %v1763, %v1650
        %v1765 = vmul.f32 %v1763, %v1651
        %1768 = vrot.lane.b32.xlu0 %v1764, 127
        %v1769 = vpop.permute.xlu0 %1768
        %1770 = vrot.lane.b32.xlu0 %v1765, 127
        %v1771 = vpop.permute.xlu0 %1770
        %v1774 = vadd.f32 %v1680, %v1769
        %v1775 = vadd.f32 %v1681, %v1771
        %s1776 = sld [smem:[#allocation5 + $0xa9]]
        %v1777 = vstv %s1776
        %v1778 = vmul.f32 %v1777, %v1650
        %v1779 = vmul.f32 %v1777, %v1651
        %1782 = vrot.lane.b32.xlu0 %v1778, 127
        %v1783 = vpop.permute.xlu0 %1782
        %1784 = vrot.lane.b32.xlu0 %v1779, 127
        %v1785 = vpop.permute.xlu0 %1784
        %v1788 = vadd.f32 %v1686, %v1783
        %v1789 = vadd.f32 %v1687, %v1785
        %s1790 = sld [smem:[#allocation5 + $0x2c]]
        %v1791 = vstv %s1790
        %v1792 = vmul.f32 %v1791, %v1650
        %v1793 = vmul.f32 %v1791, %v1651
        %v1794 = vadd.f32 %v1497, %v1792
        %v1795 = vadd.f32 %v1498, %v1793
        %s1796 = sld [smem:[#allocation5 + $0x6c]]
        %v1797 = vstv %s1796
        %v1798 = vmul.f32 %v1797, %v1650
        %v1799 = vmul.f32 %v1797, %v1651
        %v1800 = vadd.f32 %v1511, %v1798
        %v1801 = vadd.f32 %v1512, %v1799
        %s1802 = sld [smem:[#allocation5 + $0xac]]
        %v1803 = vstv %s1802
        %v1804 = vmul.f32 %v1803, %v1650
        %v1805 = vmul.f32 %v1803, %v1651
        %v1806 = vadd.f32 %v1525, %v1804
        %v1807 = vadd.f32 %v1526, %v1805
        %s1808 = sld [smem:[#allocation5 + $0x27]]
        %v1809 = vstv %s1808
        %v1810 = vmul.f32 %v1809, %v1650
        %v1811 = vmul.f32 %v1809, %v1651
        %1814 = vrot.lane.b32.xlu0 %v1810, 127
        %v1815 = vpop.permute.xlu0 %1814
        %1816 = vrot.lane.b32.xlu0 %v1811, 127
        %v1817 = vpop.permute.xlu0 %1816
        %v1820 = vadd.f32 %v1734, %v1815
        %v1821 = vadd.f32 %v1735, %v1817
        %s1822 = sld [smem:[#allocation5 + $0x67]]
        %v1823 = vstv %s1822
        %v1824 = vmul.f32 %v1823, %v1650
        %v1825 = vmul.f32 %v1823, %v1651
        %1828 = vrot.lane.b32.xlu0 %v1824, 127
        %v1829 = vpop.permute.xlu0 %1828
        %1830 = vrot.lane.b32.xlu0 %v1825, 127
        %v1831 = vpop.permute.xlu0 %1830
        %v1834 = vadd.f32 %v1740, %v1829
        %v1835 = vadd.f32 %v1741, %v1831
        %s1836 = sld [smem:[#allocation5 + $0xa7]]
        %v1837 = vstv %s1836
        %v1838 = vmul.f32 %v1837, %v1650
        %v1839 = vmul.f32 %v1837, %v1651
        %1842 = vrot.lane.b32.xlu0 %v1838, 127
        %v1843 = vpop.permute.xlu0 %1842
        %1844 = vrot.lane.b32.xlu0 %v1839, 127
        %v1845 = vpop.permute.xlu0 %1844
        %v1848 = vadd.f32 %v1746, %v1843
        %v1849 = vadd.f32 %v1747, %v1845
        %s1850 = sld [smem:[#allocation5 + $0x2d]]
        %v1851 = vstv %s1850
        %v1852 = vmul.f32 %v1851, %v1650
        %v1853 = vmul.f32 %v1851, %v1651
        %1856 = vrot.lane.b32.xlu0 %v1852, 127
        %v1857 = vpop.permute.xlu0 %1856
        %1858 = vrot.lane.b32.xlu0 %v1853, 127
        %v1859 = vpop.permute.xlu0 %1858
        %v1862 = vadd.f32 %v1794, %v1857
        %v1863 = vadd.f32 %v1795, %v1859
        %s1864 = sld [smem:[#allocation5 + $0x6d]]
        %v1865 = vstv %s1864
        %v1866 = vmul.f32 %v1865, %v1650
        %v1867 = vmul.f32 %v1865, %v1651
        %1870 = vrot.lane.b32.xlu0 %v1866, 127
        %v1871 = vpop.permute.xlu0 %1870
        %1872 = vrot.lane.b32.xlu0 %v1867, 127
        %v1873 = vpop.permute.xlu0 %1872
        %v1876 = vadd.f32 %v1800, %v1871
        %v1877 = vadd.f32 %v1801, %v1873
        %s1878 = sld [smem:[#allocation5 + $0xad]]
        %v1879 = vstv %s1878
        %v1880 = vmul.f32 %v1879, %v1650
        %v1881 = vmul.f32 %v1879, %v1651
        %1884 = vrot.lane.b32.xlu0 %v1880, 127
        %v1885 = vpop.permute.xlu0 %1884
        %1886 = vrot.lane.b32.xlu0 %v1881, 127
        %v1887 = vpop.permute.xlu0 %1886
        %v1890 = vadd.f32 %v1806, %v1885
        %v1891 = vadd.f32 %v1807, %v1887
        %v1892 = vld [vmem:[%s1527 + $0x2] sm:$0xff]
        %v1893 = vld [vmem:[%s1527 + $0xa] sm:$0xff]
        %s1894 = sld [smem:[#allocation5 + $0x2a]]
        %v1895 = vstv %s1894
        %v1896 = vmul.f32 %v1895, %v1892
        %v1897 = vmul.f32 %v1895, %v1893
        %v1898 = vadd.f32 %v1760, %v1896
        %v1899 = vadd.f32 %v1761, %v1897
        %s1900 = sld [smem:[#allocation5 + $0x6a]]
        %v1901 = vstv %s1900
        %v1902 = vmul.f32 %v1901, %v1892
        %v1903 = vmul.f32 %v1901, %v1893
        %v1904 = vadd.f32 %v1774, %v1902
        %v1905 = vadd.f32 %v1775, %v1903
        %s1906 = sld [smem:[#allocation5 + $0xaa]]
        %v1907 = vstv %s1906
        %v1908 = vmul.f32 %v1907, %v1892
        %v1909 = vmul.f32 %v1907, %v1893
        %v1910 = vadd.f32 %v1788, %v1908
        %v1911 = vadd.f32 %v1789, %v1909
        %s1912 = sld [smem:[#allocation5 + $0x2b]]
        %v1913 = vstv %s1912
        %v1914 = vmul.f32 %v1913, %v1892
        %v1915 = vmul.f32 %v1913, %v1893
        %1918 = vrot.lane.b32.xlu0 %v1914, 127
        %v1919 = vpop.permute.xlu0 %1918
        %1920 = vrot.lane.b32.xlu0 %v1915, 127
        %v1921 = vpop.permute.xlu0 %1920
        %v1924 = vadd.f32 %v1898, %v1919
        %v1925 = vadd.f32 %v1899, %v1921
        %s1926 = sld [smem:[#allocation5 + $0x6b]]
        %v1927 = vstv %s1926
        %v1928 = vmul.f32 %v1927, %v1892
        %v1929 = vmul.f32 %v1927, %v1893
        %1932 = vrot.lane.b32.xlu0 %v1928, 127
        %v1933 = vpop.permute.xlu0 %1932
        %1934 = vrot.lane.b32.xlu0 %v1929, 127
        %v1935 = vpop.permute.xlu0 %1934
        %v1938 = vadd.f32 %v1904, %v1933
        %v1939 = vadd.f32 %v1905, %v1935
        %s1940 = sld [smem:[#allocation5 + $0xab]]
        %v1941 = vstv %s1940
        %v1942 = vmul.f32 %v1941, %v1892
        %v1943 = vmul.f32 %v1941, %v1893
        %1946 = vrot.lane.b32.xlu0 %v1942, 127
        %v1947 = vpop.permute.xlu0 %1946
        %1948 = vrot.lane.b32.xlu0 %v1943, 127
        %v1949 = vpop.permute.xlu0 %1948
        %v1952 = vadd.f32 %v1910, %v1947
        %v1953 = vadd.f32 %v1911, %v1949
        %s1954 = sld [smem:[#allocation5 + $0x2e]]
        %v1955 = vstv %s1954
        %v1956 = vmul.f32 %v1955, %v1892
        %v1957 = vmul.f32 %v1955, %v1893
        %v1958 = vadd.f32 %v1862, %v1956
        %v1959 = vadd.f32 %v1863, %v1957
        %s1960 = sld [smem:[#allocation5 + $0x6e]]
        %v1961 = vstv %s1960
        %v1962 = vmul.f32 %v1961, %v1892
        %v1963 = vmul.f32 %v1961, %v1893
        %v1964 = vadd.f32 %v1876, %v1962
        %v1965 = vadd.f32 %v1877, %v1963
        %s1966 = sld [smem:[#allocation5 + $0xae]]
        %v1967 = vstv %s1966
        %v1968 = vmul.f32 %v1967, %v1892
        %v1969 = vmul.f32 %v1967, %v1893
        %v1970 = vadd.f32 %v1890, %v1968
        %v1971 = vadd.f32 %v1891, %v1969
        %s1972 = sld [smem:[#allocation5 + $0x2f]]
        %v1973 = vstv %s1972
        %v1974 = vmul.f32 %v1973, %v1892
        %v1975 = vmul.f32 %v1973, %v1893
        %1978 = vrot.lane.b32.xlu0 %v1974, 127
        %v1979 = vpop.permute.xlu0 %1978
        %1980 = vrot.lane.b32.xlu0 %v1975, 127
        %v1981 = vpop.permute.xlu0 %1980
        %v1984 = vadd.f32 %v1958, %v1979
        %v1985 = vadd.f32 %v1959, %v1981
        %s1986 = sld [smem:[#allocation5 + $0x6f]]
        %v1987 = vstv %s1986
        %v1988 = vmul.f32 %v1987, %v1892
        %v1989 = vmul.f32 %v1987, %v1893
        %1992 = vrot.lane.b32.xlu0 %v1988, 127
        %v1993 = vpop.permute.xlu0 %1992
        %1994 = vrot.lane.b32.xlu0 %v1989, 127
        %v1995 = vpop.permute.xlu0 %1994
        %v1998 = vadd.f32 %v1964, %v1993
        %v1999 = vadd.f32 %v1965, %v1995
        %s2000 = sld [smem:[#allocation5 + $0xaf]]
        %v2001 = vstv %s2000
        %v2002 = vmul.f32 %v2001, %v1892
        %v2003 = vmul.f32 %v2001, %v1893
        %2006 = vrot.lane.b32.xlu0 %v2002, 127
        %v2007 = vpop.permute.xlu0 %2006
        %2008 = vrot.lane.b32.xlu0 %v2003, 127
        %v2009 = vpop.permute.xlu0 %2008
        %v2012 = vadd.f32 %v1970, %v2007
        %v2013 = vadd.f32 %v1971, %v2009
        %s2014 = scalar_lea.vmem [#allocation2], 72
        %v2015 = vld [vmem:[%s2014] sm:$0xff]
        %v2016 = vld [vmem:[%s2014 + $0x8] sm:$0xff]
        %s2017 = sld [smem:[#allocation5 + $0x30]]
        %v2018 = vstv %s2017
        %v2019 = vmul.f32 %v2018, %v2015
        %v2020 = vmul.f32 %v2018, %v2016
        %v2021 = vadd.f32 %v1700, %v2019
        %v2022 = vadd.f32 %v1701, %v2020
        %s2023 = sld [smem:[#allocation5 + $0x70]]
        %v2024 = vstv %s2023
        %v2025 = vmul.f32 %v2024, %v2015
        %v2026 = vmul.f32 %v2024, %v2016
        %v2027 = vadd.f32 %v1714, %v2025
        %v2028 = vadd.f32 %v1715, %v2026
        %s2029 = sld [smem:[#allocation5 + $0xb0]]
        %v2030 = vstv %s2029
        %v2031 = vmul.f32 %v2030, %v2015
        %v2032 = vmul.f32 %v2030, %v2016
        %v2033 = vadd.f32 %v1728, %v2031
        %v2034 = vadd.f32 %v1729, %v2032
        %s2035 = sld [smem:[#allocation5 + $0x31]]
        %v2036 = vstv %s2035
        %v2037 = vmul.f32 %v2036, %v2015
        %v2038 = vmul.f32 %v2036, %v2016
        %2041 = vrot.lane.b32.xlu0 %v2037, 127
        %v2042 = vpop.permute.xlu0 %2041
        %2043 = vrot.lane.b32.xlu0 %v2038, 127
        %v2044 = vpop.permute.xlu0 %2043
        %v2047 = vadd.f32 %v2021, %v2042
        %v2048 = vadd.f32 %v2022, %v2044
        %s2049 = sld [smem:[#allocation5 + $0x71]]
        %v2050 = vstv %s2049
        %v2051 = vmul.f32 %v2050, %v2015
        %v2052 = vmul.f32 %v2050, %v2016
        %2055 = vrot.lane.b32.xlu0 %v2051, 127
        %v2056 = vpop.permute.xlu0 %2055
        %2057 = vrot.lane.b32.xlu0 %v2052, 127
        %v2058 = vpop.permute.xlu0 %2057
        %v2061 = vadd.f32 %v2027, %v2056
        %v2062 = vadd.f32 %v2028, %v2058
        %s2063 = sld [smem:[#allocation5 + $0xb1]]
        %v2064 = vstv %s2063
        %v2065 = vmul.f32 %v2064, %v2015
        %v2066 = vmul.f32 %v2064, %v2016
        %2069 = vrot.lane.b32.xlu0 %v2065, 127
        %v2070 = vpop.permute.xlu0 %2069
        %2071 = vrot.lane.b32.xlu0 %v2066, 127
        %v2072 = vpop.permute.xlu0 %2071
        %v2075 = vadd.f32 %v2033, %v2070
        %v2076 = vadd.f32 %v2034, %v2072
        %s2077 = sld [smem:[#allocation5 + $0x34]]
        %v2078 = vstv %s2077
        %v2079 = vmul.f32 %v2078, %v2015
        %v2080 = vmul.f32 %v2078, %v2016
        %v2081 = vadd.f32 %v1820, %v2079
        %v2082 = vadd.f32 %v1821, %v2080
        %s2083 = sld [smem:[#allocation5 + $0x74]]
        %v2084 = vstv %s2083
        %v2085 = vmul.f32 %v2084, %v2015
        %v2086 = vmul.f32 %v2084, %v2016
        %v2087 = vadd.f32 %v1834, %v2085
        %v2088 = vadd.f32 %v1835, %v2086
        %s2089 = sld [smem:[#allocation5 + $0xb4]]
        %v2090 = vstv %s2089
        %v2091 = vmul.f32 %v2090, %v2015
        %v2092 = vmul.f32 %v2090, %v2016
        %v2093 = vadd.f32 %v1848, %v2091
        %v2094 = vadd.f32 %v1849, %v2092
        %s2095 = sld [smem:[#allocation5 + $0x35]]
        %v2096 = vstv %s2095
        %v2097 = vmul.f32 %v2096, %v2015
        %v2098 = vmul.f32 %v2096, %v2016
        %2101 = vrot.lane.b32.xlu0 %v2097, 127
        %v2102 = vpop.permute.xlu0 %2101
        %2103 = vrot.lane.b32.xlu0 %v2098, 127
        %v2104 = vpop.permute.xlu0 %2103
        %v2107 = vadd.f32 %v2081, %v2102
        %v2108 = vadd.f32 %v2082, %v2104
        %s2109 = sld [smem:[#allocation5 + $0x75]]
        %v2110 = vstv %s2109
        %v2111 = vmul.f32 %v2110, %v2015
        %v2112 = vmul.f32 %v2110, %v2016
        %2115 = vrot.lane.b32.xlu0 %v2111, 127
        %v2116 = vpop.permute.xlu0 %2115
        %2117 = vrot.lane.b32.xlu0 %v2112, 127
        %v2118 = vpop.permute.xlu0 %2117
        %v2121 = vadd.f32 %v2087, %v2116
        %v2122 = vadd.f32 %v2088, %v2118
        %s2123 = sld [smem:[#allocation5 + $0xb5]]
        %v2124 = vstv %s2123
        %v2125 = vmul.f32 %v2124, %v2015
        %v2126 = vmul.f32 %v2124, %v2016
        %2129 = vrot.lane.b32.xlu0 %v2125, 127
        %v2130 = vpop.permute.xlu0 %2129
        %2131 = vrot.lane.b32.xlu0 %v2126, 127
        %v2132 = vpop.permute.xlu0 %2131
        %v2135 = vadd.f32 %v2093, %v2130
        %v2136 = vadd.f32 %v2094, %v2132
        %v2137 = vld [vmem:[%s2014 + $0x1] sm:$0xff]
        %v2138 = vld [vmem:[%s2014 + $0x9] sm:$0xff]
        %s2139 = sld [smem:[#allocation5 + $0x32]]
        %v2140 = vstv %s2139
        %v2141 = vmul.f32 %v2140, %v2137
        %v2142 = vmul.f32 %v2140, %v2138
        %v2143 = vadd.f32 %v2047, %v2141
        %v2144 = vadd.f32 %v2048, %v2142
        %s2145 = sld [smem:[#allocation5 + $0x72]]
        %v2146 = vstv %s2145
        %v2147 = vmul.f32 %v2146, %v2137
        %v2148 = vmul.f32 %v2146, %v2138
        %v2149 = vadd.f32 %v2061, %v2147
        %v2150 = vadd.f32 %v2062, %v2148
        %s2151 = sld [smem:[#allocation5 + $0xb2]]
        %v2152 = vstv %s2151
        %v2153 = vmul.f32 %v2152, %v2137
        %v2154 = vmul.f32 %v2152, %v2138
        %v2155 = vadd.f32 %v2075, %v2153
        %v2156 = vadd.f32 %v2076, %v2154
        %s2157 = sld [smem:[#allocation5 + $0x38]]
        %v2158 = vstv %s2157
        %v2159 = vmul.f32 %v2158, %v2137
        %v2160 = vmul.f32 %v2158, %v2138
        %v2161 = vadd.f32 %v1924, %v2159
        %v2162 = vadd.f32 %v1925, %v2160
        %s2163 = sld [smem:[#allocation5 + $0x78]]
        %v2164 = vstv %s2163
        %v2165 = vmul.f32 %v2164, %v2137
        %v2166 = vmul.f32 %v2164, %v2138
        %v2167 = vadd.f32 %v1938, %v2165
        %v2168 = vadd.f32 %v1939, %v2166
        %s2169 = sld [smem:[#allocation5 + $0xb8]]
        %v2170 = vstv %s2169
        %v2171 = vmul.f32 %v2170, %v2137
        %v2172 = vmul.f32 %v2170, %v2138
        %v2173 = vadd.f32 %v1952, %v2171
        %v2174 = vadd.f32 %v1953, %v2172
        %s2175 = sld [smem:[#allocation5 + $0x33]]
        %v2176 = vstv %s2175
        %v2177 = vmul.f32 %v2176, %v2137
        %v2178 = vmul.f32 %v2176, %v2138
        %2181 = vrot.lane.b32.xlu0 %v2177, 127
        %v2182 = vpop.permute.xlu0 %2181
        %2183 = vrot.lane.b32.xlu0 %v2178, 127
        %v2184 = vpop.permute.xlu0 %2183
        %v2187 = vadd.f32 %v2143, %v2182
        %v2188 = vadd.f32 %v2144, %v2184
        %s2189 = sld [smem:[#allocation5 + $0x73]]
        %v2190 = vstv %s2189
        %v2191 = vmul.f32 %v2190, %v2137
        %v2192 = vmul.f32 %v2190, %v2138
        %2195 = vrot.lane.b32.xlu0 %v2191, 127
        %v2196 = vpop.permute.xlu0 %2195
        %2197 = vrot.lane.b32.xlu0 %v2192, 127
        %v2198 = vpop.permute.xlu0 %2197
        %v2201 = vadd.f32 %v2149, %v2196
        %v2202 = vadd.f32 %v2150, %v2198
        %s2203 = sld [smem:[#allocation5 + $0xb3]]
        %v2204 = vstv %s2203
        %v2205 = vmul.f32 %v2204, %v2137
        %v2206 = vmul.f32 %v2204, %v2138
        %2209 = vrot.lane.b32.xlu0 %v2205, 127
        %v2210 = vpop.permute.xlu0 %2209
        %2211 = vrot.lane.b32.xlu0 %v2206, 127
        %v2212 = vpop.permute.xlu0 %2211
        %v2215 = vadd.f32 %v2155, %v2210
        %v2216 = vadd.f32 %v2156, %v2212
        %s2217 = sld [smem:[#allocation5 + $0x36]]
        %v2218 = vstv %s2217
        %v2219 = vmul.f32 %v2218, %v2137
        %v2220 = vmul.f32 %v2218, %v2138
        %v2221 = vadd.f32 %v2107, %v2219
        %v2222 = vadd.f32 %v2108, %v2220
        %s2223 = sld [smem:[#allocation5 + $0x76]]
        %v2224 = vstv %s2223
        %v2225 = vmul.f32 %v2224, %v2137
        %v2226 = vmul.f32 %v2224, %v2138
        %v2227 = vadd.f32 %v2121, %v2225
        %v2228 = vadd.f32 %v2122, %v2226
        %s2229 = sld [smem:[#allocation5 + $0xb6]]
        %v2230 = vstv %s2229
        %v2231 = vmul.f32 %v2230, %v2137
        %v2232 = vmul.f32 %v2230, %v2138
        %v2233 = vadd.f32 %v2135, %v2231
        %v2234 = vadd.f32 %v2136, %v2232
        %s2235 = sld [smem:[#allocation5 + $0x39]]
        %v2236 = vstv %s2235
        %v2237 = vmul.f32 %v2236, %v2137
        %v2238 = vmul.f32 %v2236, %v2138
        %2241 = vrot.lane.b32.xlu0 %v2237, 127
        %v2242 = vpop.permute.xlu0 %2241
        %2243 = vrot.lane.b32.xlu0 %v2238, 127
        %v2244 = vpop.permute.xlu0 %2243
        %v2247 = vadd.f32 %v2161, %v2242
        %v2248 = vadd.f32 %v2162, %v2244
        %s2249 = sld [smem:[#allocation5 + $0x79]]
        %v2250 = vstv %s2249
        %v2251 = vmul.f32 %v2250, %v2137
        %v2252 = vmul.f32 %v2250, %v2138
        %2255 = vrot.lane.b32.xlu0 %v2251, 127
        %v2256 = vpop.permute.xlu0 %2255
        %2257 = vrot.lane.b32.xlu0 %v2252, 127
        %v2258 = vpop.permute.xlu0 %2257
        %v2261 = vadd.f32 %v2167, %v2256
        %v2262 = vadd.f32 %v2168, %v2258
        %s2263 = sld [smem:[#allocation5 + $0xb9]]
        %v2264 = vstv %s2263
        %v2265 = vmul.f32 %v2264, %v2137
        %v2266 = vmul.f32 %v2264, %v2138
        %2269 = vrot.lane.b32.xlu0 %v2265, 127
        %v2270 = vpop.permute.xlu0 %2269
        %2271 = vrot.lane.b32.xlu0 %v2266, 127
        %v2272 = vpop.permute.xlu0 %2271
        %v2275 = vadd.f32 %v2173, %v2270
        %v2276 = vadd.f32 %v2174, %v2272
        %s2277 = sld [smem:[#allocation5 + $0x3c]]
        %v2278 = vstv %s2277
        %v2279 = vmul.f32 %v2278, %v2137
        %v2280 = vmul.f32 %v2278, %v2138
        %v2281 = vadd.f32 %v1984, %v2279
        %v2282 = vadd.f32 %v1985, %v2280
        %s2283 = sld [smem:[#allocation5 + $0x7c]]
        %v2284 = vstv %s2283
        %v2285 = vmul.f32 %v2284, %v2137
        %v2286 = vmul.f32 %v2284, %v2138
        %v2287 = vadd.f32 %v1998, %v2285
        %v2288 = vadd.f32 %v1999, %v2286
        %s2289 = sld [smem:[#allocation5 + $0xbc]]
        %v2290 = vstv %s2289
        %v2291 = vmul.f32 %v2290, %v2137
        %v2292 = vmul.f32 %v2290, %v2138
        %v2293 = vadd.f32 %v2012, %v2291
        %v2294 = vadd.f32 %v2013, %v2292
        %s2295 = sld [smem:[#allocation5 + $0x37]]
        %v2296 = vstv %s2295
        %v2297 = vmul.f32 %v2296, %v2137
        %v2298 = vmul.f32 %v2296, %v2138
        %2301 = vrot.lane.b32.xlu0 %v2297, 127
        %v2302 = vpop.permute.xlu0 %2301
        %2303 = vrot.lane.b32.xlu0 %v2298, 127
        %v2304 = vpop.permute.xlu0 %2303
        %v2307 = vadd.f32 %v2221, %v2302
        %v2308 = vadd.f32 %v2222, %v2304
        %s2309 = sld [smem:[#allocation5 + $0x77]]
        %v2310 = vstv %s2309
        %v2311 = vmul.f32 %v2310, %v2137
        %v2312 = vmul.f32 %v2310, %v2138
        %2315 = vrot.lane.b32.xlu0 %v2311, 127
        %v2316 = vpop.permute.xlu0 %2315
        %2317 = vrot.lane.b32.xlu0 %v2312, 127
        %v2318 = vpop.permute.xlu0 %2317
        %v2321 = vadd.f32 %v2227, %v2316
        %v2322 = vadd.f32 %v2228, %v2318
        %s2323 = sld [smem:[#allocation5 + $0xb7]]
        %v2324 = vstv %s2323
        %v2325 = vmul.f32 %v2324, %v2137
        %v2326 = vmul.f32 %v2324, %v2138
        %2329 = vrot.lane.b32.xlu0 %v2325, 127
        %v2330 = vpop.permute.xlu0 %2329
        %2331 = vrot.lane.b32.xlu0 %v2326, 127
        %v2332 = vpop.permute.xlu0 %2331
        %v2335 = vadd.f32 %v2233, %v2330
        %v2336 = vadd.f32 %v2234, %v2332
        %s2337 = sld [smem:[#allocation5 + $0x3d]]
        %v2338 = vstv %s2337
        %v2339 = vmul.f32 %v2338, %v2137
        %v2340 = vmul.f32 %v2338, %v2138
        %2343 = vrot.lane.b32.xlu0 %v2339, 127
        %v2344 = vpop.permute.xlu0 %2343
        %2345 = vrot.lane.b32.xlu0 %v2340, 127
        %v2346 = vpop.permute.xlu0 %2345
        %v2349 = vadd.f32 %v2281, %v2344
        %v2350 = vadd.f32 %v2282, %v2346
        %s2351 = sld [smem:[#allocation5 + $0x7d]]
        %v2352 = vstv %s2351
        %v2353 = vmul.f32 %v2352, %v2137
        %v2354 = vmul.f32 %v2352, %v2138
        %2357 = vrot.lane.b32.xlu0 %v2353, 127
        %v2358 = vpop.permute.xlu0 %2357
        %2359 = vrot.lane.b32.xlu0 %v2354, 127
        %v2360 = vpop.permute.xlu0 %2359
        %v2363 = vadd.f32 %v2287, %v2358
        %v2364 = vadd.f32 %v2288, %v2360
        %s2365 = sld [smem:[#allocation5 + $0xbd]]
        %v2366 = vstv %s2365
        %v2367 = vmul.f32 %v2366, %v2137
        %v2368 = vmul.f32 %v2366, %v2138
        %2371 = vrot.lane.b32.xlu0 %v2367, 127
        %v2372 = vpop.permute.xlu0 %2371
        %2373 = vrot.lane.b32.xlu0 %v2368, 127
        %v2374 = vpop.permute.xlu0 %2373
        %v2377 = vadd.f32 %v2293, %v2372
        %v2378 = vadd.f32 %v2294, %v2374
        %v2379 = vld [vmem:[%s2014 + $0x2] sm:$0xff]
        %v2380 = vld [vmem:[%s2014 + $0xa] sm:$0xff]
        %s2381 = sld [smem:[#allocation5 + $0x3a]]
        %v2382 = vstv %s2381
        %v2383 = vmul.f32 %v2382, %v2379
        %v2384 = vmul.f32 %v2382, %v2380
        %v2385 = vadd.f32 %v2247, %v2383
        %v2386 = vadd.f32 %v2248, %v2384
        %s2387 = sld [smem:[#allocation5 + $0x7a]]
        %v2388 = vstv %s2387
        %v2389 = vmul.f32 %v2388, %v2379
        %v2390 = vmul.f32 %v2388, %v2380
        %v2391 = vadd.f32 %v2261, %v2389
        %v2392 = vadd.f32 %v2262, %v2390
        %s2393 = sld [smem:[#allocation5 + $0xba]]
        %v2394 = vstv %s2393
        %v2395 = vmul.f32 %v2394, %v2379
        %v2396 = vmul.f32 %v2394, %v2380
        %v2397 = vadd.f32 %v2275, %v2395
        %v2398 = vadd.f32 %v2276, %v2396
        %s2399 = sld [smem:[#allocation5 + $0x3b]]
        %v2400 = vstv %s2399
        %v2401 = vmul.f32 %v2400, %v2379
        %v2402 = vmul.f32 %v2400, %v2380
        %2405 = vrot.lane.b32.xlu0 %v2401, 127
        %v2406 = vpop.permute.xlu0 %2405
        %2407 = vrot.lane.b32.xlu0 %v2402, 127
        %v2408 = vpop.permute.xlu0 %2407
        %v2411 = vadd.f32 %v2385, %v2406
        %v2412 = vadd.f32 %v2386, %v2408
        %s2413 = sld [smem:[#allocation5 + $0x7b]]
        %v2414 = vstv %s2413
        %v2415 = vmul.f32 %v2414, %v2379
        %v2416 = vmul.f32 %v2414, %v2380
        %2419 = vrot.lane.b32.xlu0 %v2415, 127
        %v2420 = vpop.permute.xlu0 %2419
        %2421 = vrot.lane.b32.xlu0 %v2416, 127
        %v2422 = vpop.permute.xlu0 %2421
        %v2425 = vadd.f32 %v2391, %v2420
        %v2426 = vadd.f32 %v2392, %v2422
        %s2427 = sld [smem:[#allocation5 + $0xbb]]
        %v2428 = vstv %s2427
        %v2429 = vmul.f32 %v2428, %v2379
        %v2430 = vmul.f32 %v2428, %v2380
        %2433 = vrot.lane.b32.xlu0 %v2429, 127
        %v2434 = vpop.permute.xlu0 %2433
        %2435 = vrot.lane.b32.xlu0 %v2430, 127
        %v2436 = vpop.permute.xlu0 %2435
        %v2439 = vadd.f32 %v2397, %v2434
        %v2440 = vadd.f32 %v2398, %v2436
        %s2441 = sld [smem:[#allocation5 + $0x3e]]
        %v2442 = vstv %s2441
        %v2443 = vmul.f32 %v2442, %v2379
        %v2444 = vmul.f32 %v2442, %v2380
        %v2445 = vadd.f32 %v2349, %v2443
        %v2446 = vadd.f32 %v2350, %v2444
        %s2447 = sld [smem:[#allocation5 + $0x7e]]
        %v2448 = vstv %s2447
        %v2449 = vmul.f32 %v2448, %v2379
        %v2450 = vmul.f32 %v2448, %v2380
        %v2451 = vadd.f32 %v2363, %v2449
        %v2452 = vadd.f32 %v2364, %v2450
        %s2453 = sld [smem:[#allocation5 + $0xbe]]
        %v2454 = vstv %s2453
        %v2455 = vmul.f32 %v2454, %v2379
        %v2456 = vmul.f32 %v2454, %v2380
        %v2457 = vadd.f32 %v2377, %v2455
        %v2458 = vadd.f32 %v2378, %v2456
        %s2459 = sld [smem:[#allocation5 + $0x3f]]
        %v2460 = vstv %s2459
        %v2461 = vmul.f32 %v2460, %v2379
        %v2462 = vmul.f32 %v2460, %v2380
        %2465 = vrot.lane.b32.xlu0 %v2461, 127
        %v2466 = vpop.permute.xlu0 %2465
        %2467 = vrot.lane.b32.xlu0 %v2462, 127
        %v2468 = vpop.permute.xlu0 %2467
        %v2471 = vadd.f32 %v2445, %v2466
        %v2472 = vadd.f32 %v2446, %v2468
        %s2473 = sld [smem:[#allocation5 + $0x7f]]
        %v2474 = vstv %s2473
        %v2475 = vmul.f32 %v2474, %v2379
        %v2476 = vmul.f32 %v2474, %v2380
        %2479 = vrot.lane.b32.xlu0 %v2475, 127
        %v2480 = vpop.permute.xlu0 %2479
        %2481 = vrot.lane.b32.xlu0 %v2476, 127
        %v2482 = vpop.permute.xlu0 %2481
        %v2485 = vadd.f32 %v2451, %v2480
        %v2486 = vadd.f32 %v2452, %v2482
        %s2487 = sld [smem:[#allocation5 + $0xbf]]
        %v2488 = vstv %s2487
        %v2489 = vmul.f32 %v2488, %v2379
        %v2490 = vmul.f32 %v2488, %v2380
        %2493 = vrot.lane.b32.xlu0 %v2489, 127
        %v2494 = vpop.permute.xlu0 %2493
        %2495 = vrot.lane.b32.xlu0 %v2490, 127
        %v2496 = vpop.permute.xlu0 %2495
        %v2499 = vadd.f32 %v2457, %v2494
        %v2500 = vadd.f32 %v2458, %v2496
        %2503 = vrot.lane.b32.xlu0 %v2307, 127
        %v2504 = vpop.permute.xlu0 %2503
        %2505 = vrot.lane.b32.xlu0 %v2308, 127
        %v2506 = vpop.permute.xlu0 %2505
        %vm2507 = vcmask 130048
        %v2508 = vsel %vm2507, %v2504, 0
        %v2510 = vsel %vm2507, %v2506, 0
        %2512 = vmatprep.subr.mxu0 0.0
        %2513 = vmatpush1.msra.mxu0 %v518
        %2514 = vmatprep.subr.mxu0 0.0
        %2515 = vmatpush1.msra.mxu0 %v519
        %2516 = vmatprep.subr.mxu0 0.0
        %2517 = vmatpush1.msra.mxu0 0.0
        %2518 = vmatprep.subr.mxu0 0.0
        %2519 = vmatpush1.msra.mxu0 0.0
        %2520 = vmatprep.subr.mxu0 0.0
        %2521 = vmatpush1.msra.mxu0 0.0
        %2522 = vmatprep.subr.mxu0 0.0
        %2523 = vmatpush1.msra.mxu0 0.0
        %2524 = vmatprep.subr.mxu0 0.0
        %2525 = vmatpush1.msra.mxu0 0.0
        %2526 = vmatprep.subr.mxu0 0.0
        %2527 = vmatpush1.msra.mxu0 0.0
        %2528 = vmatprep.subr.mxu0 0.0
        %2529 = vmatpush1.msra.mxu0 0.0
        %2530 = vmatprep.subr.mxu0 0.0
        %2531 = vmatpush1.msra.mxu0 0.0
        %2532 = vmatprep.subr.mxu0 0.0
        %2533 = vmatpush1.msra.mxu0 0.0
        %2534 = vmatprep.subr.mxu0 0.0
        %2535 = vmatpush1.msra.mxu0 0.0
        %2536 = vmatprep.subr.mxu0 0.0
        %2537 = vmatpush1.msra.mxu0 0.0
        %2538 = vmatprep.subr.mxu0 0.0
        %2539 = vmatpush1.msra.mxu0 0.0
        %2540 = vmatprep.subr.mxu0 0.0
        %2541 = vmatpush1.msra.mxu0 0.0
        %2542 = vmatprep.subr.mxu0 0.0
        %2543 = vmatpush1.msra.mxu0 0.0
        %2544 = vmatprep.subr.mxu0 0.0
        %2545 = vmatpush1.msra.mxu0 0.0
        %2546 = vmatprep.subr.mxu0 0.0
        %2547 = vmatpush1.msra.mxu0 0.0
        %2548 = vmatprep.subr.mxu0 0.0
        %2549 = vmatpush1.msra.mxu0 0.0
        %2550 = vmatprep.subr.mxu0 0.0
        %2551 = vmatpush1.msra.mxu0 0.0
        %2552 = vmatprep.subr.mxu0 0.0
        %2553 = vmatpush1.msra.mxu0 0.0
        %2554 = vmatprep.subr.mxu0 0.0
        %2555 = vmatpush1.msra.mxu0 0.0
        %2556 = vmatprep.subr.mxu0 0.0
        %2557 = vmatpush1.msra.mxu0 0.0
        %2558 = vmatprep.subr.mxu0 0.0
        %2559 = vmatpush1.msra.mxu0 0.0
        %2560 = vmatprep.subr.mxu0 0.0
        %2561 = vmatpush1.msra.mxu0 0.0
        %2562 = vmatprep.subr.mxu0 0.0
        %2563 = vmatpush1.msra.mxu0 0.0
        %2564 = vmatprep.subr.mxu0 0.0
        %2565 = vmatpush1.msra.mxu0 0.0
        %2566 = vmatprep.subr.mxu0 0.0
        %2567 = vmatpush1.msra.mxu0 0.0
        %2568 = vmatprep.subr.mxu0 0.0
        %2569 = vmatpush1.msra.mxu0 0.0
        %2570 = vmatprep.subr.mxu0 0.0
        %2571 = vmatpush1.msra.mxu0 0.0
        %2572 = vmatprep.subr.mxu0 0.0
        %2573 = vmatpush1.msra.mxu0 0.0
        %2574 = vmatprep.subr.mxu0 0.0
        %2575 = vmatpush1.msra.mxu0 0.0
        %2576 = vmatprep.mubr.f32.mxu0 0.0
        %2577 = vmatmul.mubr.f32.gmra.mrb[0].mxu0 %v2508
        %v2578 = vpop.f32.mrb[0].mxu0
        %v2579 = vadd.f32 0.0, %v2578
        %v2580 = vpop.f32.mrb[0].mxu0
        %2581 = vmatprep.mubr.f32.mxu0 0.0
        %2582 = vmatmul.mubr.f32.gmra.mrb[0].mxu0 %v2510
        %v2583 = vpop.f32.mrb[0].mxu0
        %v2584 = vadd.f32 0.0, %v2583
        %v2585 = vpop.f32.mrb[0].mxu0
        %2586 = vdwg.mxu0
        %v2588 = vsel %vm2507, %v2187, 0
        %v2591 = vsel %vm2507, %v2188, 0
        %2593 = vmatprep.subr.mxu0 0.0
        %2594 = vmatpush1.msra.mxu0 %v510
        %2595 = vmatprep.subr.mxu0 0.0
        %2596 = vmatpush1.msra.mxu0 %v511
        %2597 = vmatprep.subr.mxu0 0.0
        %2598 = vmatpush1.msra.mxu0 0.0
        %2599 = vmatprep.subr.mxu0 0.0
        %2600 = vmatpush1.msra.mxu0 0.0
        %2601 = vmatprep.subr.mxu0 0.0
        %2602 = vmatpush1.msra.mxu0 0.0
        %2603 = vmatprep.subr.mxu0 0.0
        %2604 = vmatpush1.msra.mxu0 0.0
        %2605 = vmatprep.subr.mxu0 0.0
        %2606 = vmatpush1.msra.mxu0 0.0
        %2607 = vmatprep.subr.mxu0 0.0
        %2608 = vmatpush1.msra.mxu0 0.0
        %2609 = vmatprep.subr.mxu0 0.0
        %2610 = vmatpush1.msra.mxu0 0.0
        %2611 = vmatprep.subr.mxu0 0.0
        %2612 = vmatpush1.msra.mxu0 0.0
        %2613 = vmatprep.subr.mxu0 0.0
        %2614 = vmatpush1.msra.mxu0 0.0
        %2615 = vmatprep.subr.mxu0 0.0
        %2616 = vmatpush1.msra.mxu0 0.0
        %2617 = vmatprep.subr.mxu0 0.0
        %2618 = vmatpush1.msra.mxu0 0.0
        %2619 = vmatprep.subr.mxu0 0.0
        %2620 = vmatpush1.msra.mxu0 0.0
        %2621 = vmatprep.subr.mxu0 0.0
        %2622 = vmatpush1.msra.mxu0 0.0
        %2623 = vmatprep.subr.mxu0 0.0
        %2624 = vmatpush1.msra.mxu0 0.0
        %2625 = vmatprep.subr.mxu0 0.0
        %2626 = vmatpush1.msra.mxu0 0.0
        %2627 = vmatprep.subr.mxu0 0.0
        %2628 = vmatpush1.msra.mxu0 0.0
        %2629 = vmatprep.subr.mxu0 0.0
        %2630 = vmatpush1.msra.mxu0 0.0
        %2631 = vmatprep.subr.mxu0 0.0
        %2632 = vmatpush1.msra.mxu0 0.0
        %2633 = vmatprep.subr.mxu0 0.0
        %2634 = vmatpush1.msra.mxu0 0.0
        %2635 = vmatprep.subr.mxu0 0.0
        %2636 = vmatpush1.msra.mxu0 0.0
        %2637 = vmatprep.subr.mxu0 0.0
        %2638 = vmatpush1.msra.mxu0 0.0
        %2639 = vmatprep.subr.mxu0 0.0
        %2640 = vmatpush1.msra.mxu0 0.0
        %2641 = vmatprep.subr.mxu0 0.0
        %2642 = vmatpush1.msra.mxu0 0.0
        %2643 = vmatprep.subr.mxu0 0.0
        %2644 = vmatpush1.msra.mxu0 0.0
        %2645 = vmatprep.subr.mxu0 0.0
        %2646 = vmatpush1.msra.mxu0 0.0
        %2647 = vmatprep.subr.mxu0 0.0
        %2648 = vmatpush1.msra.mxu0 0.0
        %2649 = vmatprep.subr.mxu0 0.0
        %2650 = vmatpush1.msra.mxu0 0.0
        %2651 = vmatprep.subr.mxu0 0.0
        %2652 = vmatpush1.msra.mxu0 0.0
        %2653 = vmatprep.subr.mxu0 0.0
        %2654 = vmatpush1.msra.mxu0 0.0
        %2655 = vmatprep.subr.mxu0 0.0
        %2656 = vmatpush1.msra.mxu0 0.0
        %2657 = vmatprep.mubr.f32.mxu0 0.0
        %2658 = vmatmul.mubr.f32.gmra.mrb[0].mxu0 %v2588
        %v2659 = vpop.f32.mrb[0].mxu0
        %v2660 = vadd.f32 %v2579, %v2659
        %v2661 = vpop.f32.mrb[0].mxu0
        %2662 = vmatprep.mubr.f32.mxu0 0.0
        %2663 = vmatmul.mubr.f32.gmra.mrb[0].mxu0 %v2591
        %v2664 = vpop.f32.mrb[0].mxu0
        %v2665 = vadd.f32 %v2584, %v2664
        %v2666 = vpop.f32.mrb[0].mxu0
        %2667 = vdwg.mxu0
        %2670 = vrot.lane.b32.xlu0 %v2471, 127
        %v2671 = vpop.permute.xlu0 %2670
        %2672 = vrot.lane.b32.xlu0 %v2472, 127
        %v2673 = vpop.permute.xlu0 %2672
        %v2674 = vsel %vm2507, %v2671, 0
        %v2676 = vsel %vm2507, %v2673, 0
        %2678 = vmatprep.subr.mxu0 0.0
        %2679 = vmatpush1.msra.mxu0 %v518
        %2680 = vmatprep.subr.mxu0 0.0
        %2681 = vmatpush1.msra.mxu0 %v519
        %2682 = vmatprep.subr.mxu0 0.0
        %2683 = vmatpush1.msra.mxu0 0.0
        %2684 = vmatprep.subr.mxu0 0.0
        %2685 = vmatpush1.msra.mxu0 0.0
        %2686 = vmatprep.subr.mxu0 0.0
        %2687 = vmatpush1.msra.mxu0 0.0
        %2688 = vmatprep.subr.mxu0 0.0
        %2689 = vmatpush1.msra.mxu0 0.0
        %2690 = vmatprep.subr.mxu0 0.0
        %2691 = vmatpush1.msra.mxu0 0.0
        %2692 = vmatprep.subr.mxu0 0.0
        %2693 = vmatpush1.msra.mxu0 0.0
        %2694 = vmatprep.subr.mxu0 0.0
        %2695 = vmatpush1.msra.mxu0 0.0
        %2696 = vmatprep.subr.mxu0 0.0
        %2697 = vmatpush1.msra.mxu0 0.0
        %2698 = vmatprep.subr.mxu0 0.0
        %2699 = vmatpush1.msra.mxu0 0.0
        %2700 = vmatprep.subr.mxu0 0.0
        %2701 = vmatpush1.msra.mxu0 0.0
        %2702 = vmatprep.subr.mxu0 0.0
        %2703 = vmatpush1.msra.mxu0 0.0
        %2704 = vmatprep.subr.mxu0 0.0
        %2705 = vmatpush1.msra.mxu0 0.0
        %2706 = vmatprep.subr.mxu0 0.0
        %2707 = vmatpush1.msra.mxu0 0.0
        %2708 = vmatprep.subr.mxu0 0.0
        %2709 = vmatpush1.msra.mxu0 0.0
        %2710 = vmatprep.subr.mxu0 0.0
        %2711 = vmatpush1.msra.mxu0 0.0
        %2712 = vmatprep.subr.mxu0 0.0
        %2713 = vmatpush1.msra.mxu0 0.0
        %2714 = vmatprep.subr.mxu0 0.0
        %2715 = vmatpush1.msra.mxu0 0.0
        %2716 = vmatprep.subr.mxu0 0.0
        %2717 = vmatpush1.msra.mxu0 0.0
        %2718 = vmatprep.subr.mxu0 0.0
        %2719 = vmatpush1.msra.mxu0 0.0
        %2720 = vmatprep.subr.mxu0 0.0
        %2721 = vmatpush1.msra.mxu0 0.0
        %2722 = vmatprep.subr.mxu0 0.0
        %2723 = vmatpush1.msra.mxu0 0.0
        %2724 = vmatprep.subr.mxu0 0.0
        %2725 = vmatpush1.msra.mxu0 0.0
        %2726 = vmatprep.subr.mxu0 0.0
        %2727 = vmatpush1.msra.mxu0 0.0
        %2728 = vmatprep.subr.mxu0 0.0
        %2729 = vmatpush1.msra.mxu0 0.0
        %2730 = vmatprep.subr.mxu0 0.0
        %2731 = vmatpush1.msra.mxu0 0.0
        %2732 = vmatprep.subr.mxu0 0.0
        %2733 = vmatpush1.msra.mxu0 0.0
        %2734 = vmatprep.subr.mxu0 0.0
        %2735 = vmatpush1.msra.mxu0 0.0
        %2736 = vmatprep.subr.mxu0 0.0
        %2737 = vmatpush1.msra.mxu0 0.0
        %2738 = vmatprep.subr.mxu0 0.0
        %2739 = vmatpush1.msra.mxu0 0.0
        %2740 = vmatprep.subr.mxu0 0.0
        %2741 = vmatpush1.msra.mxu0 0.0
        %2742 = vmatprep.mubr.f32.mxu0 0.0
        %2743 = vmatmul.mubr.f32.gmra.mrb[0].mxu0 %v2674
        %v2744 = vpop.f32.mrb[0].mxu0
        %v2745 = vadd.f32 0.0, %v2744
        %v2746 = vpop.f32.mrb[0].mxu0
        %2747 = vmatprep.mubr.f32.mxu0 0.0
        %2748 = vmatmul.mubr.f32.gmra.mrb[0].mxu0 %v2676
        %v2749 = vpop.f32.mrb[0].mxu0
        %v2750 = vadd.f32 0.0, %v2749
        %v2751 = vpop.f32.mrb[0].mxu0
        %2752 = vdwg.mxu0
        %v2754 = vsel %vm2507, %v2411, 0
        %v2757 = vsel %vm2507, %v2412, 0
        %2759 = vmatprep.subr.mxu0 0.0
        %2760 = vmatpush1.msra.mxu0 %v510
        %2761 = vmatprep.subr.mxu0 0.0
        %2762 = vmatpush1.msra.mxu0 %v511
        %2763 = vmatprep.subr.mxu0 0.0
        %2764 = vmatpush1.msra.mxu0 0.0
        %2765 = vmatprep.subr.mxu0 0.0
        %2766 = vmatpush1.msra.mxu0 0.0
        %2767 = vmatprep.subr.mxu0 0.0
        %2768 = vmatpush1.msra.mxu0 0.0
        %2769 = vmatprep.subr.mxu0 0.0
        %2770 = vmatpush1.msra.mxu0 0.0
        %2771 = vmatprep.subr.mxu0 0.0
        %2772 = vmatpush1.msra.mxu0 0.0
        %2773 = vmatprep.subr.mxu0 0.0
        %2774 = vmatpush1.msra.mxu0 0.0
        %2775 = vmatprep.subr.mxu0 0.0
        %2776 = vmatpush1.msra.mxu0 0.0
        %2777 = vmatprep.subr.mxu0 0.0
        %2778 = vmatpush1.msra.mxu0 0.0
        %2779 = vmatprep.subr.mxu0 0.0
        %2780 = vmatpush1.msra.mxu0 0.0
        %2781 = vmatprep.subr.mxu0 0.0
        %2782 = vmatpush1.msra.mxu0 0.0
        %2783 = vmatprep.subr.mxu0 0.0
        %2784 = vmatpush1.msra.mxu0 0.0
        %2785 = vmatprep.subr.mxu0 0.0
        %2786 = vmatpush1.msra.mxu0 0.0
        %2787 = vmatprep.subr.mxu0 0.0
        %2788 = vmatpush1.msra.mxu0 0.0
        %2789 = vmatprep.subr.mxu0 0.0
        %2790 = vmatpush1.msra.mxu0 0.0
        %2791 = vmatprep.subr.mxu0 0.0
        %2792 = vmatpush1.msra.mxu0 0.0
        %2793 = vmatprep.subr.mxu0 0.0
        %2794 = vmatpush1.msra.mxu0 0.0
        %2795 = vmatprep.subr.mxu0 0.0
        %2796 = vmatpush1.msra.mxu0 0.0
        %2797 = vmatprep.subr.mxu0 0.0
        %2798 = vmatpush1.msra.mxu0 0.0
        %2799 = vmatprep.subr.mxu0 0.0
        %2800 = vmatpush1.msra.mxu0 0.0
        %2801 = vmatprep.subr.mxu0 0.0
        %2802 = vmatpush1.msra.mxu0 0.0
        %2803 = vmatprep.subr.mxu0 0.0
        %2804 = vmatpush1.msra.mxu0 0.0
        %2805 = vmatprep.subr.mxu0 0.0
        %2806 = vmatpush1.msra.mxu0 0.0
        %2807 = vmatprep.subr.mxu0 0.0
        %2808 = vmatpush1.msra.mxu0 0.0
        %2809 = vmatprep.subr.mxu0 0.0
        %2810 = vmatpush1.msra.mxu0 0.0
        %2811 = vmatprep.subr.mxu0 0.0
        %2812 = vmatpush1.msra.mxu0 0.0
        %2813 = vmatprep.subr.mxu0 0.0
        %2814 = vmatpush1.msra.mxu0 0.0
        %2815 = vmatprep.subr.mxu0 0.0
        %2816 = vmatpush1.msra.mxu0 0.0
        %2817 = vmatprep.subr.mxu0 0.0
        %2818 = vmatpush1.msra.mxu0 0.0
        %2819 = vmatprep.subr.mxu0 0.0
        %2820 = vmatpush1.msra.mxu0 0.0
        %2821 = vmatprep.subr.mxu0 0.0
        %2822 = vmatpush1.msra.mxu0 0.0
        %2823 = vmatprep.mubr.f32.mxu0 0.0
        %2824 = vmatmul.mubr.f32.gmra.mrb[0].mxu0 %v2754
        %v2825 = vpop.f32.mrb[0].mxu0
        %v2826 = vadd.f32 %v2745, %v2825
        %v2827 = vpop.f32.mrb[0].mxu0
        %2828 = vmatprep.mubr.f32.mxu0 0.0
        %2829 = vmatmul.mubr.f32.gmra.mrb[0].mxu0 %v2757
        %v2830 = vpop.f32.mrb[0].mxu0
        %v2831 = vadd.f32 %v2750, %v2830
        %v2832 = vpop.f32.mrb[0].mxu0
        %2833 = vdwg.mxu0
        %v2835 = vsel %vm2507, %v544, 0
        %v2838 = vsel %vm2507, %v545, 0
        %v2841 = vsel %vm2507, %v546, 0
        %v2844 = vsel %vm2507, %v547, 0
        %2846 = vmatprep.subr.mxu0 0.0
        %2847 = vmatpush1.msra.mxu0 %v2826
        %2848 = vmatprep.subr.mxu0 0.0
        %2849 = vmatpush1.msra.mxu0 %v2831
        %2850 = vmatprep.subr.mxu0 0.0
        %2851 = vmatpush1.msra.mxu0 0.0
        %2852 = vmatprep.subr.mxu0 0.0
        %2853 = vmatpush1.msra.mxu0 0.0
        %2854 = vmatprep.subr.mxu0 0.0
        %2855 = vmatpush1.msra.mxu0 0.0
        %2856 = vmatprep.subr.mxu0 0.0
        %2857 = vmatpush1.msra.mxu0 0.0
        %2858 = vmatprep.subr.mxu0 0.0
        %2859 = vmatpush1.msra.mxu0 0.0
        %2860 = vmatprep.subr.mxu0 0.0
        %2861 = vmatpush1.msra.mxu0 0.0
        %2862 = vmatprep.subr.mxu0 0.0
        %2863 = vmatpush1.msra.mxu0 0.0
        %2864 = vmatprep.subr.mxu0 0.0
        %2865 = vmatpush1.msra.mxu0 0.0
        %2866 = vmatprep.subr.mxu0 0.0
        %2867 = vmatpush1.msra.mxu0 0.0
        %2868 = vmatprep.subr.mxu0 0.0
        %2869 = vmatpush1.msra.mxu0 0.0
        %2870 = vmatprep.subr.mxu0 0.0
        %2871 = vmatpush1.msra.mxu0 0.0
        %2872 = vmatprep.subr.mxu0 0.0
        %2873 = vmatpush1.msra.mxu0 0.0
        %2874 = vmatprep.subr.mxu0 0.0
        %2875 = vmatpush1.msra.mxu0 0.0
        %2876 = vmatprep.subr.mxu0 0.0
        %2877 = vmatpush1.msra.mxu0 0.0
        %2878 = vmatprep.subr.mxu0 0.0
        %2879 = vmatpush1.msra.mxu0 0.0
        %2880 = vmatprep.subr.mxu0 0.0
        %2881 = vmatpush1.msra.mxu0 0.0
        %2882 = vmatprep.subr.mxu0 0.0
        %2883 = vmatpush1.msra.mxu0 0.0
        %2884 = vmatprep.subr.mxu0 0.0
        %2885 = vmatpush1.msra.mxu0 0.0
        %2886 = vmatprep.subr.mxu0 0.0
        %2887 = vmatpush1.msra.mxu0 0.0
        %2888 = vmatprep.subr.mxu0 0.0
        %2889 = vmatpush1.msra.mxu0 0.0
        %2890 = vmatprep.subr.mxu0 0.0
        %2891 = vmatpush1.msra.mxu0 0.0
        %2892 = vmatprep.subr.mxu0 0.0
        %2893 = vmatpush1.msra.mxu0 0.0
        %2894 = vmatprep.subr.mxu0 0.0
        %2895 = vmatpush1.msra.mxu0 0.0
        %2896 = vmatprep.subr.mxu0 0.0
        %2897 = vmatpush1.msra.mxu0 0.0
        %2898 = vmatprep.subr.mxu0 0.0
        %2899 = vmatpush1.msra.mxu0 0.0
        %2900 = vmatprep.subr.mxu0 0.0
        %2901 = vmatpush1.msra.mxu0 0.0
        %2902 = vmatprep.subr.mxu0 0.0
        %2903 = vmatpush1.msra.mxu0 0.0
        %2904 = vmatprep.subr.mxu0 0.0
        %2905 = vmatpush1.msra.mxu0 0.0
        %2906 = vmatprep.subr.mxu0 0.0
        %2907 = vmatpush1.msra.mxu0 0.0
        %2908 = vmatprep.subr.mxu0 0.0
        %2909 = vmatpush1.msra.mxu0 0.0
        %2910 = vmatprep.mubr.f32.mxu0 0.0
        %2911 = vmatmul.mubr.f32.gmra.mrb[0].mxu0 %v2835
        %v2912 = vpop.f32.mrb[0].mxu0
        %v2913 = vadd.f32 0.0, %v2912
        %v2914 = vpop.f32.mrb[0].mxu0
        %2915 = vmatprep.mubr.f32.mxu0 0.0
        %2916 = vmatmul.mubr.f32.gmra.mrb[0].mxu0 %v2838
        %v2917 = vpop.f32.mrb[0].mxu0
        %v2918 = vadd.f32 0.0, %v2917
        %v2919 = vpop.f32.mrb[0].mxu0
        %2920 = vmatprep.mubr.f32.mxu0 0.0
        %2921 = vmatmul.mubr.f32.gmra.mrb[0].mxu0 %v2841
        %v2922 = vpop.f32.mrb[0].mxu0
        %v2923 = vadd.f32 0.0, %v2922
        %v2924 = vpop.f32.mrb[0].mxu0
        %2925 = vmatprep.mubr.f32.mxu0 0.0
        %2926 = vmatmul.mubr.f32.gmra.mrb[0].mxu0 %v2844
        %v2927 = vpop.f32.mrb[0].mxu0
        %v2928 = vadd.f32 0.0, %v2927
        %v2929 = vpop.f32.mrb[0].mxu0
        %2930 = vdwg.mxu0
        %v2932 = vsel %vm2507, %v531, 0
        %v2935 = vsel %vm2507, %v532, 0
        %v2938 = vsel %vm2507, %v533, 0
        %v2941 = vsel %vm2507, %v534, 0
        %2943 = vmatprep.subr.mxu0 0.0
        %2944 = vmatpush1.msra.mxu0 %v2660
        %2945 = vmatprep.subr.mxu0 0.0
        %2946 = vmatpush1.msra.mxu0 %v2665
        %2947 = vmatprep.subr.mxu0 0.0
        %2948 = vmatpush1.msra.mxu0 0.0
        %2949 = vmatprep.subr.mxu0 0.0
        %2950 = vmatpush1.msra.mxu0 0.0
        %2951 = vmatprep.subr.mxu0 0.0
        %2952 = vmatpush1.msra.mxu0 0.0
        %2953 = vmatprep.subr.mxu0 0.0
        %2954 = vmatpush1.msra.mxu0 0.0
        %2955 = vmatprep.subr.mxu0 0.0
        %2956 = vmatpush1.msra.mxu0 0.0
        %2957 = vmatprep.subr.mxu0 0.0
        %2958 = vmatpush1.msra.mxu0 0.0
        %2959 = vmatprep.subr.mxu0 0.0
        %2960 = vmatpush1.msra.mxu0 0.0
        %2961 = vmatprep.subr.mxu0 0.0
        %2962 = vmatpush1.msra.mxu0 0.0
        %2963 = vmatprep.subr.mxu0 0.0
        %2964 = vmatpush1.msra.mxu0 0.0
        %2965 = vmatprep.subr.mxu0 0.0
        %2966 = vmatpush1.msra.mxu0 0.0
        %2967 = vmatprep.subr.mxu0 0.0
        %2968 = vmatpush1.msra.mxu0 0.0
        %2969 = vmatprep.subr.mxu0 0.0
        %2970 = vmatpush1.msra.mxu0 0.0
        %2971 = vmatprep.subr.mxu0 0.0
        %2972 = vmatpush1.msra.mxu0 0.0
        %2973 = vmatprep.subr.mxu0 0.0
        %2974 = vmatpush1.msra.mxu0 0.0
        %2975 = vmatprep.subr.mxu0 0.0
        %2976 = vmatpush1.msra.mxu0 0.0
        %2977 = vmatprep.subr.mxu0 0.0
        %2978 = vmatpush1.msra.mxu0 0.0
        %2979 = vmatprep.subr.mxu0 0.0
        %2980 = vmatpush1.msra.mxu0 0.0
        %2981 = vmatprep.subr.mxu0 0.0
        %2982 = vmatpush1.msra.mxu0 0.0
        %2983 = vmatprep.subr.mxu0 0.0
        %2984 = vmatpush1.msra.mxu0 0.0
        %2985 = vmatprep.subr.mxu0 0.0
        %2986 = vmatpush1.msra.mxu0 0.0
        %2987 = vmatprep.subr.mxu0 0.0
        %2988 = vmatpush1.msra.mxu0 0.0
        %2989 = vmatprep.subr.mxu0 0.0
        %2990 = vmatpush1.msra.mxu0 0.0
        %2991 = vmatprep.subr.mxu0 0.0
        %2992 = vmatpush1.msra.mxu0 0.0
        %2993 = vmatprep.subr.mxu0 0.0
        %2994 = vmatpush1.msra.mxu0 0.0
        %2995 = vmatprep.subr.mxu0 0.0
        %2996 = vmatpush1.msra.mxu0 0.0
        %2997 = vmatprep.subr.mxu0 0.0
        %2998 = vmatpush1.msra.mxu0 0.0
        %2999 = vmatprep.subr.mxu0 0.0
        %3000 = vmatpush1.msra.mxu0 0.0
        %3001 = vmatprep.subr.mxu0 0.0
        %3002 = vmatpush1.msra.mxu0 0.0
        %3003 = vmatprep.subr.mxu0 0.0
        %3004 = vmatpush1.msra.mxu0 0.0
        %3005 = vmatprep.subr.mxu0 0.0
        %3006 = vmatpush1.msra.mxu0 0.0
        %3007 = vmatprep.mubr.f32.mxu0 0.0
        %3008 = vmatmul.mubr.f32.gmra.mrb[0].mxu0 %v2932
        %v3009 = vpop.f32.mrb[0].mxu0
        %v3010 = vadd.f32 %v2913, %v3009
        %v3011 = vpop.f32.mrb[0].mxu0
        %3012 = vmatprep.mubr.f32.mxu0 0.0
        %3013 = vmatmul.mubr.f32.gmra.mrb[0].mxu0 %v2935
        %v3014 = vpop.f32.mrb[0].mxu0
        %v3015 = vadd.f32 %v2918, %v3014
        %v3016 = vpop.f32.mrb[0].mxu0
        %3017 = vmatprep.mubr.f32.mxu0 0.0
        %3018 = vmatmul.mubr.f32.gmra.mrb[0].mxu0 %v2938
        %v3019 = vpop.f32.mrb[0].mxu0
        %v3020 = vadd.f32 %v2923, %v3019
        %v3021 = vpop.f32.mrb[0].mxu0
        %3022 = vmatprep.mubr.f32.mxu0 0.0
        %3023 = vmatmul.mubr.f32.gmra.mrb[0].mxu0 %v2941
        %v3024 = vpop.f32.mrb[0].mxu0
        %v3025 = vadd.f32 %v2928, %v3024
        %v3026 = vpop.f32.mrb[0].mxu0
        %3027 = vdwg.mxu0
        %vm3028 = vcmask 261120
        %3029 = vst.msk [vmem:[%s465] sm:$0xff] %vm3028, %v3010
        %3030 = vst.msk [vmem:[%s465 + $0x8] sm:$0xff] %vm3028, %v3015
        %3031 = vst.msk [vmem:[%s465 + $0x10] sm:$0xff] %vm3028, %v3020
        %3032 = vst.msk [vmem:[%s465 + $0x18] sm:$0xff] %vm3028, %v3025
        %3035 = vrot.lane.b32.xlu0 %v2321, 127
        %v3036 = vpop.permute.xlu0 %3035
        %3037 = vrot.lane.b32.xlu0 %v2322, 127
        %v3038 = vpop.permute.xlu0 %3037
        %v3039 = vsel %vm2507, %v3036, 0
        %v3041 = vsel %vm2507, %v3038, 0
        %3043 = vmatprep.subr.mxu0 0.0
        %3044 = vmatpush1.msra.mxu0 %v518
        %3045 = vmatprep.subr.mxu0 0.0
        %3046 = vmatpush1.msra.mxu0 %v519
        %3047 = vmatprep.subr.mxu0 0.0
        %3048 = vmatpush1.msra.mxu0 0.0
        %3049 = vmatprep.subr.mxu0 0.0
        %3050 = vmatpush1.msra.mxu0 0.0
        %3051 = vmatprep.subr.mxu0 0.0
        %3052 = vmatpush1.msra.mxu0 0.0
        %3053 = vmatprep.subr.mxu0 0.0
        %3054 = vmatpush1.msra.mxu0 0.0
        %3055 = vmatprep.subr.mxu0 0.0
        %3056 = vmatpush1.msra.mxu0 0.0
        %3057 = vmatprep.subr.mxu0 0.0
        %3058 = vmatpush1.msra.mxu0 0.0
        %3059 = vmatprep.subr.mxu0 0.0
        %3060 = vmatpush1.msra.mxu0 0.0
        %3061 = vmatprep.subr.mxu0 0.0
        %3062 = vmatpush1.msra.mxu0 0.0
        %3063 = vmatprep.subr.mxu0 0.0
        %3064 = vmatpush1.msra.mxu0 0.0
        %3065 = vmatprep.subr.mxu0 0.0
        %3066 = vmatpush1.msra.mxu0 0.0
        %3067 = vmatprep.subr.mxu0 0.0
        %3068 = vmatpush1.msra.mxu0 0.0
        %3069 = vmatprep.subr.mxu0 0.0
        %3070 = vmatpush1.msra.mxu0 0.0
        %3071 = vmatprep.subr.mxu0 0.0
        %3072 = vmatpush1.msra.mxu0 0.0
        %3073 = vmatprep.subr.mxu0 0.0
        %3074 = vmatpush1.msra.mxu0 0.0
        %3075 = vmatprep.subr.mxu0 0.0
        %3076 = vmatpush1.msra.mxu0 0.0
        %3077 = vmatprep.subr.mxu0 0.0
        %3078 = vmatpush1.msra.mxu0 0.0
        %3079 = vmatprep.subr.mxu0 0.0
        %3080 = vmatpush1.msra.mxu0 0.0
        %3081 = vmatprep.subr.mxu0 0.0
        %3082 = vmatpush1.msra.mxu0 0.0
        %3083 = vmatprep.subr.mxu0 0.0
        %3084 = vmatpush1.msra.mxu0 0.0
        %3085 = vmatprep.subr.mxu0 0.0
        %3086 = vmatpush1.msra.mxu0 0.0
        %3087 = vmatprep.subr.mxu0 0.0
        %3088 = vmatpush1.msra.mxu0 0.0
        %3089 = vmatprep.subr.mxu0 0.0
        %3090 = vmatpush1.msra.mxu0 0.0
        %3091 = vmatprep.subr.mxu0 0.0
        %3092 = vmatpush1.msra.mxu0 0.0
        %3093 = vmatprep.subr.mxu0 0.0
        %3094 = vmatpush1.msra.mxu0 0.0
        %3095 = vmatprep.subr.mxu0 0.0
        %3096 = vmatpush1.msra.mxu0 0.0
        %3097 = vmatprep.subr.mxu0 0.0
        %3098 = vmatpush1.msra.mxu0 0.0
        %3099 = vmatprep.subr.mxu0 0.0
        %3100 = vmatpush1.msra.mxu0 0.0
        %3101 = vmatprep.subr.mxu0 0.0
        %3102 = vmatpush1.msra.mxu0 0.0
        %3103 = vmatprep.subr.mxu0 0.0
        %3104 = vmatpush1.msra.mxu0 0.0
        %3105 = vmatprep.subr.mxu0 0.0
        %3106 = vmatpush1.msra.mxu0 0.0
        %3107 = vmatprep.mubr.f32.mxu0 0.0
        %3108 = vmatmul.mubr.f32.gmra.mrb[0].mxu0 %v3039
        %v3109 = vpop.f32.mrb[0].mxu0
        %v3110 = vadd.f32 0.0, %v3109
        %v3111 = vpop.f32.mrb[0].mxu0
        %3112 = vmatprep.mubr.f32.mxu0 0.0
        %3113 = vmatmul.mubr.f32.gmra.mrb[0].mxu0 %v3041
        %v3114 = vpop.f32.mrb[0].mxu0
        %v3115 = vadd.f32 0.0, %v3114
        %v3116 = vpop.f32.mrb[0].mxu0
        %3117 = vdwg.mxu0
        %v3119 = vsel %vm2507, %v2201, 0
        %v3122 = vsel %vm2507, %v2202, 0
        %3124 = vmatprep.subr.mxu0 0.0
        %3125 = vmatpush1.msra.mxu0 %v510
        %3126 = vmatprep.subr.mxu0 0.0
        %3127 = vmatpush1.msra.mxu0 %v511
        %3128 = vmatprep.subr.mxu0 0.0
        %3129 = vmatpush1.msra.mxu0 0.0
        %3130 = vmatprep.subr.mxu0 0.0
        %3131 = vmatpush1.msra.mxu0 0.0
        %3132 = vmatprep.subr.mxu0 0.0
        %3133 = vmatpush1.msra.mxu0 0.0
        %3134 = vmatprep.subr.mxu0 0.0
        %3135 = vmatpush1.msra.mxu0 0.0
        %3136 = vmatprep.subr.mxu0 0.0
        %3137 = vmatpush1.msra.mxu0 0.0
        %3138 = vmatprep.subr.mxu0 0.0
        %3139 = vmatpush1.msra.mxu0 0.0
        %3140 = vmatprep.subr.mxu0 0.0
        %3141 = vmatpush1.msra.mxu0 0.0
        %3142 = vmatprep.subr.mxu0 0.0
        %3143 = vmatpush1.msra.mxu0 0.0
        %3144 = vmatprep.subr.mxu0 0.0
        %3145 = vmatpush1.msra.mxu0 0.0
        %3146 = vmatprep.subr.mxu0 0.0
        %3147 = vmatpush1.msra.mxu0 0.0
        %3148 = vmatprep.subr.mxu0 0.0
        %3149 = vmatpush1.msra.mxu0 0.0
        %3150 = vmatprep.subr.mxu0 0.0
        %3151 = vmatpush1.msra.mxu0 0.0
        %3152 = vmatprep.subr.mxu0 0.0
        %3153 = vmatpush1.msra.mxu0 0.0
        %3154 = vmatprep.subr.mxu0 0.0
        %3155 = vmatpush1.msra.mxu0 0.0
        %3156 = vmatprep.subr.mxu0 0.0
        %3157 = vmatpush1.msra.mxu0 0.0
        %3158 = vmatprep.subr.mxu0 0.0
        %3159 = vmatpush1.msra.mxu0 0.0
        %3160 = vmatprep.subr.mxu0 0.0
        %3161 = vmatpush1.msra.mxu0 0.0
        %3162 = vmatprep.subr.mxu0 0.0
        %3163 = vmatpush1.msra.mxu0 0.0
        %3164 = vmatprep.subr.mxu0 0.0
        %3165 = vmatpush1.msra.mxu0 0.0
        %3166 = vmatprep.subr.mxu0 0.0
        %3167 = vmatpush1.msra.mxu0 0.0
        %3168 = vmatprep.subr.mxu0 0.0
        %3169 = vmatpush1.msra.mxu0 0.0
        %3170 = vmatprep.subr.mxu0 0.0
        %3171 = vmatpush1.msra.mxu0 0.0
        %3172 = vmatprep.subr.mxu0 0.0
        %3173 = vmatpush1.msra.mxu0 0.0
        %3174 = vmatprep.subr.mxu0 0.0
        %3175 = vmatpush1.msra.mxu0 0.0
        %3176 = vmatprep.subr.mxu0 0.0
        %3177 = vmatpush1.msra.mxu0 0.0
        %3178 = vmatprep.subr.mxu0 0.0
        %3179 = vmatpush1.msra.mxu0 0.0
        %3180 = vmatprep.subr.mxu0 0.0
        %3181 = vmatpush1.msra.mxu0 0.0
        %3182 = vmatprep.subr.mxu0 0.0
        %3183 = vmatpush1.msra.mxu0 0.0
        %3184 = vmatprep.subr.mxu0 0.0
        %3185 = vmatpush1.msra.mxu0 0.0
        %3186 = vmatprep.subr.mxu0 0.0
        %3187 = vmatpush1.msra.mxu0 0.0
        %3188 = vmatprep.mubr.f32.mxu0 0.0
        %3189 = vmatmul.mubr.f32.gmra.mrb[0].mxu0 %v3119
        %v3190 = vpop.f32.mrb[0].mxu0
        %v3191 = vadd.f32 %v3110, %v3190
        %v3192 = vpop.f32.mrb[0].mxu0
        %3193 = vmatprep.mubr.f32.mxu0 0.0
        %3194 = vmatmul.mubr.f32.gmra.mrb[0].mxu0 %v3122
        %v3195 = vpop.f32.mrb[0].mxu0
        %v3196 = vadd.f32 %v3115, %v3195
        %v3197 = vpop.f32.mrb[0].mxu0
        %3198 = vdwg.mxu0
        %3201 = vrot.lane.b32.xlu0 %v2485, 127
        %v3202 = vpop.permute.xlu0 %3201
        %3203 = vrot.lane.b32.xlu0 %v2486, 127
        %v3204 = vpop.permute.xlu0 %3203
        %v3205 = vsel %vm2507, %v3202, 0
        %v3207 = vsel %vm2507, %v3204, 0
        %3209 = vmatprep.subr.mxu0 0.0
        %3210 = vmatpush1.msra.mxu0 %v518
        %3211 = vmatprep.subr.mxu0 0.0
        %3212 = vmatpush1.msra.mxu0 %v519
        %3213 = vmatprep.subr.mxu0 0.0
        %3214 = vmatpush1.msra.mxu0 0.0
        %3215 = vmatprep.subr.mxu0 0.0
        %3216 = vmatpush1.msra.mxu0 0.0
        %3217 = vmatprep.subr.mxu0 0.0
        %3218 = vmatpush1.msra.mxu0 0.0
        %3219 = vmatprep.subr.mxu0 0.0
        %3220 = vmatpush1.msra.mxu0 0.0
        %3221 = vmatprep.subr.mxu0 0.0
        %3222 = vmatpush1.msra.mxu0 0.0
        %3223 = vmatprep.subr.mxu0 0.0
        %3224 = vmatpush1.msra.mxu0 0.0
        %3225 = vmatprep.subr.mxu0 0.0
        %3226 = vmatpush1.msra.mxu0 0.0
        %3227 = vmatprep.subr.mxu0 0.0
        %3228 = vmatpush1.msra.mxu0 0.0
        %3229 = vmatprep.subr.mxu0 0.0
        %3230 = vmatpush1.msra.mxu0 0.0
        %3231 = vmatprep.subr.mxu0 0.0
        %3232 = vmatpush1.msra.mxu0 0.0
        %3233 = vmatprep.subr.mxu0 0.0
        %3234 = vmatpush1.msra.mxu0 0.0
        %3235 = vmatprep.subr.mxu0 0.0
        %3236 = vmatpush1.msra.mxu0 0.0
        %3237 = vmatprep.subr.mxu0 0.0
        %3238 = vmatpush1.msra.mxu0 0.0
        %3239 = vmatprep.subr.mxu0 0.0
        %3240 = vmatpush1.msra.mxu0 0.0
        %3241 = vmatprep.subr.mxu0 0.0
        %3242 = vmatpush1.msra.mxu0 0.0
        %3243 = vmatprep.subr.mxu0 0.0
        %3244 = vmatpush1.msra.mxu0 0.0
        %3245 = vmatprep.subr.mxu0 0.0
        %3246 = vmatpush1.msra.mxu0 0.0
        %3247 = vmatprep.subr.mxu0 0.0
        %3248 = vmatpush1.msra.mxu0 0.0
        %3249 = vmatprep.subr.mxu0 0.0
        %3250 = vmatpush1.msra.mxu0 0.0
        %3251 = vmatprep.subr.mxu0 0.0
        %3252 = vmatpush1.msra.mxu0 0.0
        %3253 = vmatprep.subr.mxu0 0.0
        %3254 = vmatpush1.msra.mxu0 0.0
        %3255 = vmatprep.subr.mxu0 0.0
        %3256 = vmatpush1.msra.mxu0 0.0
        %3257 = vmatprep.subr.mxu0 0.0
        %3258 = vmatpush1.msra.mxu0 0.0
        %3259 = vmatprep.subr.mxu0 0.0
        %3260 = vmatpush1.msra.mxu0 0.0
        %3261 = vmatprep.subr.mxu0 0.0
        %3262 = vmatpush1.msra.mxu0 0.0
        %3263 = vmatprep.subr.mxu0 0.0
        %3264 = vmatpush1.msra.mxu0 0.0
        %3265 = vmatprep.subr.mxu0 0.0
        %3266 = vmatpush1.msra.mxu0 0.0
        %3267 = vmatprep.subr.mxu0 0.0
        %3268 = vmatpush1.msra.mxu0 0.0
        %3269 = vmatprep.subr.mxu0 0.0
        %3270 = vmatpush1.msra.mxu0 0.0
        %3271 = vmatprep.subr.mxu0 0.0
        %3272 = vmatpush1.msra.mxu0 0.0
        %3273 = vmatprep.mubr.f32.mxu0 0.0
        %3274 = vmatmul.mubr.f32.gmra.mrb[0].mxu0 %v3205
        %v3275 = vpop.f32.mrb[0].mxu0
        %v3276 = vadd.f32 0.0, %v3275
        %v3277 = vpop.f32.mrb[0].mxu0
        %3278 = vmatprep.mubr.f32.mxu0 0.0
        %3279 = vmatmul.mubr.f32.gmra.mrb[0].mxu0 %v3207
        %v3280 = vpop.f32.mrb[0].mxu0
        %v3281 = vadd.f32 0.0, %v3280
        %v3282 = vpop.f32.mrb[0].mxu0
        %3283 = vdwg.mxu0
        %v3285 = vsel %vm2507, %v2425, 0
        %v3288 = vsel %vm2507, %v2426, 0
        %3290 = vmatprep.subr.mxu0 0.0
        %3291 = vmatpush1.msra.mxu0 %v510
        %3292 = vmatprep.subr.mxu0 0.0
        %3293 = vmatpush1.msra.mxu0 %v511
        %3294 = vmatprep.subr.mxu0 0.0
        %3295 = vmatpush1.msra.mxu0 0.0
        %3296 = vmatprep.subr.mxu0 0.0
        %3297 = vmatpush1.msra.mxu0 0.0
        %3298 = vmatprep.subr.mxu0 0.0
        %3299 = vmatpush1.msra.mxu0 0.0
        %3300 = vmatprep.subr.mxu0 0.0
        %3301 = vmatpush1.msra.mxu0 0.0
        %3302 = vmatprep.subr.mxu0 0.0
        %3303 = vmatpush1.msra.mxu0 0.0
        %3304 = vmatprep.subr.mxu0 0.0
        %3305 = vmatpush1.msra.mxu0 0.0
        %3306 = vmatprep.subr.mxu0 0.0
        %3307 = vmatpush1.msra.mxu0 0.0
        %3308 = vmatprep.subr.mxu0 0.0
        %3309 = vmatpush1.msra.mxu0 0.0
        %3310 = vmatprep.subr.mxu0 0.0
        %3311 = vmatpush1.msra.mxu0 0.0
        %3312 = vmatprep.subr.mxu0 0.0
        %3313 = vmatpush1.msra.mxu0 0.0
        %3314 = vmatprep.subr.mxu0 0.0
        %3315 = vmatpush1.msra.mxu0 0.0
        %3316 = vmatprep.subr.mxu0 0.0
        %3317 = vmatpush1.msra.mxu0 0.0
        %3318 = vmatprep.subr.mxu0 0.0
        %3319 = vmatpush1.msra.mxu0 0.0
        %3320 = vmatprep.subr.mxu0 0.0
        %3321 = vmatpush1.msra.mxu0 0.0
        %3322 = vmatprep.subr.mxu0 0.0
        %3323 = vmatpush1.msra.mxu0 0.0
        %3324 = vmatprep.subr.mxu0 0.0
        %3325 = vmatpush1.msra.mxu0 0.0
        %3326 = vmatprep.subr.mxu0 0.0
        %3327 = vmatpush1.msra.mxu0 0.0
        %3328 = vmatprep.subr.mxu0 0.0
        %3329 = vmatpush1.msra.mxu0 0.0
        %3330 = vmatprep.subr.mxu0 0.0
        %3331 = vmatpush1.msra.mxu0 0.0
        %3332 = vmatprep.subr.mxu0 0.0
        %3333 = vmatpush1.msra.mxu0 0.0
        %3334 = vmatprep.subr.mxu0 0.0
        %3335 = vmatpush1.msra.mxu0 0.0
        %3336 = vmatprep.subr.mxu0 0.0
        %3337 = vmatpush1.msra.mxu0 0.0
        %3338 = vmatprep.subr.mxu0 0.0
        %3339 = vmatpush1.msra.mxu0 0.0
        %3340 = vmatprep.subr.mxu0 0.0
        %3341 = vmatpush1.msra.mxu0 0.0
        %3342 = vmatprep.subr.mxu0 0.0
        %3343 = vmatpush1.msra.mxu0 0.0
        %3344 = vmatprep.subr.mxu0 0.0
        %3345 = vmatpush1.msra.mxu0 0.0
        %3346 = vmatprep.subr.mxu0 0.0
        %3347 = vmatpush1.msra.mxu0 0.0
        %3348 = vmatprep.subr.mxu0 0.0
        %3349 = vmatpush1.msra.mxu0 0.0
        %3350 = vmatprep.subr.mxu0 0.0
        %3351 = vmatpush1.msra.mxu0 0.0
        %3352 = vmatprep.subr.mxu0 0.0
        %3353 = vmatpush1.msra.mxu0 0.0
        %3354 = vmatprep.mubr.f32.mxu0 0.0
        %3355 = vmatmul.mubr.f32.gmra.mrb[0].mxu0 %v3285
        %v3356 = vpop.f32.mrb[0].mxu0
        %v3357 = vadd.f32 %v3276, %v3356
        %v3358 = vpop.f32.mrb[0].mxu0
        %3359 = vmatprep.mubr.f32.mxu0 0.0
        %3360 = vmatmul.mubr.f32.gmra.mrb[0].mxu0 %v3288
        %v3361 = vpop.f32.mrb[0].mxu0
        %v3362 = vadd.f32 %v3281, %v3361
        %v3363 = vpop.f32.mrb[0].mxu0
        %3364 = vdwg.mxu0
        %3365 = vmatprep.subr.mxu0 0.0
        %3366 = vmatpush1.msra.mxu0 %v3357
        %3367 = vmatprep.subr.mxu0 0.0
        %3368 = vmatpush1.msra.mxu0 %v3362
        %3369 = vmatprep.subr.mxu0 0.0
        %3370 = vmatpush1.msra.mxu0 0.0
        %3371 = vmatprep.subr.mxu0 0.0
        %3372 = vmatpush1.msra.mxu0 0.0
        %3373 = vmatprep.subr.mxu0 0.0
        %3374 = vmatpush1.msra.mxu0 0.0
        %3375 = vmatprep.subr.mxu0 0.0
        %3376 = vmatpush1.msra.mxu0 0.0
        %3377 = vmatprep.subr.mxu0 0.0
        %3378 = vmatpush1.msra.mxu0 0.0
        %3379 = vmatprep.subr.mxu0 0.0
        %3380 = vmatpush1.msra.mxu0 0.0
        %3381 = vmatprep.subr.mxu0 0.0
        %3382 = vmatpush1.msra.mxu0 0.0
        %3383 = vmatprep.subr.mxu0 0.0
        %3384 = vmatpush1.msra.mxu0 0.0
        %3385 = vmatprep.subr.mxu0 0.0
        %3386 = vmatpush1.msra.mxu0 0.0
        %3387 = vmatprep.subr.mxu0 0.0
        %3388 = vmatpush1.msra.mxu0 0.0
        %3389 = vmatprep.subr.mxu0 0.0
        %3390 = vmatpush1.msra.mxu0 0.0
        %3391 = vmatprep.subr.mxu0 0.0
        %3392 = vmatpush1.msra.mxu0 0.0
        %3393 = vmatprep.subr.mxu0 0.0
        %3394 = vmatpush1.msra.mxu0 0.0
        %3395 = vmatprep.subr.mxu0 0.0
        %3396 = vmatpush1.msra.mxu0 0.0
        %3397 = vmatprep.subr.mxu0 0.0
        %3398 = vmatpush1.msra.mxu0 0.0
        %3399 = vmatprep.subr.mxu0 0.0
        %3400 = vmatpush1.msra.mxu0 0.0
        %3401 = vmatprep.subr.mxu0 0.0
        %3402 = vmatpush1.msra.mxu0 0.0
        %3403 = vmatprep.subr.mxu0 0.0
        %3404 = vmatpush1.msra.mxu0 0.0
        %3405 = vmatprep.subr.mxu0 0.0
        %3406 = vmatpush1.msra.mxu0 0.0
        %3407 = vmatprep.subr.mxu0 0.0
        %3408 = vmatpush1.msra.mxu0 0.0
        %3409 = vmatprep.subr.mxu0 0.0
        %3410 = vmatpush1.msra.mxu0 0.0
        %3411 = vmatprep.subr.mxu0 0.0
        %3412 = vmatpush1.msra.mxu0 0.0
        %3413 = vmatprep.subr.mxu0 0.0
        %3414 = vmatpush1.msra.mxu0 0.0
        %3415 = vmatprep.subr.mxu0 0.0
        %3416 = vmatpush1.msra.mxu0 0.0
        %3417 = vmatprep.subr.mxu0 0.0
        %3418 = vmatpush1.msra.mxu0 0.0
        %3419 = vmatprep.subr.mxu0 0.0
        %3420 = vmatpush1.msra.mxu0 0.0
        %3421 = vmatprep.subr.mxu0 0.0
        %3422 = vmatpush1.msra.mxu0 0.0
        %3423 = vmatprep.subr.mxu0 0.0
        %3424 = vmatpush1.msra.mxu0 0.0
        %3425 = vmatprep.subr.mxu0 0.0
        %3426 = vmatpush1.msra.mxu0 0.0
        %3427 = vmatprep.subr.mxu0 0.0
        %3428 = vmatpush1.msra.mxu0 0.0
        %3429 = vmatprep.mubr.f32.mxu0 0.0
        %3430 = vmatmul.mubr.f32.gmra.mrb[0].mxu0 %v2835
        %v3431 = vpop.f32.mrb[0].mxu0
        %v3432 = vadd.f32 0.0, %v3431
        %v3433 = vpop.f32.mrb[0].mxu0
        %3434 = vmatprep.mubr.f32.mxu0 0.0
        %3435 = vmatmul.mubr.f32.gmra.mrb[0].mxu0 %v2838
        %v3436 = vpop.f32.mrb[0].mxu0
        %v3437 = vadd.f32 0.0, %v3436
        %v3438 = vpop.f32.mrb[0].mxu0
        %3439 = vmatprep.mubr.f32.mxu0 0.0
        %3440 = vmatmul.mubr.f32.gmra.mrb[0].mxu0 %v2841
        %v3441 = vpop.f32.mrb[0].mxu0
        %v3442 = vadd.f32 0.0, %v3441
        %v3443 = vpop.f32.mrb[0].mxu0
        %3444 = vmatprep.mubr.f32.mxu0 0.0
        %3445 = vmatmul.mubr.f32.gmra.mrb[0].mxu0 %v2844
        %v3446 = vpop.f32.mrb[0].mxu0
        %v3447 = vadd.f32 0.0, %v3446
        %v3448 = vpop.f32.mrb[0].mxu0
        %3449 = vdwg.mxu0
        %3450 = vmatprep.subr.mxu0 0.0
        %3451 = vmatpush1.msra.mxu0 %v3191
        %3452 = vmatprep.subr.mxu0 0.0
        %3453 = vmatpush1.msra.mxu0 %v3196
        %3454 = vmatprep.subr.mxu0 0.0
        %3455 = vmatpush1.msra.mxu0 0.0
        %3456 = vmatprep.subr.mxu0 0.0
        %3457 = vmatpush1.msra.mxu0 0.0
        %3458 = vmatprep.subr.mxu0 0.0
        %3459 = vmatpush1.msra.mxu0 0.0
        %3460 = vmatprep.subr.mxu0 0.0
        %3461 = vmatpush1.msra.mxu0 0.0
        %3462 = vmatprep.subr.mxu0 0.0
        %3463 = vmatpush1.msra.mxu0 0.0
        %3464 = vmatprep.subr.mxu0 0.0
        %3465 = vmatpush1.msra.mxu0 0.0
        %3466 = vmatprep.subr.mxu0 0.0
        %3467 = vmatpush1.msra.mxu0 0.0
        %3468 = vmatprep.subr.mxu0 0.0
        %3469 = vmatpush1.msra.mxu0 0.0
        %3470 = vmatprep.subr.mxu0 0.0
        %3471 = vmatpush1.msra.mxu0 0.0
        %3472 = vmatprep.subr.mxu0 0.0
        %3473 = vmatpush1.msra.mxu0 0.0
        %3474 = vmatprep.subr.mxu0 0.0
        %3475 = vmatpush1.msra.mxu0 0.0
        %3476 = vmatprep.subr.mxu0 0.0
        %3477 = vmatpush1.msra.mxu0 0.0
        %3478 = vmatprep.subr.mxu0 0.0
        %3479 = vmatpush1.msra.mxu0 0.0
        %3480 = vmatprep.subr.mxu0 0.0
        %3481 = vmatpush1.msra.mxu0 0.0
        %3482 = vmatprep.subr.mxu0 0.0
        %3483 = vmatpush1.msra.mxu0 0.0
        %3484 = vmatprep.subr.mxu0 0.0
        %3485 = vmatpush1.msra.mxu0 0.0
        %3486 = vmatprep.subr.mxu0 0.0
        %3487 = vmatpush1.msra.mxu0 0.0
        %3488 = vmatprep.subr.mxu0 0.0
        %3489 = vmatpush1.msra.mxu0 0.0
        %3490 = vmatprep.subr.mxu0 0.0
        %3491 = vmatpush1.msra.mxu0 0.0
        %3492 = vmatprep.subr.mxu0 0.0
        %3493 = vmatpush1.msra.mxu0 0.0
        %3494 = vmatprep.subr.mxu0 0.0
        %3495 = vmatpush1.msra.mxu0 0.0
        %3496 = vmatprep.subr.mxu0 0.0
        %3497 = vmatpush1.msra.mxu0 0.0
        %3498 = vmatprep.subr.mxu0 0.0
        %3499 = vmatpush1.msra.mxu0 0.0
        %3500 = vmatprep.subr.mxu0 0.0
        %3501 = vmatpush1.msra.mxu0 0.0
        %3502 = vmatprep.subr.mxu0 0.0
        %3503 = vmatpush1.msra.mxu0 0.0
        %3504 = vmatprep.subr.mxu0 0.0
        %3505 = vmatpush1.msra.mxu0 0.0
        %3506 = vmatprep.subr.mxu0 0.0
        %3507 = vmatpush1.msra.mxu0 0.0
        %3508 = vmatprep.subr.mxu0 0.0
        %3509 = vmatpush1.msra.mxu0 0.0
        %3510 = vmatprep.subr.mxu0 0.0
        %3511 = vmatpush1.msra.mxu0 0.0
        %3512 = vmatprep.subr.mxu0 0.0
        %3513 = vmatpush1.msra.mxu0 0.0
        %3514 = vmatprep.mubr.f32.mxu0 0.0
        %3515 = vmatmul.mubr.f32.gmra.mrb[0].mxu0 %v2932
        %v3516 = vpop.f32.mrb[0].mxu0
        %v3517 = vadd.f32 %v3432, %v3516
        %v3518 = vpop.f32.mrb[0].mxu0
        %3519 = vmatprep.mubr.f32.mxu0 0.0
        %3520 = vmatmul.mubr.f32.gmra.mrb[0].mxu0 %v2935
        %v3521 = vpop.f32.mrb[0].mxu0
        %v3522 = vadd.f32 %v3437, %v3521
        %v3523 = vpop.f32.mrb[0].mxu0
        %3524 = vmatprep.mubr.f32.mxu0 0.0
        %3525 = vmatmul.mubr.f32.gmra.mrb[0].mxu0 %v2938
        %v3526 = vpop.f32.mrb[0].mxu0
        %v3527 = vadd.f32 %v3442, %v3526
        %v3528 = vpop.f32.mrb[0].mxu0
        %3529 = vmatprep.mubr.f32.mxu0 0.0
        %3530 = vmatmul.mubr.f32.gmra.mrb[0].mxu0 %v2941
        %v3531 = vpop.f32.mrb[0].mxu0
        %v3532 = vadd.f32 %v3447, %v3531
        %v3533 = vpop.f32.mrb[0].mxu0
        %3534 = vdwg.mxu0
        %s3535 = scalar_lea.vmem %s465, 32 [#allocation10]
        %3536 = vst.msk [vmem:[%s3535] sm:$0xff] %vm3028, %v3517
        %3537 = vst.msk [vmem:[%s3535 + $0x8] sm:$0xff] %vm3028, %v3522
        %3538 = vst.msk [vmem:[%s3535 + $0x10] sm:$0xff] %vm3028, %v3527
        %3539 = vst.msk [vmem:[%s3535 + $0x18] sm:$0xff] %vm3028, %v3532
        %3542 = vrot.lane.b32.xlu0 %v2335, 127
        %v3543 = vpop.permute.xlu0 %3542
        %3544 = vrot.lane.b32.xlu0 %v2336, 127
        %v3545 = vpop.permute.xlu0 %3544
        %v3546 = vsel %vm2507, %v3543, 0
        %v3548 = vsel %vm2507, %v3545, 0
        %3550 = vmatprep.subr.mxu0 0.0
        %3551 = vmatpush1.msra.mxu0 %v518
        %3552 = vmatprep.subr.mxu0 0.0
        %3553 = vmatpush1.msra.mxu0 %v519
        %3554 = vmatprep.subr.mxu0 0.0
        %3555 = vmatpush1.msra.mxu0 0.0
        %3556 = vmatprep.subr.mxu0 0.0
        %3557 = vmatpush1.msra.mxu0 0.0
        %3558 = vmatprep.subr.mxu0 0.0
        %3559 = vmatpush1.msra.mxu0 0.0
        %3560 = vmatprep.subr.mxu0 0.0
        %3561 = vmatpush1.msra.mxu0 0.0
        %3562 = vmatprep.subr.mxu0 0.0
        %3563 = vmatpush1.msra.mxu0 0.0
        %3564 = vmatprep.subr.mxu0 0.0
        %3565 = vmatpush1.msra.mxu0 0.0
        %3566 = vmatprep.subr.mxu0 0.0
        %3567 = vmatpush1.msra.mxu0 0.0
        %3568 = vmatprep.subr.mxu0 0.0
        %3569 = vmatpush1.msra.mxu0 0.0
        %3570 = vmatprep.subr.mxu0 0.0
        %3571 = vmatpush1.msra.mxu0 0.0
        %3572 = vmatprep.subr.mxu0 0.0
        %3573 = vmatpush1.msra.mxu0 0.0
        %3574 = vmatprep.subr.mxu0 0.0
        %3575 = vmatpush1.msra.mxu0 0.0
        %3576 = vmatprep.subr.mxu0 0.0
        %3577 = vmatpush1.msra.mxu0 0.0
        %3578 = vmatprep.subr.mxu0 0.0
        %3579 = vmatpush1.msra.mxu0 0.0
        %3580 = vmatprep.subr.mxu0 0.0
        %3581 = vmatpush1.msra.mxu0 0.0
        %3582 = vmatprep.subr.mxu0 0.0
        %3583 = vmatpush1.msra.mxu0 0.0
        %3584 = vmatprep.subr.mxu0 0.0
        %3585 = vmatpush1.msra.mxu0 0.0
        %3586 = vmatprep.subr.mxu0 0.0
        %3587 = vmatpush1.msra.mxu0 0.0
        %3588 = vmatprep.subr.mxu0 0.0
        %3589 = vmatpush1.msra.mxu0 0.0
        %3590 = vmatprep.subr.mxu0 0.0
        %3591 = vmatpush1.msra.mxu0 0.0
        %3592 = vmatprep.subr.mxu0 0.0
        %3593 = vmatpush1.msra.mxu0 0.0
        %3594 = vmatprep.subr.mxu0 0.0
        %3595 = vmatpush1.msra.mxu0 0.0
        %3596 = vmatprep.subr.mxu0 0.0
        %3597 = vmatpush1.msra.mxu0 0.0
        %3598 = vmatprep.subr.mxu0 0.0
        %3599 = vmatpush1.msra.mxu0 0.0
        %3600 = vmatprep.subr.mxu0 0.0
        %3601 = vmatpush1.msra.mxu0 0.0
        %3602 = vmatprep.subr.mxu0 0.0
        %3603 = vmatpush1.msra.mxu0 0.0
        %3604 = vmatprep.subr.mxu0 0.0
        %3605 = vmatpush1.msra.mxu0 0.0
        %3606 = vmatprep.subr.mxu0 0.0
        %3607 = vmatpush1.msra.mxu0 0.0
        %3608 = vmatprep.subr.mxu0 0.0
        %3609 = vmatpush1.msra.mxu0 0.0
        %3610 = vmatprep.subr.mxu0 0.0
        %3611 = vmatpush1.msra.mxu0 0.0
        %3612 = vmatprep.subr.mxu0 0.0
        %3613 = vmatpush1.msra.mxu0 0.0
        %3614 = vmatprep.mubr.f32.mxu0 0.0
        %3615 = vmatmul.mubr.f32.gmra.mrb[0].mxu0 %v3546
        %v3616 = vpop.f32.mrb[0].mxu0
        %v3617 = vadd.f32 0.0, %v3616
        %v3618 = vpop.f32.mrb[0].mxu0
        %3619 = vmatprep.mubr.f32.mxu0 0.0
        %3620 = vmatmul.mubr.f32.gmra.mrb[0].mxu0 %v3548
        %v3621 = vpop.f32.mrb[0].mxu0
        %v3622 = vadd.f32 0.0, %v3621
        %v3623 = vpop.f32.mrb[0].mxu0
        %3624 = vdwg.mxu0
        %v3626 = vsel %vm2507, %v2215, 0
        %v3629 = vsel %vm2507, %v2216, 0
        %3631 = vmatprep.subr.mxu0 0.0
        %3632 = vmatpush1.msra.mxu0 %v510
        %3633 = vmatprep.subr.mxu0 0.0
        %3634 = vmatpush1.msra.mxu0 %v511
        %3635 = vmatprep.subr.mxu0 0.0
        %3636 = vmatpush1.msra.mxu0 0.0
        %3637 = vmatprep.subr.mxu0 0.0
        %3638 = vmatpush1.msra.mxu0 0.0
        %3639 = vmatprep.subr.mxu0 0.0
        %3640 = vmatpush1.msra.mxu0 0.0
        %3641 = vmatprep.subr.mxu0 0.0
        %3642 = vmatpush1.msra.mxu0 0.0
        %3643 = vmatprep.subr.mxu0 0.0
        %3644 = vmatpush1.msra.mxu0 0.0
        %3645 = vmatprep.subr.mxu0 0.0
        %3646 = vmatpush1.msra.mxu0 0.0
        %3647 = vmatprep.subr.mxu0 0.0
        %3648 = vmatpush1.msra.mxu0 0.0
        %3649 = vmatprep.subr.mxu0 0.0
        %3650 = vmatpush1.msra.mxu0 0.0
        %3651 = vmatprep.subr.mxu0 0.0
        %3652 = vmatpush1.msra.mxu0 0.0
        %3653 = vmatprep.subr.mxu0 0.0
        %3654 = vmatpush1.msra.mxu0 0.0
        %3655 = vmatprep.subr.mxu0 0.0
        %3656 = vmatpush1.msra.mxu0 0.0
        %3657 = vmatprep.subr.mxu0 0.0
        %3658 = vmatpush1.msra.mxu0 0.0
        %3659 = vmatprep.subr.mxu0 0.0
        %3660 = vmatpush1.msra.mxu0 0.0
        %3661 = vmatprep.subr.mxu0 0.0
        %3662 = vmatpush1.msra.mxu0 0.0
        %3663 = vmatprep.subr.mxu0 0.0
        %3664 = vmatpush1.msra.mxu0 0.0
        %3665 = vmatprep.subr.mxu0 0.0
        %3666 = vmatpush1.msra.mxu0 0.0
        %3667 = vmatprep.subr.mxu0 0.0
        %3668 = vmatpush1.msra.mxu0 0.0
        %3669 = vmatprep.subr.mxu0 0.0
        %3670 = vmatpush1.msra.mxu0 0.0
        %3671 = vmatprep.subr.mxu0 0.0
        %3672 = vmatpush1.msra.mxu0 0.0
        %3673 = vmatprep.subr.mxu0 0.0
        %3674 = vmatpush1.msra.mxu0 0.0
        %3675 = vmatprep.subr.mxu0 0.0
        %3676 = vmatpush1.msra.mxu0 0.0
        %3677 = vmatprep.subr.mxu0 0.0
        %3678 = vmatpush1.msra.mxu0 0.0
        %3679 = vmatprep.subr.mxu0 0.0
        %3680 = vmatpush1.msra.mxu0 0.0
        %3681 = vmatprep.subr.mxu0 0.0
        %3682 = vmatpush1.msra.mxu0 0.0
        %3683 = vmatprep.subr.mxu0 0.0
        %3684 = vmatpush1.msra.mxu0 0.0
        %3685 = vmatprep.subr.mxu0 0.0
        %3686 = vmatpush1.msra.mxu0 0.0
        %3687 = vmatprep.subr.mxu0 0.0
        %3688 = vmatpush1.msra.mxu0 0.0
        %3689 = vmatprep.subr.mxu0 0.0
        %3690 = vmatpush1.msra.mxu0 0.0
        %3691 = vmatprep.subr.mxu0 0.0
        %3692 = vmatpush1.msra.mxu0 0.0
        %3693 = vmatprep.subr.mxu0 0.0
        %3694 = vmatpush1.msra.mxu0 0.0
        %3695 = vmatprep.mubr.f32.mxu0 0.0
        %3696 = vmatmul.mubr.f32.gmra.mrb[0].mxu0 %v3626
        %v3697 = vpop.f32.mrb[0].mxu0
        %v3698 = vadd.f32 %v3617, %v3697
        %v3699 = vpop.f32.mrb[0].mxu0
        %3700 = vmatprep.mubr.f32.mxu0 0.0
        %3701 = vmatmul.mubr.f32.gmra.mrb[0].mxu0 %v3629
        %v3702 = vpop.f32.mrb[0].mxu0
        %v3703 = vadd.f32 %v3622, %v3702
        %v3704 = vpop.f32.mrb[0].mxu0
        %3705 = vdwg.mxu0
        %3708 = vrot.lane.b32.xlu0 %v2499, 127
        %v3709 = vpop.permute.xlu0 %3708
        %3710 = vrot.lane.b32.xlu0 %v2500, 127
        %v3711 = vpop.permute.xlu0 %3710
        %v3712 = vsel %vm2507, %v3709, 0
        %v3714 = vsel %vm2507, %v3711, 0
        %3716 = vmatprep.subr.mxu0 0.0
        %3717 = vmatpush1.msra.mxu0 %v518
        %3718 = vmatprep.subr.mxu0 0.0
        %3719 = vmatpush1.msra.mxu0 %v519
        %3720 = vmatprep.subr.mxu0 0.0
        %3721 = vmatpush1.msra.mxu0 0.0
        %3722 = vmatprep.subr.mxu0 0.0
        %3723 = vmatpush1.msra.mxu0 0.0
        %3724 = vmatprep.subr.mxu0 0.0
        %3725 = vmatpush1.msra.mxu0 0.0
        %3726 = vmatprep.subr.mxu0 0.0
        %3727 = vmatpush1.msra.mxu0 0.0
        %3728 = vmatprep.subr.mxu0 0.0
        %3729 = vmatpush1.msra.mxu0 0.0
        %3730 = vmatprep.subr.mxu0 0.0
        %3731 = vmatpush1.msra.mxu0 0.0
        %3732 = vmatprep.subr.mxu0 0.0
        %3733 = vmatpush1.msra.mxu0 0.0
        %3734 = vmatprep.subr.mxu0 0.0
        %3735 = vmatpush1.msra.mxu0 0.0
        %3736 = vmatprep.subr.mxu0 0.0
        %3737 = vmatpush1.msra.mxu0 0.0
        %3738 = vmatprep.subr.mxu0 0.0
        %3739 = vmatpush1.msra.mxu0 0.0
        %3740 = vmatprep.subr.mxu0 0.0
        %3741 = vmatpush1.msra.mxu0 0.0
        %3742 = vmatprep.subr.mxu0 0.0
        %3743 = vmatpush1.msra.mxu0 0.0
        %3744 = vmatprep.subr.mxu0 0.0
        %3745 = vmatpush1.msra.mxu0 0.0
        %3746 = vmatprep.subr.mxu0 0.0
        %3747 = vmatpush1.msra.mxu0 0.0
        %3748 = vmatprep.subr.mxu0 0.0
        %3749 = vmatpush1.msra.mxu0 0.0
        %3750 = vmatprep.subr.mxu0 0.0
        %3751 = vmatpush1.msra.mxu0 0.0
        %3752 = vmatprep.subr.mxu0 0.0
        %3753 = vmatpush1.msra.mxu0 0.0
        %3754 = vmatprep.subr.mxu0 0.0
        %3755 = vmatpush1.msra.mxu0 0.0
        %3756 = vmatprep.subr.mxu0 0.0
        %3757 = vmatpush1.msra.mxu0 0.0
        %3758 = vmatprep.subr.mxu0 0.0
        %3759 = vmatpush1.msra.mxu0 0.0
        %3760 = vmatprep.subr.mxu0 0.0
        %3761 = vmatpush1.msra.mxu0 0.0
        %3762 = vmatprep.subr.mxu0 0.0
        %3763 = vmatpush1.msra.mxu0 0.0
        %3764 = vmatprep.subr.mxu0 0.0
        %3765 = vmatpush1.msra.mxu0 0.0
        %3766 = vmatprep.subr.mxu0 0.0
        %3767 = vmatpush1.msra.mxu0 0.0
        %3768 = vmatprep.subr.mxu0 0.0
        %3769 = vmatpush1.msra.mxu0 0.0
        %3770 = vmatprep.subr.mxu0 0.0
        %3771 = vmatpush1.msra.mxu0 0.0
        %3772 = vmatprep.subr.mxu0 0.0
        %3773 = vmatpush1.msra.mxu0 0.0
        %3774 = vmatprep.subr.mxu0 0.0
        %3775 = vmatpush1.msra.mxu0 0.0
        %3776 = vmatprep.subr.mxu0 0.0
        %3777 = vmatpush1.msra.mxu0 0.0
        %3778 = vmatprep.subr.mxu0 0.0
        %3779 = vmatpush1.msra.mxu0 0.0
        %3780 = vmatprep.mubr.f32.mxu0 0.0
        %3781 = vmatmul.mubr.f32.gmra.mrb[0].mxu0 %v3712
        %v3782 = vpop.f32.mrb[0].mxu0
        %v3783 = vadd.f32 0.0, %v3782
        %v3784 = vpop.f32.mrb[0].mxu0
        %3785 = vmatprep.mubr.f32.mxu0 0.0
        %3786 = vmatmul.mubr.f32.gmra.mrb[0].mxu0 %v3714
        %v3787 = vpop.f32.mrb[0].mxu0
        %v3788 = vadd.f32 0.0, %v3787
        %v3789 = vpop.f32.mrb[0].mxu0
        %3790 = vdwg.mxu0
        %v3792 = vsel %vm2507, %v2439, 0
        %v3795 = vsel %vm2507, %v2440, 0
        %3797 = vmatprep.subr.mxu0 0.0
        %3798 = vmatpush1.msra.mxu0 %v510
        %3799 = vmatprep.subr.mxu0 0.0
        %3800 = vmatpush1.msra.mxu0 %v511
        %3801 = vmatprep.subr.mxu0 0.0
        %3802 = vmatpush1.msra.mxu0 0.0
        %3803 = vmatprep.subr.mxu0 0.0
        %3804 = vmatpush1.msra.mxu0 0.0
        %3805 = vmatprep.subr.mxu0 0.0
        %3806 = vmatpush1.msra.mxu0 0.0
        %3807 = vmatprep.subr.mxu0 0.0
        %3808 = vmatpush1.msra.mxu0 0.0
        %3809 = vmatprep.subr.mxu0 0.0
        %3810 = vmatpush1.msra.mxu0 0.0
        %3811 = vmatprep.subr.mxu0 0.0
        %3812 = vmatpush1.msra.mxu0 0.0
        %3813 = vmatprep.subr.mxu0 0.0
        %3814 = vmatpush1.msra.mxu0 0.0
        %3815 = vmatprep.subr.mxu0 0.0
        %3816 = vmatpush1.msra.mxu0 0.0
        %3817 = vmatprep.subr.mxu0 0.0
        %3818 = vmatpush1.msra.mxu0 0.0
        %3819 = vmatprep.subr.mxu0 0.0
        %3820 = vmatpush1.msra.mxu0 0.0
        %3821 = vmatprep.subr.mxu0 0.0
        %3822 = vmatpush1.msra.mxu0 0.0
        %3823 = vmatprep.subr.mxu0 0.0
        %3824 = vmatpush1.msra.mxu0 0.0
        %3825 = vmatprep.subr.mxu0 0.0
        %3826 = vmatpush1.msra.mxu0 0.0
        %3827 = vmatprep.subr.mxu0 0.0
        %3828 = vmatpush1.msra.mxu0 0.0
        %3829 = vmatprep.subr.mxu0 0.0
        %3830 = vmatpush1.msra.mxu0 0.0
        %3831 = vmatprep.subr.mxu0 0.0
        %3832 = vmatpush1.msra.mxu0 0.0
        %3833 = vmatprep.subr.mxu0 0.0
        %3834 = vmatpush1.msra.mxu0 0.0
        %3835 = vmatprep.subr.mxu0 0.0
        %3836 = vmatpush1.msra.mxu0 0.0
        %3837 = vmatprep.subr.mxu0 0.0
        %3838 = vmatpush1.msra.mxu0 0.0
        %3839 = vmatprep.subr.mxu0 0.0
        %3840 = vmatpush1.msra.mxu0 0.0
        %3841 = vmatprep.subr.mxu0 0.0
        %3842 = vmatpush1.msra.mxu0 0.0
        %3843 = vmatprep.subr.mxu0 0.0
        %3844 = vmatpush1.msra.mxu0 0.0
        %3845 = vmatprep.subr.mxu0 0.0
        %3846 = vmatpush1.msra.mxu0 0.0
        %3847 = vmatprep.subr.mxu0 0.0
        %3848 = vmatpush1.msra.mxu0 0.0
        %3849 = vmatprep.subr.mxu0 0.0
        %3850 = vmatpush1.msra.mxu0 0.0
        %3851 = vmatprep.subr.mxu0 0.0
        %3852 = vmatpush1.msra.mxu0 0.0
        %3853 = vmatprep.subr.mxu0 0.0
        %3854 = vmatpush1.msra.mxu0 0.0
        %3855 = vmatprep.subr.mxu0 0.0
        %3856 = vmatpush1.msra.mxu0 0.0
        %3857 = vmatprep.subr.mxu0 0.0
        %3858 = vmatpush1.msra.mxu0 0.0
        %3859 = vmatprep.subr.mxu0 0.0
        %3860 = vmatpush1.msra.mxu0 0.0
        %3861 = vmatprep.mubr.f32.mxu0 0.0
        %3862 = vmatmul.mubr.f32.gmra.mrb[0].mxu0 %v3792
        %v3863 = vpop.f32.mrb[0].mxu0
        %v3864 = vadd.f32 %v3783, %v3863
        %v3865 = vpop.f32.mrb[0].mxu0
        %3866 = vmatprep.mubr.f32.mxu0 0.0
        %3867 = vmatmul.mubr.f32.gmra.mrb[0].mxu0 %v3795
        %v3868 = vpop.f32.mrb[0].mxu0
        %v3869 = vadd.f32 %v3788, %v3868
        %v3870 = vpop.f32.mrb[0].mxu0
        %3871 = vdwg.mxu0
        %3872 = vmatprep.subr.mxu0 0.0
        %3873 = vmatpush1.msra.mxu0 %v3864
        %3874 = vmatprep.subr.mxu0 0.0
        %3875 = vmatpush1.msra.mxu0 %v3869
        %3876 = vmatprep.subr.mxu0 0.0
        %3877 = vmatpush1.msra.mxu0 0.0
        %3878 = vmatprep.subr.mxu0 0.0
        %3879 = vmatpush1.msra.mxu0 0.0
        %3880 = vmatprep.subr.mxu0 0.0
        %3881 = vmatpush1.msra.mxu0 0.0
        %3882 = vmatprep.subr.mxu0 0.0
        %3883 = vmatpush1.msra.mxu0 0.0
        %3884 = vmatprep.subr.mxu0 0.0
        %3885 = vmatpush1.msra.mxu0 0.0
        %3886 = vmatprep.subr.mxu0 0.0
        %3887 = vmatpush1.msra.mxu0 0.0
        %3888 = vmatprep.subr.mxu0 0.0
        %3889 = vmatpush1.msra.mxu0 0.0
        %3890 = vmatprep.subr.mxu0 0.0
        %3891 = vmatpush1.msra.mxu0 0.0
        %3892 = vmatprep.subr.mxu0 0.0
        %3893 = vmatpush1.msra.mxu0 0.0
        %3894 = vmatprep.subr.mxu0 0.0
        %3895 = vmatpush1.msra.mxu0 0.0
        %3896 = vmatprep.subr.mxu0 0.0
        %3897 = vmatpush1.msra.mxu0 0.0
        %3898 = vmatprep.subr.mxu0 0.0
        %3899 = vmatpush1.msra.mxu0 0.0
        %3900 = vmatprep.subr.mxu0 0.0
        %3901 = vmatpush1.msra.mxu0 0.0
        %3902 = vmatprep.subr.mxu0 0.0
        %3903 = vmatpush1.msra.mxu0 0.0
        %3904 = vmatprep.subr.mxu0 0.0
        %3905 = vmatpush1.msra.mxu0 0.0
        %3906 = vmatprep.subr.mxu0 0.0
        %3907 = vmatpush1.msra.mxu0 0.0
        %3908 = vmatprep.subr.mxu0 0.0
        %3909 = vmatpush1.msra.mxu0 0.0
        %3910 = vmatprep.subr.mxu0 0.0
        %3911 = vmatpush1.msra.mxu0 0.0
        %3912 = vmatprep.subr.mxu0 0.0
        %3913 = vmatpush1.msra.mxu0 0.0
        %3914 = vmatprep.subr.mxu0 0.0
        %3915 = vmatpush1.msra.mxu0 0.0
        %3916 = vmatprep.subr.mxu0 0.0
        %3917 = vmatpush1.msra.mxu0 0.0
        %3918 = vmatprep.subr.mxu0 0.0
        %3919 = vmatpush1.msra.mxu0 0.0
        %3920 = vmatprep.subr.mxu0 0.0
        %3921 = vmatpush1.msra.mxu0 0.0
        %3922 = vmatprep.subr.mxu0 0.0
        %3923 = vmatpush1.msra.mxu0 0.0
        %3924 = vmatprep.subr.mxu0 0.0
        %3925 = vmatpush1.msra.mxu0 0.0
        %3926 = vmatprep.subr.mxu0 0.0
        %3927 = vmatpush1.msra.mxu0 0.0
        %3928 = vmatprep.subr.mxu0 0.0
        %3929 = vmatpush1.msra.mxu0 0.0
        %3930 = vmatprep.subr.mxu0 0.0
        %3931 = vmatpush1.msra.mxu0 0.0
        %3932 = vmatprep.subr.mxu0 0.0
        %3933 = vmatpush1.msra.mxu0 0.0
        %3934 = vmatprep.subr.mxu0 0.0
        %3935 = vmatpush1.msra.mxu0 0.0
        %3936 = vmatprep.mubr.f32.mxu0 0.0
        %3937 = vmatmul.mubr.f32.gmra.mrb[0].mxu0 %v2835
        %v3938 = vpop.f32.mrb[0].mxu0
        %v3939 = vadd.f32 0.0, %v3938
        %v3940 = vpop.f32.mrb[0].mxu0
        %3941 = vmatprep.mubr.f32.mxu0 0.0
        %3942 = vmatmul.mubr.f32.gmra.mrb[0].mxu0 %v2838
        %v3943 = vpop.f32.mrb[0].mxu0
        %v3944 = vadd.f32 0.0, %v3943
        %v3945 = vpop.f32.mrb[0].mxu0
        %3946 = vmatprep.mubr.f32.mxu0 0.0
        %3947 = vmatmul.mubr.f32.gmra.mrb[0].mxu0 %v2841
        %v3948 = vpop.f32.mrb[0].mxu0
        %v3949 = vadd.f32 0.0, %v3948
        %v3950 = vpop.f32.mrb[0].mxu0
        %3951 = vmatprep.mubr.f32.mxu0 0.0
        %3952 = vmatmul.mubr.f32.gmra.mrb[0].mxu0 %v2844
        %v3953 = vpop.f32.mrb[0].mxu0
        %v3954 = vadd.f32 0.0, %v3953
        %v3955 = vpop.f32.mrb[0].mxu0
        %3956 = vdwg.mxu0
        %3957 = vmatprep.subr.mxu0 0.0
        %3958 = vmatpush1.msra.mxu0 %v3698
        %3959 = vmatprep.subr.mxu0 0.0
        %3960 = vmatpush1.msra.mxu0 %v3703
        %3961 = vmatprep.subr.mxu0 0.0
        %3962 = vmatpush1.msra.mxu0 0.0
        %3963 = vmatprep.subr.mxu0 0.0
        %3964 = vmatpush1.msra.mxu0 0.0
        %3965 = vmatprep.subr.mxu0 0.0
        %3966 = vmatpush1.msra.mxu0 0.0
        %3967 = vmatprep.subr.mxu0 0.0
        %3968 = vmatpush1.msra.mxu0 0.0
        %3969 = vmatprep.subr.mxu0 0.0
        %3970 = vmatpush1.msra.mxu0 0.0
        %3971 = vmatprep.subr.mxu0 0.0
        %3972 = vmatpush1.msra.mxu0 0.0
        %3973 = vmatprep.subr.mxu0 0.0
        %3974 = vmatpush1.msra.mxu0 0.0
        %3975 = vmatprep.subr.mxu0 0.0
        %3976 = vmatpush1.msra.mxu0 0.0
        %3977 = vmatprep.subr.mxu0 0.0
        %3978 = vmatpush1.msra.mxu0 0.0
        %3979 = vmatprep.subr.mxu0 0.0
        %3980 = vmatpush1.msra.mxu0 0.0
        %3981 = vmatprep.subr.mxu0 0.0
        %3982 = vmatpush1.msra.mxu0 0.0
        %3983 = vmatprep.subr.mxu0 0.0
        %3984 = vmatpush1.msra.mxu0 0.0
        %3985 = vmatprep.subr.mxu0 0.0
        %3986 = vmatpush1.msra.mxu0 0.0
        %3987 = vmatprep.subr.mxu0 0.0
        %3988 = vmatpush1.msra.mxu0 0.0
        %3989 = vmatprep.subr.mxu0 0.0
        %3990 = vmatpush1.msra.mxu0 0.0
        %3991 = vmatprep.subr.mxu0 0.0
        %3992 = vmatpush1.msra.mxu0 0.0
        %3993 = vmatprep.subr.mxu0 0.0
        %3994 = vmatpush1.msra.mxu0 0.0
        %3995 = vmatprep.subr.mxu0 0.0
        %3996 = vmatpush1.msra.mxu0 0.0
        %3997 = vmatprep.subr.mxu0 0.0
        %3998 = vmatpush1.msra.mxu0 0.0
        %3999 = vmatprep.subr.mxu0 0.0
        %4000 = vmatpush1.msra.mxu0 0.0
        %4001 = vmatprep.subr.mxu0 0.0
        %4002 = vmatpush1.msra.mxu0 0.0
        %4003 = vmatprep.subr.mxu0 0.0
        %4004 = vmatpush1.msra.mxu0 0.0
        %4005 = vmatprep.subr.mxu0 0.0
        %4006 = vmatpush1.msra.mxu0 0.0
        %4007 = vmatprep.subr.mxu0 0.0
        %4008 = vmatpush1.msra.mxu0 0.0
        %4009 = vmatprep.subr.mxu0 0.0
        %4010 = vmatpush1.msra.mxu0 0.0
        %4011 = vmatprep.subr.mxu0 0.0
        %4012 = vmatpush1.msra.mxu0 0.0
        %4013 = vmatprep.subr.mxu0 0.0
        %4014 = vmatpush1.msra.mxu0 0.0
        %4015 = vmatprep.subr.mxu0 0.0
        %4016 = vmatpush1.msra.mxu0 0.0
        %4017 = vmatprep.subr.mxu0 0.0
        %4018 = vmatpush1.msra.mxu0 0.0
        %4019 = vmatprep.subr.mxu0 0.0
        %4020 = vmatpush1.msra.mxu0 0.0
        %4021 = vmatprep.mubr.f32.mxu0 0.0
        %4022 = vmatmul.mubr.f32.gmra.mrb[0].mxu0 %v2932
        %v4023 = vpop.f32.mrb[0].mxu0
        %v4024 = vadd.f32 %v3939, %v4023
        %v4025 = vpop.f32.mrb[0].mxu0
        %4026 = vmatprep.mubr.f32.mxu0 0.0
        %4027 = vmatmul.mubr.f32.gmra.mrb[0].mxu0 %v2935
        %v4028 = vpop.f32.mrb[0].mxu0
        %v4029 = vadd.f32 %v3944, %v4028
        %v4030 = vpop.f32.mrb[0].mxu0
        %4031 = vmatprep.mubr.f32.mxu0 0.0
        %4032 = vmatmul.mubr.f32.gmra.mrb[0].mxu0 %v2938
        %v4033 = vpop.f32.mrb[0].mxu0
        %v4034 = vadd.f32 %v3949, %v4033
        %v4035 = vpop.f32.mrb[0].mxu0
        %4036 = vmatprep.mubr.f32.mxu0 0.0
        %4037 = vmatmul.mubr.f32.gmra.mrb[0].mxu0 %v2941
        %v4038 = vpop.f32.mrb[0].mxu0
        %v4039 = vadd.f32 %v3954, %v4038
        %v4040 = vpop.f32.mrb[0].mxu0
        %4041 = vdwg.mxu0
        %s4042 = scalar_lea.vmem %s465, 64 [#allocation10]
        %4043 = vst.msk [vmem:[%s4042] sm:$0xff] %vm3028, %v4024
        %4044 = vst.msk [vmem:[%s4042 + $0x8] sm:$0xff] %vm3028, %v4029
        %4045 = vst.msk [vmem:[%s4042 + $0x10] sm:$0xff] %vm3028, %v4034
        %4046 = vst.msk [vmem:[%s4042 + $0x18] sm:$0xff] %vm3028, %v4039
        %s4047 = sand.u32 %s144, 1
        %s4048 = scalar_lea.sflag [#allocation6], %s4047
        %s4049 = sand.u32 %s144, 1
        %s4050 = smul.addr %s4049, 96
        %s4051 = scalar_lea.vmem [#allocation10], %s4050
        // Predicated region
        $region135: #{final_layer_forward.1} parent=117 // pred_check
          %p4052 = pneg %p154
        $region136: #{final_layer_forward.1} parent=117 // pred_check_branch
          %4054 = sbr.rel (%p4052) target = $region138
        $region137: #{final_layer_forward.1} parent=117 // pred_region
          %s4055 = smul.u32 4, %s25
          %s4057 = ssub.s32 1536, 1536
          %4058 = vsyncadd %s4048, %s4057
          %s4059 = smul.addr %s24, 12
          %s4060 = sadd.s32 %s4055, %s4059
          %s4061 = smul.addr %s4060, 128
          %s4062 = scalar_lea.hbm %s4, %s4061
          %s4063 = sshll.u32 %s4051, 4
          %s4064 = int_to_ptr.vmem [resolvable:$true] %s4063
          %4069 = dma.vmem_to_hbm [thread:$0]  %s4064, 1536, %s4062, %s4048, 128, 128, 8
        $region138: #{final_layer_forward.1} parent=117 // pred_fallthru
          _
      $region118: #{final_layer_forward.1} parent=5 // pred_fallthru
        _
      %p4070 = scmp.le.s32.totalorder 2, %s15
      // Predicated region
      $region139: #{final_layer_forward.1} parent=5 // pred_check
        %p4071 = pneg %p4070
      $region140: #{final_layer_forward.1} parent=5 // pred_check_branch
        %4073 = sbr.rel (%p4071) target = $region142
      $region141: #{final_layer_forward.1} parent=5 // pred_region
        %s4074 = ssub.s32 %s15, 2
        // Predicated region
        $region143: #{final_layer_forward.1} parent=141 // pred_check
          %p4075 = pneg %p160
        $region144: #{final_layer_forward.1} parent=141 // pred_check_branch
          %4077 = sbr.rel (%p4075) target = $region146
        $region145: #{final_layer_forward.1} parent=141 // pred_region
          %s4078 = sand.u32 %s145, 1
          %s4079 = scalar_lea.sflag [#allocation6], %s4078
          %s4080 = sand.u32 %s145, 1
          %s4081 = smul.addr %s4080, 96
          %s4082 = scalar_lea.vmem [#allocation10], %s4081
          %4083 = dma.done %s4079, 1536
        $region146: #{final_layer_forward.1} parent=141 // pred_fallthru
          _
      $region142: #{final_layer_forward.1} parent=5 // pred_fallthru
        _
    $region6: #{final_layer_forward.1} parent=1 // loop_footer
      %s19 = sadd.s32 1, %s15
    $region7: #{final_layer_forward.1} parent=1 // loop_footer_branch
      %14 = sbr.rel target = $region3
    $region8: #{final_layer_forward.1} parent=1 // loop_exit
      _
    %4084 = vsyncpa [#allocation6], 1
    %s4085 = scalar_lea.sflag [#allocation6], 1
    %4086 = vsyncpa %s4085, 1
    %4087 = vsyncpa [#allocation7], 1
    %s4088 = scalar_lea.sflag [#allocation7], 1
    %4089 = vsyncpa %s4088, 1
    %4090 = vsyncpa [#allocation9], 1

</llo_original>
